<compile_context>
chip_gen: v5e
topology: v5e:2x2
jax: 0.10.0
libtpu: 0.0.40
codegen_flags: <defaults>
</compile_context>

<pallas_src>
import functools

import jax
import jax.numpy as jnp
from jax import lax
from jax.experimental import pallas as pl
from jax.experimental.pallas import tpu as pltpu

BN_EPS = 1e-5
TAU = 2.0
VMEM_LIMIT = 32 * 1024 * 1024  # safe on v5e/v6e/v7x


def _pick_tile(n, max_tile, align):
    """Largest multiple of `align` that divides n and is <= max_tile (prefer a proper split)."""
    best = None
    t = align
    limit = min(n - 1, max_tile)
    while t <= limit:
        if n % t == 0:
            best = t
        t += align
    return best if best is not None else n


def _cparams(*sems):
    return pltpu.CompilerParams(dimension_semantics=sems, vmem_limit_bytes=VMEM_LIMIT)


# ---------------------------------------------------------------------------
# Fused LinearSuper + BNSuper('1d')  (column-tiled)
# ---------------------------------------------------------------------------
def _linear_bn_kernel(x_ref, w_ref, b_ref, g_ref, beta_ref, o_ref, *, eps):
    x = x_ref[...].astype(jnp.float32)
    y = jnp.dot(x, w_ref[...], preferred_element_type=jnp.float32) + b_ref[...]
    mean = jnp.mean(y, axis=0, keepdims=True)
    var = jnp.mean(jnp.square(y - mean), axis=0, keepdims=True)
    y_hat = (y - mean) * lax.rsqrt(var + eps)
    o_ref[...] = (y_hat * g_ref[...] + beta_ref[...]).astype(o_ref.dtype)


def linear_bn(x, w, b, gamma, beta):
    """x: (M, Cin) f32/bf16 -> (M, Cout) f32.  Grid tiles Cout; BN stats use all M rows."""
    M, Cin = x.shape
    Cout = w.shape[1]
    tile_n = _pick_tile(Cout, max_tile=512, align=128)
    kernel = functools.partial(_linear_bn_kernel, eps=BN_EPS)
    vec_spec = pl.BlockSpec((1, tile_n), lambda j: (0, j))
    return pl.pallas_call(
        kernel,
        out_shape=jax.ShapeDtypeStruct((M, Cout), jnp.float32),
        grid=(Cout // tile_n,),
        in_specs=[
            pl.BlockSpec((M, Cin), lambda j: (0, 0)),      # resident across j (same block index)
            pl.BlockSpec((Cin, tile_n), lambda j: (0, j)),
            vec_spec, vec_spec, vec_spec,
        ],
        out_specs=pl.BlockSpec((M, tile_n), lambda j: (0, j)),
        compiler_params=_cparams("parallel"),
    )(x, w, b.reshape(1, Cout), gamma.reshape(1, Cout), beta.reshape(1, Cout))


# ---------------------------------------------------------------------------
# MultiStepLIFNode: row-parallel grid, time recurrence inside the kernel
# ---------------------------------------------------------------------------
def _lif_kernel(x_ref, o_ref, *, inv_tau, thr):
    T = x_ref.shape[0]

    def step(t, v):
        v = v + (x_ref[t].astype(jnp.float32) - v) * inv_tau
        spike = v >= thr
        o_ref[t] = spike.astype(o_ref.dtype)
        return jnp.where(spike, 0.0, v)

    lax.fori_loop(0, T, step, jnp.zeros(x_ref.shape[1:], jnp.float32), unroll=True)


def lif(x, thr, tau=TAU):
    """x: (T, P, C) f32 -> bf16 spikes (exact 0/1)."""
    T, P, C = x.shape
    tile_p = _pick_tile(P, max_tile=256, align=16)   # 16: bf16 sublane packing
    kernel = functools.partial(_lif_kernel, inv_tau=1.0 / tau, thr=thr)
    spec = pl.BlockSpec((T, tile_p, C), lambda i: (0, i, 0))
    return pl.pallas_call(
        kernel,
        out_shape=jax.ShapeDtypeStruct((T, P, C), jnp.bfloat16),
        grid=(P // tile_p,),
        in_specs=[spec],
        out_specs=spec,
        compiler_params=_cparams("parallel"),
    )(x)


def _lif_residual_kernel(x_ref, r_ref, o_ref, *, inv_tau, thr):
    T = x_ref.shape[0]

    def step(t, v):
        v = v + (x_ref[t].astype(jnp.float32) - v) * inv_tau
        spike = v >= thr
        o_ref[t] = r_ref[t] + spike.astype(jnp.float32)
        return jnp.where(spike, 0.0, v)

    lax.fori_loop(0, T, step, jnp.zeros(x_ref.shape[1:], jnp.float32), unroll=True)


def lif_residual(x, res, thr, tau=TAU):
    """out = res + LIF(x).  x, res: (T, P, C) f32 -> (T, P, C) f32 (residual add fused)."""
    T, P, C = x.shape
    tile_p = _pick_tile(P, max_tile=256, align=8)
    kernel = functools.partial(_lif_residual_kernel, inv_tau=1.0 / tau, thr=thr)
    spec = pl.BlockSpec((T, tile_p, C), lambda i: (0, i, 0))
    return pl.pallas_call(
        kernel,
        out_shape=jax.ShapeDtypeStruct((T, P, C), jnp.float32),
        grid=(P // tile_p,),
        in_specs=[spec, spec],
        out_specs=spec,
        compiler_params=_cparams("parallel"),
    )(x, res)


# ---------------------------------------------------------------------------
# Spiking attention: all heads per grid step, head split in-kernel (no HBM transposes)
# ---------------------------------------------------------------------------
def _attn_kernel(q_ref, k_ref, v_ref, o_ref, *, scale, num_heads, head_dim):
    q = q_ref[0, 0]
    k = k_ref[0, 0]
    v = v_ref[0, 0]
    outs = []
    for h in range(num_heads):
        lo = h * head_dim
        qh = q[:, lo:lo + head_dim]
        kh = k[:, lo:lo + head_dim]
        vh = v[:, lo:lo + head_dim].astype(jnp.float32)
        # q . k^T via dot_general contracting the last dims (no materialized transpose).
        s = lax.dot_general(qh, kh, (((1,), (1,)), ((), ())),
                            preferred_element_type=jnp.float32) * scale
        outs.append(jnp.dot(s, vh, preferred_element_type=jnp.float32))
    o_ref[0, 0] = jnp.concatenate(outs, axis=-1)


def attn(q, k, v, scale, num_heads):
    """q,k,v: (T, B, N, C) spikes -> (T, B, N, C) f32, per-head (q@k^T)*scale @ v."""
    T, B, N, C = q.shape
    assert C % num_heads == 0
    d = C // num_heads
    kernel = functools.partial(_attn_kernel, scale=scale, num_heads=num_heads, head_dim=d)
    spec = pl.BlockSpec((1, 1, N, C), lambda t, b: (t, b, 0, 0))
    return pl.pallas_call(
        kernel,
        out_shape=jax.ShapeDtypeStruct((T, B, N, C), jnp.float32),
        grid=(T, B),
        in_specs=[spec, spec, spec],
        out_specs=spec,
        compiler_params=_cparams("parallel", "parallel"),
    )(q, k, v)


# ---------------------------------------------------------------------------
# Pure-JAX reference ops (sanity check)
# ---------------------------------------------------------------------------
def ref_linear_bn(x, w, b, gamma, beta):
    y = jnp.dot(x.astype(jnp.float32), w, preferred_element_type=jnp.float32) + b
    mean = jnp.mean(y, axis=0, keepdims=True)
    var = jnp.mean(jnp.square(y - mean), axis=0, keepdims=True)
    return (y - mean) / jnp.sqrt(var + BN_EPS) * gamma + beta


def ref_lif(x, thr, tau=TAU):
    def step(v, xt):
        v = v + (xt - v) / tau
        s = (v >= thr).astype(jnp.float32)
        return v * (1.0 - s), s

    _, spikes = lax.scan(step, jnp.zeros_like(x[0]), x)
    return spikes


def ref_lif_residual(x, res, thr, tau=TAU):
    return res + ref_lif(x, thr, tau)


def ref_attn(q, k, v, scale, num_heads):
    T, B, N, C = q.shape
    d = C // num_heads

    def split(a):
        return a.reshape(T, B, N, num_heads, d).transpose(0, 1, 3, 2, 4).astype(jnp.float32)

    qh, kh, vh = split(q), split(k), split(v)
    s = jnp.einsum("tbhnd,tbhmd->tbhnm", qh, kh) * scale
    o = jnp.einsum("tbhnm,tbhmd->tbhnd", s, vh)
    return o.transpose(0, 1, 3, 2, 4).reshape(T, B, N, C)


PALLAS_OPS = {"linear_bn": linear_bn, "lif": lif, "lif_residual": lif_residual, "attn": attn}
REF_OPS = {"linear_bn": ref_linear_bn, "lif": ref_lif, "lif_residual": ref_lif_residual,
           "attn": ref_attn}


# ---------------------------------------------------------------------------
# Block forward (glue in plain JAX, hot paths through `ops`)
# ---------------------------------------------------------------------------
def ssa_pre_forward(x, params, num_heads, ops, scale=0.125):
    """SSA up to (but not including) proj_lif; returns (T, P, C) pre-activation."""
    T, B, N, C = x.shape
    P = B * N
    xf = x.reshape(T * P, C)

    def qkv_branch(name):
        p = params[name]
        y = ops["linear_bn"](xf, p["w"], p["b"], p["gamma"], p["beta"])
        return ops["lif"](y.reshape(T, P, C), 1.0).reshape(T, B, N, C)

    q = qkv_branch("q")
    k = qkv_branch("k")
    v = qkv_branch("v")
    o = ops["attn"](q, k, v, scale, num_heads)          # (T, B, N, C) f32
    o = ops["lif"](o.reshape(T, P, C), 0.5)             # attn_lif, v_threshold=0.5
    pp = params["proj"]
    o = ops["linear_bn"](o.reshape(T * P, C), pp["w"], pp["b"], pp["gamma"], pp["beta"])
    return o.reshape(T, P, C)


def mlp_pre_forward(x, params, ops):
    """MLP up to (but not including) fc2_lif; returns (T, P, C) pre-activation."""
    T, B, N, C = x.shape
    P = B * N
    p1, p2 = params["fc1"], params["fc2"]
    hidden = p1["w"].shape[1]
    h = ops["linear_bn"](x.reshape(T * P, C), p1["w"], p1["b"], p1["gamma"], p1["beta"])
    h = ops["lif"](h.reshape(T, P, hidden), 1.0)
    o = ops["linear_bn"](h.reshape(T * P, hidden), p2["w"], p2["b"], p2["gamma"], p2["beta"])
    return o.reshape(T, P, C)


def block_forward(x, params, num_heads, ops):
    T, B, N, C = x.shape
    P = B * N
    ssa_pre = ssa_pre_forward(x, params, num_heads, ops)
    x1 = ops["lif_residual"](ssa_pre, x.reshape(T, P, C), 1.0)        # x + SSA(x)  (proj_lif fused)
    mlp_pre = mlp_pre_forward(x1.reshape(T, B, N, C), params, ops)
    x2 = ops["lif_residual"](mlp_pre, x1, 1.0)                        # x + MLP(x)  (fc2_lif fused)
    return x2.reshape(T, B, N, C)


# ---------------------------------------------------------------------------
# Deterministic parameter init (synthetic weights; BN gamma=1, beta=0)
# ---------------------------------------------------------------------------
def init_params(key, dim, hidden):
    layer_dims = {
        "q": (dim, dim), "k": (dim, dim), "v": (dim, dim), "proj": (dim, dim),
        "fc1": (dim, hidden), "fc2": (hidden, dim),
    }
    keys = jax.random.split(key, len(layer_dims))
    params = {}
    for k_, (name, (cin, cout)) in zip(keys, layer_dims.items()):
        kw, kb = jax.random.split(k_)
        params[name] = {
            "w": 0.02 * jax.random.normal(kw, (cin, cout), jnp.float32),
            "b": 0.02 * jax.random.normal(kb, (cout,), jnp.float32),
            "gamma": jnp.ones((cout,), jnp.float32),
            "beta": jnp.zeros((cout,), jnp.float32),
        }
    return params


if __name__ == "__main__":
    T, B, N, C = 2, 2, 8, 32
    num_heads = 4
    mlp_ratio = 4.0
    hidden = int(C * mlp_ratio)

    key = jax.random.PRNGKey(0)
    kx, kp = jax.random.split(key)
    x = jax.random.normal(kx, (T, B, N, C), jnp.float32)
    params = init_params(kp, C, hidden)

    fwd = jax.jit(functools.partial(block_forward, num_heads=num_heads, ops=PALLAS_OPS))
    out = jax.block_until_ready(fwd(x, params))

    ref = block_forward(x, params, num_heads, REF_OPS)

    assert out.shape == (T, B, N, C)
    assert bool(jnp.all(jnp.isfinite(out)))
    # Spikes are {0,1}: a single threshold flip from matmul rounding differences shows up as a
    # 1.0 delta, so check the fraction of mismatching elements rather than allclose.
    frac_bad = float(jnp.mean((jnp.abs(out - ref) > 1e-2).astype(jnp.float32)))
    assert frac_bad < 0.05, f"mismatch fraction {frac_bad}"
    print("KERNEL_OK")
</pallas_src>

<mosaic_0001>
module attributes {stable_mosaic.version = 11 : i64} {
  func.func @_lif_kernel(%arg0: i32, %arg1: memref<2x16x32xf32, #tpu.memory_space<vmem>>, %arg2: memref<2x16x32xbf16, #tpu.memory_space<vmem>>) attributes {dimension_semantics = [#tpu.dimension_semantics<parallel>], iteration_bounds = array<i64: 1>, scalar_prefetch = 0 : i64, scratch_operands = 0 : i64, tpu.core_type = #tpu.core_type<tc>, window_params = [{transform_indices = @transform_0, window_bounds = array<i64: 2, 16, 32>}, {transform_indices = @transform_1, window_bounds = array<i64: 2, 16, 32>}]} {
    %cst = arith.constant 0.000000e+00 : f32
    %0 = vector.broadcast %cst : f32 to vector<16x32xf32>
    %c0_i32 = arith.constant 0 : i32
    %1 = arith.index_cast %c0_i32 : i32 to index
    %c0 = arith.constant 0 : index
    %c0_0 = arith.constant 0 : index
    %2 = vector.load %arg1[%1, %c0, %c0_0] : memref<2x16x32xf32, #tpu.memory_space<vmem>>, vector<1x16x32xf32>
    %3 = vector.shape_cast %2 : vector<1x16x32xf32> to vector<16x32xf32>
    %4 = arith.subf %3, %0 : vector<16x32xf32>
    %cst_1 = arith.constant 5.000000e-01 : f32
    %5 = vector.broadcast %cst_1 : f32 to vector<16x32xf32>
    %6 = arith.mulf %4, %5 : vector<16x32xf32>
    %7 = arith.addf %0, %6 : vector<16x32xf32>
    %cst_2 = arith.constant 1.000000e+00 : f32
    %8 = vector.broadcast %cst_2 : f32 to vector<16x32xf32>
    %9 = arith.cmpf oge, %7, %8 : vector<16x32xf32>
    %10 = arith.extui %9 : vector<16x32xi1> to vector<16x32xi32>
    %11 = arith.sitofp %10 : vector<16x32xi32> to vector<16x32xf32>
    %12 = arith.truncf %11 : vector<16x32xf32> to vector<16x32xbf16>
    %13 = arith.index_cast %c0_i32 : i32 to index
    %c0_3 = arith.constant 0 : index
    %c0_4 = arith.constant 0 : index
    %14 = vector.load %arg2[%13, %c0_3, %c0_4] : memref<2x16x32xbf16, #tpu.memory_space<vmem>>, vector<1x16x32xbf16>
    %15 = vector.shape_cast %14 : vector<1x16x32xbf16> to vector<16x32xbf16>
    %16 = vector.shape_cast %12 : vector<16x32xbf16> to vector<1x16x32xbf16>
    tpu.vector_store %arg2[%13, %c0_3, %c0_4], %16 {strides = array<i32>} : memref<2x16x32xbf16, #tpu.memory_space<vmem>>, vector<1x16x32xbf16>,
    %cst_5 = arith.constant 0.000000e+00 : f32
    %17 = vector.broadcast %cst_5 : f32 to vector<16x32xf32>
    %18 = arith.select %9, %17, %7 : vector<16x32xi1>, vector<16x32xf32>
    %c1_i32 = arith.constant 1 : i32
    %19 = arith.index_cast %c1_i32 : i32 to index
    %c0_6 = arith.constant 0 : index
    %c0_7 = arith.constant 0 : index
    %20 = vector.load %arg1[%19, %c0_6, %c0_7] : memref<2x16x32xf32, #tpu.memory_space<vmem>>, vector<1x16x32xf32>
    %21 = vector.shape_cast %20 : vector<1x16x32xf32> to vector<16x32xf32>
    %22 = arith.subf %21, %18 : vector<16x32xf32>
    %cst_8 = arith.constant 5.000000e-01 : f32
    %23 = vector.broadcast %cst_8 : f32 to vector<16x32xf32>
    %24 = arith.mulf %22, %23 : vector<16x32xf32>
    %25 = arith.addf %18, %24 : vector<16x32xf32>
    %cst_9 = arith.constant 1.000000e+00 : f32
    %26 = vector.broadcast %cst_9 : f32 to vector<16x32xf32>
    %27 = arith.cmpf oge, %25, %26 : vector<16x32xf32>
    %28 = arith.extui %27 : vector<16x32xi1> to vector<16x32xi32>
    %29 = arith.sitofp %28 : vector<16x32xi32> to vector<16x32xf32>
    %30 = arith.truncf %29 : vector<16x32xf32> to vector<16x32xbf16>
    %31 = arith.index_cast %c1_i32 : i32 to index
    %c0_10 = arith.constant 0 : index
    %c0_11 = arith.constant 0 : index
    %32 = vector.load %arg2[%31, %c0_10, %c0_11] : memref<2x16x32xbf16, #tpu.memory_space<vmem>>, vector<1x16x32xbf16>
    %33 = vector.shape_cast %32 : vector<1x16x32xbf16> to vector<16x32xbf16>
    %34 = vector.shape_cast %30 : vector<16x32xbf16> to vector<1x16x32xbf16>
    tpu.vector_store %arg2[%31, %c0_10, %c0_11], %34 {strides = array<i32>} : memref<2x16x32xbf16, #tpu.memory_space<vmem>>, vector<1x16x32xbf16>,
    %cst_12 = arith.constant 0.000000e+00 : f32
    %35 = vector.broadcast %cst_12 : f32 to vector<16x32xf32>
    %36 = arith.select %27, %35, %25 : vector<16x32xi1>, vector<16x32xf32>
    %c2_i32 = arith.constant 2 : i32
    return
  }
  func.func @transform_0(%arg0: i32) -> (i32, i32, i32) {
    %c0_i32 = arith.constant 0 : i32
    %c0_i32_0 = arith.constant 0 : i32
    %c0_i32_1 = arith.constant 0 : i32
    return %c0_i32, %arg0, %c0_i32_0 : i32, i32, i32
  }
  func.func @transform_1(%arg0: i32) -> (i32, i32, i32) {
    %c0_i32 = arith.constant 0 : i32
    %c0_i32_0 = arith.constant 0 : i32
    %c0_i32_1 = arith.constant 0 : i32
    return %c0_i32, %arg0, %c0_i32_0 : i32, i32, i32
  }
}

module attributes {stable_mosaic.version = 11 : i64} {
  func.func @_linear_bn_kernel(%arg0: i32, %arg1: memref<32x32xf32, #tpu.memory_space<vmem>>, %arg2: memref<32x32xf32, #tpu.memory_space<vmem>>, %arg3: memref<1x32xf32, #tpu.memory_space<vmem>>, %arg4: memref<1x32xf32, #tpu.memory_space<vmem>>, %arg5: memref<1x32xf32, #tpu.memory_space<vmem>>, %arg6: memref<32x32xf32, #tpu.memory_space<vmem>>) attributes {dimension_semantics = [#tpu.dimension_semantics<parallel>], iteration_bounds = array<i64: 1>, scalar_prefetch = 0 : i64, scratch_operands = 0 : i64, tpu.core_type = #tpu.core_type<tc>, window_params = [{pipeline_mode = #tpu.pipeline_mode<synchronous>, transform_indices = @transform_0, window_bounds = array<i64: 32, 32>}, {transform_indices = @transform_1, window_bounds = array<i64: 32, 32>}, {transform_indices = @transform_2, window_bounds = array<i64: 1, 32>}, {transform_indices = @transform_3, window_bounds = array<i64: 1, 32>}, {transform_indices = @transform_4, window_bounds = array<i64: 1, 32>}, {transform_indices = @transform_5, window_bounds = array<i64: 32, 32>}]} {
    %c0 = arith.constant 0 : index
    %c0_0 = arith.constant 0 : index
    %0 = vector.load %arg1[%c0, %c0_0] : memref<32x32xf32, #tpu.memory_space<vmem>>, vector<32x32xf32>
    %c0_1 = arith.constant 0 : index
    %c0_2 = arith.constant 0 : index
    %1 = vector.load %arg2[%c0_1, %c0_2] : memref<32x32xf32, #tpu.memory_space<vmem>>, vector<32x32xf32>
    %cst = arith.constant dense<0.000000e+00> : vector<32x32xf32>
    %2 = tpu.matmul %0, %1, %cst {dimension_numbers = #tpu.dot_dimension_numbers<[1], [0], [0], [1], [0, 0, 1, 1], [], []>} : vector<32x32xf32>, vector<32x32xf32>, vector<32x32xf32> -> vector<32x32xf32>
    %c0_3 = arith.constant 0 : index
    %c0_4 = arith.constant 0 : index
    %3 = vector.load %arg3[%c0_3, %c0_4] : memref<1x32xf32, #tpu.memory_space<vmem>>, vector<1x32xf32>
    %4 = vector.broadcast %3 : vector<1x32xf32> to vector<32x32xf32>
    %5 = arith.addf %2, %4 : vector<32x32xf32>
    %cst_5 = arith.constant dense<0.000000e+00> : vector<32xf32>
    %6 = vector.multi_reduction <add>, %5, %cst_5 [0] : vector<32x32xf32> to vector<32xf32>
    %7 = vector.shape_cast %6 : vector<32xf32> to vector<1x32xf32>
    %cst_6 = arith.constant 3.200000e+01 : f32
    %8 = vector.broadcast %cst_6 : f32 to vector<1x32xf32>
    %9 = arith.divf %7, %8 : vector<1x32xf32>
    %10 = vector.broadcast %9 : vector<1x32xf32> to vector<32x32xf32>
    %11 = arith.subf %5, %10 : vector<32x32xf32>
    %12 = arith.mulf %11, %11 : vector<32x32xf32>
    %cst_7 = arith.constant dense<0.000000e+00> : vector<32xf32>
    %13 = vector.multi_reduction <add>, %12, %cst_7 [0] : vector<32x32xf32> to vector<32xf32>
    %14 = vector.shape_cast %13 : vector<32xf32> to vector<1x32xf32>
    %cst_8 = arith.constant 3.200000e+01 : f32
    %15 = vector.broadcast %cst_8 : f32 to vector<1x32xf32>
    %16 = arith.divf %14, %15 : vector<1x32xf32>
    %17 = vector.broadcast %9 : vector<1x32xf32> to vector<32x32xf32>
    %18 = arith.subf %5, %17 : vector<32x32xf32>
    %cst_9 = arith.constant 9.99999974E-6 : f32
    %19 = vector.broadcast %cst_9 : f32 to vector<1x32xf32>
    %20 = arith.addf %16, %19 : vector<1x32xf32>
    %21 = math.rsqrt %20 : vector<1x32xf32>
    %22 = vector.broadcast %21 : vector<1x32xf32> to vector<32x32xf32>
    %23 = arith.mulf %18, %22 : vector<32x32xf32>
    %c0_10 = arith.constant 0 : index
    %c0_11 = arith.constant 0 : index
    %24 = vector.load %arg4[%c0_10, %c0_11] : memref<1x32xf32, #tpu.memory_space<vmem>>, vector<1x32xf32>
    %25 = vector.broadcast %24 : vector<1x32xf32> to vector<32x32xf32>
    %26 = arith.mulf %23, %25 : vector<32x32xf32>
    %c0_12 = arith.constant 0 : index
    %c0_13 = arith.constant 0 : index
    %27 = vector.load %arg5[%c0_12, %c0_13] : memref<1x32xf32, #tpu.memory_space<vmem>>, vector<1x32xf32>
    %28 = vector.broadcast %27 : vector<1x32xf32> to vector<32x32xf32>
    %29 = arith.addf %26, %28 : vector<32x32xf32>
    %c0_14 = arith.constant 0 : index
    %c0_15 = arith.constant 0 : index
    %30 = vector.load %arg6[%c0_14, %c0_15] : memref<32x32xf32, #tpu.memory_space<vmem>>, vector<32x32xf32>
    tpu.vector_store %arg6[%c0_14, %c0_15], %29 {strides = array<i32>} : memref<32x32xf32, #tpu.memory_space<vmem>>, vector<32x32xf32>,
    return
  }
  func.func @transform_0(%arg0: i32) -> (i32, i32) {
    %c0_i32 = arith.constant 0 : i32
    %c0_i32_0 = arith.constant 0 : i32
    %c0_i32_1 = arith.constant 0 : i32
    return %c0_i32, %c0_i32_0 : i32, i32
  }
  func.func @transform_1(%arg0: i32) -> (i32, i32) {
    %c0_i32 = arith.constant 0 : i32
    %c0_i32_0 = arith.constant 0 : i32
    return %c0_i32, %arg0 : i32, i32
  }
  func.func @transform_2(%arg0: i32) -> (i32, i32) {
    %c0_i32 = arith.constant 0 : i32
    %c0_i32_0 = arith.constant 0 : i32
    return %c0_i32, %arg0 : i32, i32
  }
  func.func @transform_3(%arg0: i32) -> (i32, i32) {
    %c0_i32 = arith.constant 0 : i32
    %c0_i32_0 = arith.constant 0 : i32
    return %c0_i32, %arg0 : i32, i32
  }
  func.func @transform_4(%arg0: i32) -> (i32, i32) {
    %c0_i32 = arith.constant 0 : i32
    %c0_i32_0 = arith.constant 0 : i32
    return %c0_i32, %arg0 : i32, i32
  }
  func.func @transform_5(%arg0: i32) -> (i32, i32) {
    %c0_i32 = arith.constant 0 : i32
    %c0_i32_0 = arith.constant 0 : i32
    return %c0_i32, %arg0 : i32, i32
  }
}

module attributes {stable_mosaic.version = 11 : i64} {
  func.func @_attn_kernel(%arg0: i32, %arg1: i32, %arg2: memref<1x1x8x32xbf16, #tpu.memory_space<vmem>>, %arg3: memref<1x1x8x32xbf16, #tpu.memory_space<vmem>>, %arg4: memref<1x1x8x32xbf16, #tpu.memory_space<vmem>>, %arg5: memref<1x1x8x32xf32, #tpu.memory_space<vmem>>) attributes {dimension_semantics = [#tpu.dimension_semantics<parallel>, #tpu.dimension_semantics<parallel>], iteration_bounds = array<i64: 2, 2>, scalar_prefetch = 0 : i64, scratch_operands = 0 : i64, tpu.core_type = #tpu.core_type<tc>, window_params = [{transform_indices = @transform_0, window_bounds = array<i64: 1, 1, 8, 32>}, {transform_indices = @transform_1, window_bounds = array<i64: 1, 1, 8, 32>}, {transform_indices = @transform_2, window_bounds = array<i64: 1, 1, 8, 32>}, {transform_indices = @transform_3, window_bounds = array<i64: 1, 1, 8, 32>}]} {
    %c0 = arith.constant 0 : index
    %c0_0 = arith.constant 0 : index
    %c0_1 = arith.constant 0 : index
    %c0_2 = arith.constant 0 : index
    %0 = vector.load %arg2[%c0, %c0_0, %c0_1, %c0_2] : memref<1x1x8x32xbf16, #tpu.memory_space<vmem>>, vector<1x1x8x32xbf16>
    %1 = vector.shape_cast %0 : vector<1x1x8x32xbf16> to vector<8x32xbf16>
    %c0_3 = arith.constant 0 : index
    %c0_4 = arith.constant 0 : index
    %c0_5 = arith.constant 0 : index
    %c0_6 = arith.constant 0 : index
    %2 = vector.load %arg3[%c0_3, %c0_4, %c0_5, %c0_6] : memref<1x1x8x32xbf16, #tpu.memory_space<vmem>>, vector<1x1x8x32xbf16>
    %3 = vector.shape_cast %2 : vector<1x1x8x32xbf16> to vector<8x32xbf16>
    %c0_7 = arith.constant 0 : index
    %c0_8 = arith.constant 0 : index
    %c0_9 = arith.constant 0 : index
    %c0_10 = arith.constant 0 : index
    %4 = vector.load %arg4[%c0_7, %c0_8, %c0_9, %c0_10] : memref<1x1x8x32xbf16, #tpu.memory_space<vmem>>, vector<1x1x8x32xbf16>
    %5 = vector.shape_cast %4 : vector<1x1x8x32xbf16> to vector<8x32xbf16>
    %6 = vector.extract_strided_slice %1 {offsets = [0, 0], sizes = [8, 8], strides = [1, 1]} : vector<8x32xbf16> to vector<8x8xbf16>
    %7 = vector.extract_strided_slice %3 {offsets = [0, 0], sizes = [8, 8], strides = [1, 1]} : vector<8x32xbf16> to vector<8x8xbf16>
    %8 = vector.extract_strided_slice %5 {offsets = [0, 0], sizes = [8, 8], strides = [1, 1]} : vector<8x32xbf16> to vector<8x8xbf16>
    %9 = arith.extf %8 : vector<8x8xbf16> to vector<8x8xf32>
    %cst = arith.constant dense<0.000000e+00> : vector<8x8xf32>
    %10 = tpu.matmul %6, %7, %cst {dimension_numbers = #tpu.dot_dimension_numbers<[1], [1], [0], [0], [0, 0, 1, 0], [], []>} : vector<8x8xbf16>, vector<8x8xbf16>, vector<8x8xf32> -> vector<8x8xf32>
    %cst_11 = arith.constant 1.250000e-01 : f32
    %11 = vector.broadcast %cst_11 : f32 to vector<8x8xf32>
    %12 = arith.mulf %10, %11 : vector<8x8xf32>
    %cst_12 = arith.constant dense<0.000000e+00> : vector<8x8xf32>
    %13 = tpu.matmul %12, %9, %cst_12 {dimension_numbers = #tpu.dot_dimension_numbers<[1], [0], [0], [1], [0, 0, 1, 1], [], []>} : vector<8x8xf32>, vector<8x8xf32>, vector<8x8xf32> -> vector<8x8xf32>
    %14 = vector.extract_strided_slice %1 {offsets = [0, 8], sizes = [8, 8], strides = [1, 1]} : vector<8x32xbf16> to vector<8x8xbf16>
    %15 = vector.extract_strided_slice %3 {offsets = [0, 8], sizes = [8, 8], strides = [1, 1]} : vector<8x32xbf16> to vector<8x8xbf16>
    %16 = vector.extract_strided_slice %5 {offsets = [0, 8], sizes = [8, 8], strides = [1, 1]} : vector<8x32xbf16> to vector<8x8xbf16>
    %17 = arith.extf %16 : vector<8x8xbf16> to vector<8x8xf32>
    %cst_13 = arith.constant dense<0.000000e+00> : vector<8x8xf32>
    %18 = tpu.matmul %14, %15, %cst_13 {dimension_numbers = #tpu.dot_dimension_numbers<[1], [1], [0], [0], [0, 0, 1, 0], [], []>} : vector<8x8xbf16>, vector<8x8xbf16>, vector<8x8xf32> -> vector<8x8xf32>
    %cst_14 = arith.constant 1.250000e-01 : f32
    %19 = vector.broadcast %cst_14 : f32 to vector<8x8xf32>
    %20 = arith.mulf %18, %19 : vector<8x8xf32>
    %cst_15 = arith.constant dense<0.000000e+00> : vector<8x8xf32>
    %21 = tpu.matmul %20, %17, %cst_15 {dimension_numbers = #tpu.dot_dimension_numbers<[1], [0], [0], [1], [0, 0, 1, 1], [], []>} : vector<8x8xf32>, vector<8x8xf32>, vector<8x8xf32> -> vector<8x8xf32>
    %22 = vector.extract_strided_slice %1 {offsets = [0, 16], sizes = [8, 8], strides = [1, 1]} : vector<8x32xbf16> to vector<8x8xbf16>
    %23 = vector.extract_strided_slice %3 {offsets = [0, 16], sizes = [8, 8], strides = [1, 1]} : vector<8x32xbf16> to vector<8x8xbf16>
    %24 = vector.extract_strided_slice %5 {offsets = [0, 16], sizes = [8, 8], strides = [1, 1]} : vector<8x32xbf16> to vector<8x8xbf16>
    %25 = arith.extf %24 : vector<8x8xbf16> to vector<8x8xf32>
    %cst_16 = arith.constant dense<0.000000e+00> : vector<8x8xf32>
    %26 = tpu.matmul %22, %23, %cst_16 {dimension_numbers = #tpu.dot_dimension_numbers<[1], [1], [0], [0], [0, 0, 1, 0], [], []>} : vector<8x8xbf16>, vector<8x8xbf16>, vector<8x8xf32> -> vector<8x8xf32>
    %cst_17 = arith.constant 1.250000e-01 : f32
    %27 = vector.broadcast %cst_17 : f32 to vector<8x8xf32>
    %28 = arith.mulf %26, %27 : vector<8x8xf32>
    %cst_18 = arith.constant dense<0.000000e+00> : vector<8x8xf32>
    %29 = tpu.matmul %28, %25, %cst_18 {dimension_numbers = #tpu.dot_dimension_numbers<[1], [0], [0], [1], [0, 0, 1, 1], [], []>} : vector<8x8xf32>, vector<8x8xf32>, vector<8x8xf32> -> vector<8x8xf32>
    %30 = vector.extract_strided_slice %1 {offsets = [0, 24], sizes = [8, 8], strides = [1, 1]} : vector<8x32xbf16> to vector<8x8xbf16>
    %31 = vector.extract_strided_slice %3 {offsets = [0, 24], sizes = [8, 8], strides = [1, 1]} : vector<8x32xbf16> to vector<8x8xbf16>
    %32 = vector.extract_strided_slice %5 {offsets = [0, 24], sizes = [8, 8], strides = [1, 1]} : vector<8x32xbf16> to vector<8x8xbf16>
    %33 = arith.extf %32 : vector<8x8xbf16> to vector<8x8xf32>
    %cst_19 = arith.constant dense<0.000000e+00> : vector<8x8xf32>
    %34 = tpu.matmul %30, %31, %cst_19 {dimension_numbers = #tpu.dot_dimension_numbers<[1], [1], [0], [0], [0, 0, 1, 0], [], []>} : vector<8x8xbf16>, vector<8x8xbf16>, vector<8x8xf32> -> vector<8x8xf32>
    %cst_20 = arith.constant 1.250000e-01 : f32
    %35 = vector.broadcast %cst_20 : f32 to vector<8x8xf32>
    %36 = arith.mulf %34, %35 : vector<8x8xf32>
    %cst_21 = arith.constant dense<0.000000e+00> : vector<8x8xf32>
    %37 = tpu.matmul %36, %33, %cst_21 {dimension_numbers = #tpu.dot_dimension_numbers<[1], [0], [0], [1], [0, 0, 1, 1], [], []>} : vector<8x8xf32>, vector<8x8xf32>, vector<8x8xf32> -> vector<8x8xf32>
    %38 = tpu.concatenate %13, %21, %29, %37 in 1 : vector<8x8xf32>, vector<8x8xf32>, vector<8x8xf32>, vector<8x8xf32> -> vector<8x32xf32>
    %c0_22 = arith.constant 0 : index
    %c0_23 = arith.constant 0 : index
    %c0_24 = arith.constant 0 : index
    %c0_25 = arith.constant 0 : index
    %39 = vector.load %arg5[%c0_22, %c0_23, %c0_24, %c0_25] : memref<1x1x8x32xf32, #tpu.memory_space<vmem>>, vector<1x1x8x32xf32>
    %40 = vector.shape_cast %39 : vector<1x1x8x32xf32> to vector<8x32xf32>
    %41 = vector.shape_cast %38 : vector<8x32xf32> to vector<1x1x8x32xf32>
    tpu.vector_store %arg5[%c0_22, %c0_23, %c0_24, %c0_25], %41 {strides = array<i32>} : memref<1x1x8x32xf32, #tpu.memory_space<vmem>>, vector<1x1x8x32xf32>,
    return
  }
  func.func @transform_0(%arg0: i32, %arg1: i32) -> (i32, i32, i32, i32) {
    %c0_i32 = arith.constant 0 : i32
    %c0_i32_0 = arith.constant 0 : i32
    %c0_i32_1 = arith.constant 0 : i32
    return %arg0, %arg1, %c0_i32, %c0_i32_0 : i32, i32, i32, i32
  }
  func.func @transform_1(%arg0: i32, %arg1: i32) -> (i32, i32, i32, i32) {
    %c0_i32 = arith.constant 0 : i32
    %c0_i32_0 = arith.constant 0 : i32
    %c0_i32_1 = arith.constant 0 : i32
    return %arg0, %arg1, %c0_i32, %c0_i32_0 : i32, i32, i32, i32
  }
  func.func @transform_2(%arg0: i32, %arg1: i32) -> (i32, i32, i32, i32) {
    %c0_i32 = arith.constant 0 : i32
    %c0_i32_0 = arith.constant 0 : i32
    %c0_i32_1 = arith.constant 0 : i32
    return %arg0, %arg1, %c0_i32, %c0_i32_0 : i32, i32, i32, i32
  }
  func.func @transform_3(%arg0: i32, %arg1: i32) -> (i32, i32, i32, i32) {
    %c0_i32 = arith.constant 0 : i32
    %c0_i32_0 = arith.constant 0 : i32
    %c0_i32_1 = arith.constant 0 : i32
    return %arg0, %arg1, %c0_i32, %c0_i32_0 : i32, i32, i32, i32
  }
}

module attributes {stable_mosaic.version = 11 : i64} {
  func.func @_linear_bn_kernel(%arg0: i32, %arg1: memref<32x32xf32, #tpu.memory_space<vmem>>, %arg2: memref<32x32xf32, #tpu.memory_space<vmem>>, %arg3: memref<1x32xf32, #tpu.memory_space<vmem>>, %arg4: memref<1x32xf32, #tpu.memory_space<vmem>>, %arg5: memref<1x32xf32, #tpu.memory_space<vmem>>, %arg6: memref<32x32xf32, #tpu.memory_space<vmem>>) attributes {dimension_semantics = [#tpu.dimension_semantics<parallel>], iteration_bounds = array<i64: 1>, scalar_prefetch = 0 : i64, scratch_operands = 0 : i64, tpu.core_type = #tpu.core_type<tc>, window_params = [{pipeline_mode = #tpu.pipeline_mode<synchronous>, transform_indices = @transform_0, window_bounds = array<i64: 32, 32>}, {transform_indices = @transform_1, window_bounds = array<i64: 32, 32>}, {transform_indices = @transform_2, window_bounds = array<i64: 1, 32>}, {transform_indices = @transform_3, window_bounds = array<i64: 1, 32>}, {transform_indices = @transform_4, window_bounds = array<i64: 1, 32>}, {transform_indices = @transform_5, window_bounds = array<i64: 32, 32>}]} {
    %c0 = arith.constant 0 : index
    %c0_0 = arith.constant 0 : index
    %0 = vector.load %arg1[%c0, %c0_0] : memref<32x32xf32, #tpu.memory_space<vmem>>, vector<32x32xf32>
    %c0_1 = arith.constant 0 : index
    %c0_2 = arith.constant 0 : index
    %1 = vector.load %arg2[%c0_1, %c0_2] : memref<32x32xf32, #tpu.memory_space<vmem>>, vector<32x32xf32>
    %cst = arith.constant dense<0.000000e+00> : vector<32x32xf32>
    %2 = tpu.matmul %0, %1, %cst {dimension_numbers = #tpu.dot_dimension_numbers<[1], [0], [0], [1], [0, 0, 1, 1], [], []>} : vector<32x32xf32>, vector<32x32xf32>, vector<32x32xf32> -> vector<32x32xf32>
    %c0_3 = arith.constant 0 : index
    %c0_4 = arith.constant 0 : index
    %3 = vector.load %arg3[%c0_3, %c0_4] : memref<1x32xf32, #tpu.memory_space<vmem>>, vector<1x32xf32>
    %4 = vector.broadcast %3 : vector<1x32xf32> to vector<32x32xf32>
    %5 = arith.addf %2, %4 : vector<32x32xf32>
    %cst_5 = arith.constant dense<0.000000e+00> : vector<32xf32>
    %6 = vector.multi_reduction <add>, %5, %cst_5 [0] : vector<32x32xf32> to vector<32xf32>
    %7 = vector.shape_cast %6 : vector<32xf32> to vector<1x32xf32>
    %cst_6 = arith.constant 3.200000e+01 : f32
    %8 = vector.broadcast %cst_6 : f32 to vector<1x32xf32>
    %9 = arith.divf %7, %8 : vector<1x32xf32>
    %10 = vector.broadcast %9 : vector<1x32xf32> to vector<32x32xf32>
    %11 = arith.subf %5, %10 : vector<32x32xf32>
    %12 = arith.mulf %11, %11 : vector<32x32xf32>
    %cst_7 = arith.constant dense<0.000000e+00> : vector<32xf32>
    %13 = vector.multi_reduction <add>, %12, %cst_7 [0] : vector<32x32xf32> to vector<32xf32>
    %14 = vector.shape_cast %13 : vector<32xf32> to vector<1x32xf32>
    %cst_8 = arith.constant 3.200000e+01 : f32
    %15 = vector.broadcast %cst_8 : f32 to vector<1x32xf32>
    %16 = arith.divf %14, %15 : vector<1x32xf32>
    %17 = vector.broadcast %9 : vector<1x32xf32> to vector<32x32xf32>
    %18 = arith.subf %5, %17 : vector<32x32xf32>
    %cst_9 = arith.constant 9.99999974E-6 : f32
    %19 = vector.broadcast %cst_9 : f32 to vector<1x32xf32>
    %20 = arith.addf %16, %19 : vector<1x32xf32>
    %21 = math.rsqrt %20 : vector<1x32xf32>
    %22 = vector.broadcast %21 : vector<1x32xf32> to vector<32x32xf32>
    %23 = arith.mulf %18, %22 : vector<32x32xf32>
    %c0_10 = arith.constant 0 : index
    %c0_11 = arith.constant 0 : index
    %24 = vector.load %arg4[%c0_10, %c0_11] : memref<1x32xf32, #tpu.memory_space<vmem>>, vector<1x32xf32>
    %25 = vector.broadcast %24 : vector<1x32xf32> to vector<32x32xf32>
    %26 = arith.mulf %23, %25 : vector<32x32xf32>
    %c0_12 = arith.constant 0 : index
    %c0_13 = arith.constant 0 : index
    %27 = vector.load %arg5[%c0_12, %c0_13] : memref<1x32xf32, #tpu.memory_space<vmem>>, vector<1x32xf32>
    %28 = vector.broadcast %27 : vector<1x32xf32> to vector<32x32xf32>
    %29 = arith.addf %26, %28 : vector<32x32xf32>
    %c0_14 = arith.constant 0 : index
    %c0_15 = arith.constant 0 : index
    %30 = vector.load %arg6[%c0_14, %c0_15] : memref<32x32xf32, #tpu.memory_space<vmem>>, vector<32x32xf32>
    tpu.vector_store %arg6[%c0_14, %c0_15], %29 {strides = array<i32>} : memref<32x32xf32, #tpu.memory_space<vmem>>, vector<32x32xf32>,
    return
  }
  func.func @transform_0(%arg0: i32) -> (i32, i32) {
    %c0_i32 = arith.constant 0 : i32
    %c0_i32_0 = arith.constant 0 : i32
    %c0_i32_1 = arith.constant 0 : i32
    return %c0_i32, %c0_i32_0 : i32, i32
  }
  func.func @transform_1(%arg0: i32) -> (i32, i32) {
    %c0_i32 = arith.constant 0 : i32
    %c0_i32_0 = arith.constant 0 : i32
    return %c0_i32, %arg0 : i32, i32
  }
  func.func @transform_2(%arg0: i32) -> (i32, i32) {
    %c0_i32 = arith.constant 0 : i32
    %c0_i32_0 = arith.constant 0 : i32
    return %c0_i32, %arg0 : i32, i32
  }
  func.func @transform_3(%arg0: i32) -> (i32, i32) {
    %c0_i32 = arith.constant 0 : i32
    %c0_i32_0 = arith.constant 0 : i32
    return %c0_i32, %arg0 : i32, i32
  }
  func.func @transform_4(%arg0: i32) -> (i32, i32) {
    %c0_i32 = arith.constant 0 : i32
    %c0_i32_0 = arith.constant 0 : i32
    return %c0_i32, %arg0 : i32, i32
  }
  func.func @transform_5(%arg0: i32) -> (i32, i32) {
    %c0_i32 = arith.constant 0 : i32
    %c0_i32_0 = arith.constant 0 : i32
    return %c0_i32, %arg0 : i32, i32
  }
}

module attributes {stable_mosaic.version = 11 : i64} {
  func.func @_lif_kernel(%arg0: i32, %arg1: memref<2x16x32xf32, #tpu.memory_space<vmem>>, %arg2: memref<2x16x32xbf16, #tpu.memory_space<vmem>>) attributes {dimension_semantics = [#tpu.dimension_semantics<parallel>], iteration_bounds = array<i64: 1>, scalar_prefetch = 0 : i64, scratch_operands = 0 : i64, tpu.core_type = #tpu.core_type<tc>, window_params = [{transform_indices = @transform_0, window_bounds = array<i64: 2, 16, 32>}, {transform_indices = @transform_1, window_bounds = array<i64: 2, 16, 32>}]} {
    %cst = arith.constant 0.000000e+00 : f32
    %0 = vector.broadcast %cst : f32 to vector<16x32xf32>
    %c0_i32 = arith.constant 0 : i32
    %1 = arith.index_cast %c0_i32 : i32 to index
    %c0 = arith.constant 0 : index
    %c0_0 = arith.constant 0 : index
    %2 = vector.load %arg1[%1, %c0, %c0_0] : memref<2x16x32xf32, #tpu.memory_space<vmem>>, vector<1x16x32xf32>
    %3 = vector.shape_cast %2 : vector<1x16x32xf32> to vector<16x32xf32>
    %4 = arith.subf %3, %0 : vector<16x32xf32>
    %cst_1 = arith.constant 5.000000e-01 : f32
    %5 = vector.broadcast %cst_1 : f32 to vector<16x32xf32>
    %6 = arith.mulf %4, %5 : vector<16x32xf32>
    %7 = arith.addf %0, %6 : vector<16x32xf32>
    %cst_2 = arith.constant 5.000000e-01 : f32
    %8 = vector.broadcast %cst_2 : f32 to vector<16x32xf32>
    %9 = arith.cmpf oge, %7, %8 : vector<16x32xf32>
    %10 = arith.extui %9 : vector<16x32xi1> to vector<16x32xi32>
    %11 = arith.sitofp %10 : vector<16x32xi32> to vector<16x32xf32>
    %12 = arith.truncf %11 : vector<16x32xf32> to vector<16x32xbf16>
    %13 = arith.index_cast %c0_i32 : i32 to index
    %c0_3 = arith.constant 0 : index
    %c0_4 = arith.constant 0 : index
    %14 = vector.load %arg2[%13, %c0_3, %c0_4] : memref<2x16x32xbf16, #tpu.memory_space<vmem>>, vector<1x16x32xbf16>
    %15 = vector.shape_cast %14 : vector<1x16x32xbf16> to vector<16x32xbf16>
    %16 = vector.shape_cast %12 : vector<16x32xbf16> to vector<1x16x32xbf16>
    tpu.vector_store %arg2[%13, %c0_3, %c0_4], %16 {strides = array<i32>} : memref<2x16x32xbf16, #tpu.memory_space<vmem>>, vector<1x16x32xbf16>,
    %cst_5 = arith.constant 0.000000e+00 : f32
    %17 = vector.broadcast %cst_5 : f32 to vector<16x32xf32>
    %18 = arith.select %9, %17, %7 : vector<16x32xi1>, vector<16x32xf32>
    %c1_i32 = arith.constant 1 : i32
    %19 = arith.index_cast %c1_i32 : i32 to index
    %c0_6 = arith.constant 0 : index
    %c0_7 = arith.constant 0 : index
    %20 = vector.load %arg1[%19, %c0_6, %c0_7] : memref<2x16x32xf32, #tpu.memory_space<vmem>>, vector<1x16x32xf32>
    %21 = vector.shape_cast %20 : vector<1x16x32xf32> to vector<16x32xf32>
    %22 = arith.subf %21, %18 : vector<16x32xf32>
    %cst_8 = arith.constant 5.000000e-01 : f32
    %23 = vector.broadcast %cst_8 : f32 to vector<16x32xf32>
    %24 = arith.mulf %22, %23 : vector<16x32xf32>
    %25 = arith.addf %18, %24 : vector<16x32xf32>
    %cst_9 = arith.constant 5.000000e-01 : f32
    %26 = vector.broadcast %cst_9 : f32 to vector<16x32xf32>
    %27 = arith.cmpf oge, %25, %26 : vector<16x32xf32>
    %28 = arith.extui %27 : vector<16x32xi1> to vector<16x32xi32>
    %29 = arith.sitofp %28 : vector<16x32xi32> to vector<16x32xf32>
    %30 = arith.truncf %29 : vector<16x32xf32> to vector<16x32xbf16>
    %31 = arith.index_cast %c1_i32 : i32 to index
    %c0_10 = arith.constant 0 : index
    %c0_11 = arith.constant 0 : index
    %32 = vector.load %arg2[%31, %c0_10, %c0_11] : memref<2x16x32xbf16, #tpu.memory_space<vmem>>, vector<1x16x32xbf16>
    %33 = vector.shape_cast %32 : vector<1x16x32xbf16> to vector<16x32xbf16>
    %34 = vector.shape_cast %30 : vector<16x32xbf16> to vector<1x16x32xbf16>
    tpu.vector_store %arg2[%31, %c0_10, %c0_11], %34 {strides = array<i32>} : memref<2x16x32xbf16, #tpu.memory_space<vmem>>, vector<1x16x32xbf16>,
    %cst_12 = arith.constant 0.000000e+00 : f32
    %35 = vector.broadcast %cst_12 : f32 to vector<16x32xf32>
    %36 = arith.select %27, %35, %25 : vector<16x32xi1>, vector<16x32xf32>
    %c2_i32 = arith.constant 2 : i32
    return
  }
  func.func @transform_0(%arg0: i32) -> (i32, i32, i32) {
    %c0_i32 = arith.constant 0 : i32
    %c0_i32_0 = arith.constant 0 : i32
    %c0_i32_1 = arith.constant 0 : i32
    return %c0_i32, %arg0, %c0_i32_0 : i32, i32, i32
  }
  func.func @transform_1(%arg0: i32) -> (i32, i32, i32) {
    %c0_i32 = arith.constant 0 : i32
    %c0_i32_0 = arith.constant 0 : i32
    %c0_i32_1 = arith.constant 0 : i32
    return %c0_i32, %arg0, %c0_i32_0 : i32, i32, i32
  }
}

module attributes {stable_mosaic.version = 11 : i64} {
  func.func @_linear_bn_kernel(%arg0: i32, %arg1: memref<32x32xbf16, #tpu.memory_space<vmem>>, %arg2: memref<32x32xf32, #tpu.memory_space<vmem>>, %arg3: memref<1x32xf32, #tpu.memory_space<vmem>>, %arg4: memref<1x32xf32, #tpu.memory_space<vmem>>, %arg5: memref<1x32xf32, #tpu.memory_space<vmem>>, %arg6: memref<32x32xf32, #tpu.memory_space<vmem>>) attributes {dimension_semantics = [#tpu.dimension_semantics<parallel>], iteration_bounds = array<i64: 1>, scalar_prefetch = 0 : i64, scratch_operands = 0 : i64, tpu.core_type = #tpu.core_type<tc>, window_params = [{pipeline_mode = #tpu.pipeline_mode<synchronous>, transform_indices = @transform_0, window_bounds = array<i64: 32, 32>}, {transform_indices = @transform_1, window_bounds = array<i64: 32, 32>}, {transform_indices = @transform_2, window_bounds = array<i64: 1, 32>}, {transform_indices = @transform_3, window_bounds = array<i64: 1, 32>}, {transform_indices = @transform_4, window_bounds = array<i64: 1, 32>}, {transform_indices = @transform_5, window_bounds = array<i64: 32, 32>}]} {
    %c0 = arith.constant 0 : index
    %c0_0 = arith.constant 0 : index
    %0 = vector.load %arg1[%c0, %c0_0] : memref<32x32xbf16, #tpu.memory_space<vmem>>, vector<32x32xbf16>
    %1 = arith.extf %0 : vector<32x32xbf16> to vector<32x32xf32>
    %c0_1 = arith.constant 0 : index
    %c0_2 = arith.constant 0 : index
    %2 = vector.load %arg2[%c0_1, %c0_2] : memref<32x32xf32, #tpu.memory_space<vmem>>, vector<32x32xf32>
    %cst = arith.constant dense<0.000000e+00> : vector<32x32xf32>
    %3 = tpu.matmul %1, %2, %cst {dimension_numbers = #tpu.dot_dimension_numbers<[1], [0], [0], [1], [0, 0, 1, 1], [], []>} : vector<32x32xf32>, vector<32x32xf32>, vector<32x32xf32> -> vector<32x32xf32>
    %c0_3 = arith.constant 0 : index
    %c0_4 = arith.constant 0 : index
    %4 = vector.load %arg3[%c0_3, %c0_4] : memref<1x32xf32, #tpu.memory_space<vmem>>, vector<1x32xf32>
    %5 = vector.broadcast %4 : vector<1x32xf32> to vector<32x32xf32>
    %6 = arith.addf %3, %5 : vector<32x32xf32>
    %cst_5 = arith.constant dense<0.000000e+00> : vector<32xf32>
    %7 = vector.multi_reduction <add>, %6, %cst_5 [0] : vector<32x32xf32> to vector<32xf32>
    %8 = vector.shape_cast %7 : vector<32xf32> to vector<1x32xf32>
    %cst_6 = arith.constant 3.200000e+01 : f32
    %9 = vector.broadcast %cst_6 : f32 to vector<1x32xf32>
    %10 = arith.divf %8, %9 : vector<1x32xf32>
    %11 = vector.broadcast %10 : vector<1x32xf32> to vector<32x32xf32>
    %12 = arith.subf %6, %11 : vector<32x32xf32>
    %13 = arith.mulf %12, %12 : vector<32x32xf32>
    %cst_7 = arith.constant dense<0.000000e+00> : vector<32xf32>
    %14 = vector.multi_reduction <add>, %13, %cst_7 [0] : vector<32x32xf32> to vector<32xf32>
    %15 = vector.shape_cast %14 : vector<32xf32> to vector<1x32xf32>
    %cst_8 = arith.constant 3.200000e+01 : f32
    %16 = vector.broadcast %cst_8 : f32 to vector<1x32xf32>
    %17 = arith.divf %15, %16 : vector<1x32xf32>
    %18 = vector.broadcast %10 : vector<1x32xf32> to vector<32x32xf32>
    %19 = arith.subf %6, %18 : vector<32x32xf32>
    %cst_9 = arith.constant 9.99999974E-6 : f32
    %20 = vector.broadcast %cst_9 : f32 to vector<1x32xf32>
    %21 = arith.addf %17, %20 : vector<1x32xf32>
    %22 = math.rsqrt %21 : vector<1x32xf32>
    %23 = vector.broadcast %22 : vector<1x32xf32> to vector<32x32xf32>
    %24 = arith.mulf %19, %23 : vector<32x32xf32>
    %c0_10 = arith.constant 0 : index
    %c0_11 = arith.constant 0 : index
    %25 = vector.load %arg4[%c0_10, %c0_11] : memref<1x32xf32, #tpu.memory_space<vmem>>, vector<1x32xf32>
    %26 = vector.broadcast %25 : vector<1x32xf32> to vector<32x32xf32>
    %27 = arith.mulf %24, %26 : vector<32x32xf32>
    %c0_12 = arith.constant 0 : index
    %c0_13 = arith.constant 0 : index
    %28 = vector.load %arg5[%c0_12, %c0_13] : memref<1x32xf32, #tpu.memory_space<vmem>>, vector<1x32xf32>
    %29 = vector.broadcast %28 : vector<1x32xf32> to vector<32x32xf32>
    %30 = arith.addf %27, %29 : vector<32x32xf32>
    %c0_14 = arith.constant 0 : index
    %c0_15 = arith.constant 0 : index
    %31 = vector.load %arg6[%c0_14, %c0_15] : memref<32x32xf32, #tpu.memory_space<vmem>>, vector<32x32xf32>
    tpu.vector_store %arg6[%c0_14, %c0_15], %30 {strides = array<i32>} : memref<32x32xf32, #tpu.memory_space<vmem>>, vector<32x32xf32>,
    return
  }
  func.func @transform_0(%arg0: i32) -> (i32, i32) {
    %c0_i32 = arith.constant 0 : i32
    %c0_i32_0 = arith.constant 0 : i32
    %c0_i32_1 = arith.constant 0 : i32
    return %c0_i32, %c0_i32_0 : i32, i32
  }
  func.func @transform_1(%arg0: i32) -> (i32, i32) {
    %c0_i32 = arith.constant 0 : i32
    %c0_i32_0 = arith.constant 0 : i32
    return %c0_i32, %arg0 : i32, i32
  }
  func.func @transform_2(%arg0: i32) -> (i32, i32) {
    %c0_i32 = arith.constant 0 : i32
    %c0_i32_0 = arith.constant 0 : i32
    return %c0_i32, %arg0 : i32, i32
  }
  func.func @transform_3(%arg0: i32) -> (i32, i32) {
    %c0_i32 = arith.constant 0 : i32
    %c0_i32_0 = arith.constant 0 : i32
    return %c0_i32, %arg0 : i32, i32
  }
  func.func @transform_4(%arg0: i32) -> (i32, i32) {
    %c0_i32 = arith.constant 0 : i32
    %c0_i32_0 = arith.constant 0 : i32
    return %c0_i32, %arg0 : i32, i32
  }
  func.func @transform_5(%arg0: i32) -> (i32, i32) {
    %c0_i32 = arith.constant 0 : i32
    %c0_i32_0 = arith.constant 0 : i32
    return %c0_i32, %arg0 : i32, i32
  }
}

module attributes {stable_mosaic.version = 11 : i64} {
  func.func @_linear_bn_kernel(%arg0: i32, %arg1: memref<32x32xf32, #tpu.memory_space<vmem>>, %arg2: memref<32x128xf32, #tpu.memory_space<vmem>>, %arg3: memref<1x128xf32, #tpu.memory_space<vmem>>, %arg4: memref<1x128xf32, #tpu.memory_space<vmem>>, %arg5: memref<1x128xf32, #tpu.memory_space<vmem>>, %arg6: memref<32x128xf32, #tpu.memory_space<vmem>>) attributes {dimension_semantics = [#tpu.dimension_semantics<parallel>], iteration_bounds = array<i64: 1>, scalar_prefetch = 0 : i64, scratch_operands = 0 : i64, tpu.core_type = #tpu.core_type<tc>, window_params = [{pipeline_mode = #tpu.pipeline_mode<synchronous>, transform_indices = @transform_0, window_bounds = array<i64: 32, 32>}, {transform_indices = @transform_1, window_bounds = array<i64: 32, 128>}, {transform_indices = @transform_2, window_bounds = array<i64: 1, 128>}, {transform_indices = @transform_3, window_bounds = array<i64: 1, 128>}, {transform_indices = @transform_4, window_bounds = array<i64: 1, 128>}, {transform_indices = @transform_5, window_bounds = array<i64: 32, 128>}]} {
    %c0 = arith.constant 0 : index
    %c0_0 = arith.constant 0 : index
    %0 = vector.load %arg1[%c0, %c0_0] : memref<32x32xf32, #tpu.memory_space<vmem>>, vector<32x32xf32>
    %c0_1 = arith.constant 0 : index
    %c0_2 = arith.constant 0 : index
    %1 = vector.load %arg2[%c0_1, %c0_2] : memref<32x128xf32, #tpu.memory_space<vmem>>, vector<32x128xf32>
    %cst = arith.constant dense<0.000000e+00> : vector<32x128xf32>
    %2 = tpu.matmul %0, %1, %cst {dimension_numbers = #tpu.dot_dimension_numbers<[1], [0], [0], [1], [0, 0, 1, 1], [], []>} : vector<32x32xf32>, vector<32x128xf32>, vector<32x128xf32> -> vector<32x128xf32>
    %c0_3 = arith.constant 0 : index
    %c0_4 = arith.constant 0 : index
    %3 = vector.load %arg3[%c0_3, %c0_4] : memref<1x128xf32, #tpu.memory_space<vmem>>, vector<1x128xf32>
    %4 = vector.broadcast %3 : vector<1x128xf32> to vector<32x128xf32>
    %5 = arith.addf %2, %4 : vector<32x128xf32>
    %cst_5 = arith.constant dense<0.000000e+00> : vector<128xf32>
    %6 = vector.multi_reduction <add>, %5, %cst_5 [0] : vector<32x128xf32> to vector<128xf32>
    %7 = vector.shape_cast %6 : vector<128xf32> to vector<1x128xf32>
    %cst_6 = arith.constant 3.200000e+01 : f32
    %8 = vector.broadcast %cst_6 : f32 to vector<1x128xf32>
    %9 = arith.divf %7, %8 : vector<1x128xf32>
    %10 = vector.broadcast %9 : vector<1x128xf32> to vector<32x128xf32>
    %11 = arith.subf %5, %10 : vector<32x128xf32>
    %12 = arith.mulf %11, %11 : vector<32x128xf32>
    %cst_7 = arith.constant dense<0.000000e+00> : vector<128xf32>
    %13 = vector.multi_reduction <add>, %12, %cst_7 [0] : vector<32x128xf32> to vector<128xf32>
    %14 = vector.shape_cast %13 : vector<128xf32> to vector<1x128xf32>
    %cst_8 = arith.constant 3.200000e+01 : f32
    %15 = vector.broadcast %cst_8 : f32 to vector<1x128xf32>
    %16 = arith.divf %14, %15 : vector<1x128xf32>
    %17 = vector.broadcast %9 : vector<1x128xf32> to vector<32x128xf32>
    %18 = arith.subf %5, %17 : vector<32x128xf32>
    %cst_9 = arith.constant 9.99999974E-6 : f32
    %19 = vector.broadcast %cst_9 : f32 to vector<1x128xf32>
    %20 = arith.addf %16, %19 : vector<1x128xf32>
    %21 = math.rsqrt %20 : vector<1x128xf32>
    %22 = vector.broadcast %21 : vector<1x128xf32> to vector<32x128xf32>
    %23 = arith.mulf %18, %22 : vector<32x128xf32>
    %c0_10 = arith.constant 0 : index
    %c0_11 = arith.constant 0 : index
    %24 = vector.load %arg4[%c0_10, %c0_11] : memref<1x128xf32, #tpu.memory_space<vmem>>, vector<1x128xf32>
    %25 = vector.broadcast %24 : vector<1x128xf32> to vector<32x128xf32>
    %26 = arith.mulf %23, %25 : vector<32x128xf32>
    %c0_12 = arith.constant 0 : index
    %c0_13 = arith.constant 0 : index
    %27 = vector.load %arg5[%c0_12, %c0_13] : memref<1x128xf32, #tpu.memory_space<vmem>>, vector<1x128xf32>
    %28 = vector.broadcast %27 : vector<1x128xf32> to vector<32x128xf32>
    %29 = arith.addf %26, %28 : vector<32x128xf32>
    %c0_14 = arith.constant 0 : index
    %c0_15 = arith.constant 0 : index
    %30 = vector.load %arg6[%c0_14, %c0_15] : memref<32x128xf32, #tpu.memory_space<vmem>>, vector<32x128xf32>
    tpu.vector_store %arg6[%c0_14, %c0_15], %29 {strides = array<i32>} : memref<32x128xf32, #tpu.memory_space<vmem>>, vector<32x128xf32>,
    return
  }
  func.func @transform_0(%arg0: i32) -> (i32, i32) {
    %c0_i32 = arith.constant 0 : i32
    %c0_i32_0 = arith.constant 0 : i32
    %c0_i32_1 = arith.constant 0 : i32
    return %c0_i32, %c0_i32_0 : i32, i32
  }
  func.func @transform_1(%arg0: i32) -> (i32, i32) {
    %c0_i32 = arith.constant 0 : i32
    %c0_i32_0 = arith.constant 0 : i32
    return %c0_i32, %arg0 : i32, i32
  }
  func.func @transform_2(%arg0: i32) -> (i32, i32) {
    %c0_i32 = arith.constant 0 : i32
    %c0_i32_0 = arith.constant 0 : i32
    return %c0_i32, %arg0 : i32, i32
  }
  func.func @transform_3(%arg0: i32) -> (i32, i32) {
    %c0_i32 = arith.constant 0 : i32
    %c0_i32_0 = arith.constant 0 : i32
    return %c0_i32, %arg0 : i32, i32
  }
  func.func @transform_4(%arg0: i32) -> (i32, i32) {
    %c0_i32 = arith.constant 0 : i32
    %c0_i32_0 = arith.constant 0 : i32
    return %c0_i32, %arg0 : i32, i32
  }
  func.func @transform_5(%arg0: i32) -> (i32, i32) {
    %c0_i32 = arith.constant 0 : i32
    %c0_i32_0 = arith.constant 0 : i32
    return %c0_i32, %arg0 : i32, i32
  }
}

module attributes {stable_mosaic.version = 11 : i64} {
  func.func @_lif_residual_kernel(%arg0: i32, %arg1: memref<2x8x32xf32, #tpu.memory_space<vmem>>, %arg2: memref<2x8x32xf32, #tpu.memory_space<vmem>>, %arg3: memref<2x8x32xf32, #tpu.memory_space<vmem>>) attributes {dimension_semantics = [#tpu.dimension_semantics<parallel>], iteration_bounds = array<i64: 2>, scalar_prefetch = 0 : i64, scratch_operands = 0 : i64, tpu.core_type = #tpu.core_type<tc>, window_params = [{transform_indices = @transform_0, window_bounds = array<i64: 2, 8, 32>}, {transform_indices = @transform_1, window_bounds = array<i64: 2, 8, 32>}, {transform_indices = @transform_2, window_bounds = array<i64: 2, 8, 32>}]} {
    %cst = arith.constant 0.000000e+00 : f32
    %0 = vector.broadcast %cst : f32 to vector<8x32xf32>
    %c0_i32 = arith.constant 0 : i32
    %1 = arith.index_cast %c0_i32 : i32 to index
    %c0 = arith.constant 0 : index
    %c0_0 = arith.constant 0 : index
    %2 = vector.load %arg1[%1, %c0, %c0_0] : memref<2x8x32xf32, #tpu.memory_space<vmem>>, vector<1x8x32xf32>
    %3 = vector.shape_cast %2 : vector<1x8x32xf32> to vector<8x32xf32>
    %4 = arith.subf %3, %0 : vector<8x32xf32>
    %cst_1 = arith.constant 5.000000e-01 : f32
    %5 = vector.broadcast %cst_1 : f32 to vector<8x32xf32>
    %6 = arith.mulf %4, %5 : vector<8x32xf32>
    %7 = arith.addf %0, %6 : vector<8x32xf32>
    %cst_2 = arith.constant 1.000000e+00 : f32
    %8 = vector.broadcast %cst_2 : f32 to vector<8x32xf32>
    %9 = arith.cmpf oge, %7, %8 : vector<8x32xf32>
    %10 = arith.index_cast %c0_i32 : i32 to index
    %c0_3 = arith.constant 0 : index
    %c0_4 = arith.constant 0 : index
    %11 = vector.load %arg2[%10, %c0_3, %c0_4] : memref<2x8x32xf32, #tpu.memory_space<vmem>>, vector<1x8x32xf32>
    %12 = vector.shape_cast %11 : vector<1x8x32xf32> to vector<8x32xf32>
    %13 = arith.extui %9 : vector<8x32xi1> to vector<8x32xi32>
    %14 = arith.sitofp %13 : vector<8x32xi32> to vector<8x32xf32>
    %15 = arith.addf %12, %14 : vector<8x32xf32>
    %16 = arith.index_cast %c0_i32 : i32 to index
    %c0_5 = arith.constant 0 : index
    %c0_6 = arith.constant 0 : index
    %17 = vector.load %arg3[%16, %c0_5, %c0_6] : memref<2x8x32xf32, #tpu.memory_space<vmem>>, vector<1x8x32xf32>
    %18 = vector.shape_cast %17 : vector<1x8x32xf32> to vector<8x32xf32>
    %19 = vector.shape_cast %15 : vector<8x32xf32> to vector<1x8x32xf32>
    tpu.vector_store %arg3[%16, %c0_5, %c0_6], %19 {strides = array<i32>} : memref<2x8x32xf32, #tpu.memory_space<vmem>>, vector<1x8x32xf32>,
    %cst_7 = arith.constant 0.000000e+00 : f32
    %20 = vector.broadcast %cst_7 : f32 to vector<8x32xf32>
    %21 = arith.select %9, %20, %7 : vector<8x32xi1>, vector<8x32xf32>
    %c1_i32 = arith.constant 1 : i32
    %22 = arith.index_cast %c1_i32 : i32 to index
    %c0_8 = arith.constant 0 : index
    %c0_9 = arith.constant 0 : index
    %23 = vector.load %arg1[%22, %c0_8, %c0_9] : memref<2x8x32xf32, #tpu.memory_space<vmem>>, vector<1x8x32xf32>
    %24 = vector.shape_cast %23 : vector<1x8x32xf32> to vector<8x32xf32>
    %25 = arith.subf %24, %21 : vector<8x32xf32>
    %cst_10 = arith.constant 5.000000e-01 : f32
    %26 = vector.broadcast %cst_10 : f32 to vector<8x32xf32>
    %27 = arith.mulf %25, %26 : vector<8x32xf32>
    %28 = arith.addf %21, %27 : vector<8x32xf32>
    %cst_11 = arith.constant 1.000000e+00 : f32
    %29 = vector.broadcast %cst_11 : f32 to vector<8x32xf32>
    %30 = arith.cmpf oge, %28, %29 : vector<8x32xf32>
    %31 = arith.index_cast %c1_i32 : i32 to index
    %c0_12 = arith.constant 0 : index
    %c0_13 = arith.constant 0 : index
    %32 = vector.load %arg2[%31, %c0_12, %c0_13] : memref<2x8x32xf32, #tpu.memory_space<vmem>>, vector<1x8x32xf32>
    %33 = vector.shape_cast %32 : vector<1x8x32xf32> to vector<8x32xf32>
    %34 = arith.extui %30 : vector<8x32xi1> to vector<8x32xi32>
    %35 = arith.sitofp %34 : vector<8x32xi32> to vector<8x32xf32>
    %36 = arith.addf %33, %35 : vector<8x32xf32>
    %37 = arith.index_cast %c1_i32 : i32 to index
    %c0_14 = arith.constant 0 : index
    %c0_15 = arith.constant 0 : index
    %38 = vector.load %arg3[%37, %c0_14, %c0_15] : memref<2x8x32xf32, #tpu.memory_space<vmem>>, vector<1x8x32xf32>
    %39 = vector.shape_cast %38 : vector<1x8x32xf32> to vector<8x32xf32>
    %40 = vector.shape_cast %36 : vector<8x32xf32> to vector<1x8x32xf32>
    tpu.vector_store %arg3[%37, %c0_14, %c0_15], %40 {strides = array<i32>} : memref<2x8x32xf32, #tpu.memory_space<vmem>>, vector<1x8x32xf32>,
    %cst_16 = arith.constant 0.000000e+00 : f32
    %41 = vector.broadcast %cst_16 : f32 to vector<8x32xf32>
    %42 = arith.select %30, %41, %28 : vector<8x32xi1>, vector<8x32xf32>
    %c2_i32 = arith.constant 2 : i32
    return
  }
  func.func @transform_0(%arg0: i32) -> (i32, i32, i32) {
    %c0_i32 = arith.constant 0 : i32
    %c0_i32_0 = arith.constant 0 : i32
    %c0_i32_1 = arith.constant 0 : i32
    return %c0_i32, %arg0, %c0_i32_0 : i32, i32, i32
  }
  func.func @transform_1(%arg0: i32) -> (i32, i32, i32) {
    %c0_i32 = arith.constant 0 : i32
    %c0_i32_0 = arith.constant 0 : i32
    %c0_i32_1 = arith.constant 0 : i32
    return %c0_i32, %arg0, %c0_i32_0 : i32, i32, i32
  }
  func.func @transform_2(%arg0: i32) -> (i32, i32, i32) {
    %c0_i32 = arith.constant 0 : i32
    %c0_i32_0 = arith.constant 0 : i32
    %c0_i32_1 = arith.constant 0 : i32
    return %c0_i32, %arg0, %c0_i32_0 : i32, i32, i32
  }
}

module attributes {stable_mosaic.version = 11 : i64} {
  func.func @_lif_kernel(%arg0: i32, %arg1: memref<2x16x128xf32, #tpu.memory_space<vmem>>, %arg2: memref<2x16x128xbf16, #tpu.memory_space<vmem>>) attributes {dimension_semantics = [#tpu.dimension_semantics<parallel>], iteration_bounds = array<i64: 1>, scalar_prefetch = 0 : i64, scratch_operands = 0 : i64, tpu.core_type = #tpu.core_type<tc>, window_params = [{transform_indices = @transform_0, window_bounds = array<i64: 2, 16, 128>}, {transform_indices = @transform_1, window_bounds = array<i64: 2, 16, 128>}]} {
    %cst = arith.constant 0.000000e+00 : f32
    %0 = vector.broadcast %cst : f32 to vector<16x128xf32>
    %c0_i32 = arith.constant 0 : i32
    %1 = arith.index_cast %c0_i32 : i32 to index
    %c0 = arith.constant 0 : index
    %c0_0 = arith.constant 0 : index
    %2 = vector.load %arg1[%1, %c0, %c0_0] : memref<2x16x128xf32, #tpu.memory_space<vmem>>, vector<1x16x128xf32>
    %3 = vector.shape_cast %2 : vector<1x16x128xf32> to vector<16x128xf32>
    %4 = arith.subf %3, %0 : vector<16x128xf32>
    %cst_1 = arith.constant 5.000000e-01 : f32
    %5 = vector.broadcast %cst_1 : f32 to vector<16x128xf32>
    %6 = arith.mulf %4, %5 : vector<16x128xf32>
    %7 = arith.addf %0, %6 : vector<16x128xf32>
    %cst_2 = arith.constant 1.000000e+00 : f32
    %8 = vector.broadcast %cst_2 : f32 to vector<16x128xf32>
    %9 = arith.cmpf oge, %7, %8 : vector<16x128xf32>
    %10 = arith.extui %9 : vector<16x128xi1> to vector<16x128xi32>
    %11 = arith.sitofp %10 : vector<16x128xi32> to vector<16x128xf32>
    %12 = arith.truncf %11 : vector<16x128xf32> to vector<16x128xbf16>
    %13 = arith.index_cast %c0_i32 : i32 to index
    %c0_3 = arith.constant 0 : index
    %c0_4 = arith.constant 0 : index
    %14 = vector.load %arg2[%13, %c0_3, %c0_4] : memref<2x16x128xbf16, #tpu.memory_space<vmem>>, vector<1x16x128xbf16>
    %15 = vector.shape_cast %14 : vector<1x16x128xbf16> to vector<16x128xbf16>
    %16 = vector.shape_cast %12 : vector<16x128xbf16> to vector<1x16x128xbf16>
    tpu.vector_store %arg2[%13, %c0_3, %c0_4], %16 {strides = array<i32>} : memref<2x16x128xbf16, #tpu.memory_space<vmem>>, vector<1x16x128xbf16>,
    %cst_5 = arith.constant 0.000000e+00 : f32
    %17 = vector.broadcast %cst_5 : f32 to vector<16x128xf32>
    %18 = arith.select %9, %17, %7 : vector<16x128xi1>, vector<16x128xf32>
    %c1_i32 = arith.constant 1 : i32
    %19 = arith.index_cast %c1_i32 : i32 to index
    %c0_6 = arith.constant 0 : index
    %c0_7 = arith.constant 0 : index
    %20 = vector.load %arg1[%19, %c0_6, %c0_7] : memref<2x16x128xf32, #tpu.memory_space<vmem>>, vector<1x16x128xf32>
    %21 = vector.shape_cast %20 : vector<1x16x128xf32> to vector<16x128xf32>
    %22 = arith.subf %21, %18 : vector<16x128xf32>
    %cst_8 = arith.constant 5.000000e-01 : f32
    %23 = vector.broadcast %cst_8 : f32 to vector<16x128xf32>
    %24 = arith.mulf %22, %23 : vector<16x128xf32>
    %25 = arith.addf %18, %24 : vector<16x128xf32>
    %cst_9 = arith.constant 1.000000e+00 : f32
    %26 = vector.broadcast %cst_9 : f32 to vector<16x128xf32>
    %27 = arith.cmpf oge, %25, %26 : vector<16x128xf32>
    %28 = arith.extui %27 : vector<16x128xi1> to vector<16x128xi32>
    %29 = arith.sitofp %28 : vector<16x128xi32> to vector<16x128xf32>
    %30 = arith.truncf %29 : vector<16x128xf32> to vector<16x128xbf16>
    %31 = arith.index_cast %c1_i32 : i32 to index
    %c0_10 = arith.constant 0 : index
    %c0_11 = arith.constant 0 : index
    %32 = vector.load %arg2[%31, %c0_10, %c0_11] : memref<2x16x128xbf16, #tpu.memory_space<vmem>>, vector<1x16x128xbf16>
    %33 = vector.shape_cast %32 : vector<1x16x128xbf16> to vector<16x128xbf16>
    %34 = vector.shape_cast %30 : vector<16x128xbf16> to vector<1x16x128xbf16>
    tpu.vector_store %arg2[%31, %c0_10, %c0_11], %34 {strides = array<i32>} : memref<2x16x128xbf16, #tpu.memory_space<vmem>>, vector<1x16x128xbf16>,
    %cst_12 = arith.constant 0.000000e+00 : f32
    %35 = vector.broadcast %cst_12 : f32 to vector<16x128xf32>
    %36 = arith.select %27, %35, %25 : vector<16x128xi1>, vector<16x128xf32>
    %c2_i32 = arith.constant 2 : i32
    return
  }
  func.func @transform_0(%arg0: i32) -> (i32, i32, i32) {
    %c0_i32 = arith.constant 0 : i32
    %c0_i32_0 = arith.constant 0 : i32
    %c0_i32_1 = arith.constant 0 : i32
    return %c0_i32, %arg0, %c0_i32_0 : i32, i32, i32
  }
  func.func @transform_1(%arg0: i32) -> (i32, i32, i32) {
    %c0_i32 = arith.constant 0 : i32
    %c0_i32_0 = arith.constant 0 : i32
    %c0_i32_1 = arith.constant 0 : i32
    return %c0_i32, %arg0, %c0_i32_0 : i32, i32, i32
  }
}

module attributes {stable_mosaic.version = 11 : i64} {
  func.func @_lif_residual_kernel(%arg0: i32, %arg1: memref<2x8x32xf32, #tpu.memory_space<vmem>>, %arg2: memref<2x8x32xf32, #tpu.memory_space<vmem>>, %arg3: memref<2x8x32xf32, #tpu.memory_space<vmem>>) attributes {dimension_semantics = [#tpu.dimension_semantics<parallel>], iteration_bounds = array<i64: 2>, scalar_prefetch = 0 : i64, scratch_operands = 0 : i64, tpu.core_type = #tpu.core_type<tc>, window_params = [{transform_indices = @transform_0, window_bounds = array<i64: 2, 8, 32>}, {transform_indices = @transform_1, window_bounds = array<i64: 2, 8, 32>}, {transform_indices = @transform_2, window_bounds = array<i64: 2, 8, 32>}]} {
    %cst = arith.constant 0.000000e+00 : f32
    %0 = vector.broadcast %cst : f32 to vector<8x32xf32>
    %c0_i32 = arith.constant 0 : i32
    %1 = arith.index_cast %c0_i32 : i32 to index
    %c0 = arith.constant 0 : index
    %c0_0 = arith.constant 0 : index
    %2 = vector.load %arg1[%1, %c0, %c0_0] : memref<2x8x32xf32, #tpu.memory_space<vmem>>, vector<1x8x32xf32>
    %3 = vector.shape_cast %2 : vector<1x8x32xf32> to vector<8x32xf32>
    %4 = arith.subf %3, %0 : vector<8x32xf32>
    %cst_1 = arith.constant 5.000000e-01 : f32
    %5 = vector.broadcast %cst_1 : f32 to vector<8x32xf32>
    %6 = arith.mulf %4, %5 : vector<8x32xf32>
    %7 = arith.addf %0, %6 : vector<8x32xf32>
    %cst_2 = arith.constant 1.000000e+00 : f32
    %8 = vector.broadcast %cst_2 : f32 to vector<8x32xf32>
    %9 = arith.cmpf oge, %7, %8 : vector<8x32xf32>
    %10 = arith.index_cast %c0_i32 : i32 to index
    %c0_3 = arith.constant 0 : index
    %c0_4 = arith.constant 0 : index
    %11 = vector.load %arg2[%10, %c0_3, %c0_4] : memref<2x8x32xf32, #tpu.memory_space<vmem>>, vector<1x8x32xf32>
    %12 = vector.shape_cast %11 : vector<1x8x32xf32> to vector<8x32xf32>
    %13 = arith.extui %9 : vector<8x32xi1> to vector<8x32xi32>
    %14 = arith.sitofp %13 : vector<8x32xi32> to vector<8x32xf32>
    %15 = arith.addf %12, %14 : vector<8x32xf32>
    %16 = arith.index_cast %c0_i32 : i32 to index
    %c0_5 = arith.constant 0 : index
    %c0_6 = arith.constant 0 : index
    %17 = vector.load %arg3[%16, %c0_5, %c0_6] : memref<2x8x32xf32, #tpu.memory_space<vmem>>, vector<1x8x32xf32>
    %18 = vector.shape_cast %17 : vector<1x8x32xf32> to vector<8x32xf32>
    %19 = vector.shape_cast %15 : vector<8x32xf32> to vector<1x8x32xf32>
    tpu.vector_store %arg3[%16, %c0_5, %c0_6], %19 {strides = array<i32>} : memref<2x8x32xf32, #tpu.memory_space<vmem>>, vector<1x8x32xf32>,
    %cst_7 = arith.constant 0.000000e+00 : f32
    %20 = vector.broadcast %cst_7 : f32 to vector<8x32xf32>
    %21 = arith.select %9, %20, %7 : vector<8x32xi1>, vector<8x32xf32>
    %c1_i32 = arith.constant 1 : i32
    %22 = arith.index_cast %c1_i32 : i32 to index
    %c0_8 = arith.constant 0 : index
    %c0_9 = arith.constant 0 : index
    %23 = vector.load %arg1[%22, %c0_8, %c0_9] : memref<2x8x32xf32, #tpu.memory_space<vmem>>, vector<1x8x32xf32>
    %24 = vector.shape_cast %23 : vector<1x8x32xf32> to vector<8x32xf32>
    %25 = arith.subf %24, %21 : vector<8x32xf32>
    %cst_10 = arith.constant 5.000000e-01 : f32
    %26 = vector.broadcast %cst_10 : f32 to vector<8x32xf32>
    %27 = arith.mulf %25, %26 : vector<8x32xf32>
    %28 = arith.addf %21, %27 : vector<8x32xf32>
    %cst_11 = arith.constant 1.000000e+00 : f32
    %29 = vector.broadcast %cst_11 : f32 to vector<8x32xf32>
    %30 = arith.cmpf oge, %28, %29 : vector<8x32xf32>
    %31 = arith.index_cast %c1_i32 : i32 to index
    %c0_12 = arith.constant 0 : index
    %c0_13 = arith.constant 0 : index
    %32 = vector.load %arg2[%31, %c0_12, %c0_13] : memref<2x8x32xf32, #tpu.memory_space<vmem>>, vector<1x8x32xf32>
    %33 = vector.shape_cast %32 : vector<1x8x32xf32> to vector<8x32xf32>
    %34 = arith.extui %30 : vector<8x32xi1> to vector<8x32xi32>
    %35 = arith.sitofp %34 : vector<8x32xi32> to vector<8x32xf32>
    %36 = arith.addf %33, %35 : vector<8x32xf32>
    %37 = arith.index_cast %c1_i32 : i32 to index
    %c0_14 = arith.constant 0 : index
    %c0_15 = arith.constant 0 : index
    %38 = vector.load %arg3[%37, %c0_14, %c0_15] : memref<2x8x32xf32, #tpu.memory_space<vmem>>, vector<1x8x32xf32>
    %39 = vector.shape_cast %38 : vector<1x8x32xf32> to vector<8x32xf32>
    %40 = vector.shape_cast %36 : vector<8x32xf32> to vector<1x8x32xf32>
    tpu.vector_store %arg3[%37, %c0_14, %c0_15], %40 {strides = array<i32>} : memref<2x8x32xf32, #tpu.memory_space<vmem>>, vector<1x8x32xf32>,
    %cst_16 = arith.constant 0.000000e+00 : f32
    %41 = vector.broadcast %cst_16 : f32 to vector<8x32xf32>
    %42 = arith.select %30, %41, %28 : vector<8x32xi1>, vector<8x32xf32>
    %c2_i32 = arith.constant 2 : i32
    return
  }
  func.func @transform_0(%arg0: i32) -> (i32, i32, i32) {
    %c0_i32 = arith.constant 0 : i32
    %c0_i32_0 = arith.constant 0 : i32
    %c0_i32_1 = arith.constant 0 : i32
    return %c0_i32, %arg0, %c0_i32_0 : i32, i32, i32
  }
  func.func @transform_1(%arg0: i32) -> (i32, i32, i32) {
    %c0_i32 = arith.constant 0 : i32
    %c0_i32_0 = arith.constant 0 : i32
    %c0_i32_1 = arith.constant 0 : i32
    return %c0_i32, %arg0, %c0_i32_0 : i32, i32, i32
  }
  func.func @transform_2(%arg0: i32) -> (i32, i32, i32) {
    %c0_i32 = arith.constant 0 : i32
    %c0_i32_0 = arith.constant 0 : i32
    %c0_i32_1 = arith.constant 0 : i32
    return %c0_i32, %arg0, %c0_i32_0 : i32, i32, i32
  }
}

module attributes {stable_mosaic.version = 11 : i64} {
  func.func @_linear_bn_kernel(%arg0: i32, %arg1: memref<32x128xbf16, #tpu.memory_space<vmem>>, %arg2: memref<128x32xf32, #tpu.memory_space<vmem>>, %arg3: memref<1x32xf32, #tpu.memory_space<vmem>>, %arg4: memref<1x32xf32, #tpu.memory_space<vmem>>, %arg5: memref<1x32xf32, #tpu.memory_space<vmem>>, %arg6: memref<32x32xf32, #tpu.memory_space<vmem>>) attributes {dimension_semantics = [#tpu.dimension_semantics<parallel>], iteration_bounds = array<i64: 1>, scalar_prefetch = 0 : i64, scratch_operands = 0 : i64, tpu.core_type = #tpu.core_type<tc>, window_params = [{pipeline_mode = #tpu.pipeline_mode<synchronous>, transform_indices = @transform_0, window_bounds = array<i64: 32, 128>}, {transform_indices = @transform_1, window_bounds = array<i64: 128, 32>}, {transform_indices = @transform_2, window_bounds = array<i64: 1, 32>}, {transform_indices = @transform_3, window_bounds = array<i64: 1, 32>}, {transform_indices = @transform_4, window_bounds = array<i64: 1, 32>}, {transform_indices = @transform_5, window_bounds = array<i64: 32, 32>}]} {
    %c0 = arith.constant 0 : index
    %c0_0 = arith.constant 0 : index
    %0 = vector.load %arg1[%c0, %c0_0] : memref<32x128xbf16, #tpu.memory_space<vmem>>, vector<32x128xbf16>
    %1 = arith.extf %0 : vector<32x128xbf16> to vector<32x128xf32>
    %c0_1 = arith.constant 0 : index
    %c0_2 = arith.constant 0 : index
    %2 = vector.load %arg2[%c0_1, %c0_2] : memref<128x32xf32, #tpu.memory_space<vmem>>, vector<128x32xf32>
    %cst = arith.constant dense<0.000000e+00> : vector<32x32xf32>
    %3 = tpu.matmul %1, %2, %cst {dimension_numbers = #tpu.dot_dimension_numbers<[1], [0], [0], [1], [0, 0, 1, 1], [], []>} : vector<32x128xf32>, vector<128x32xf32>, vector<32x32xf32> -> vector<32x32xf32>
    %c0_3 = arith.constant 0 : index
    %c0_4 = arith.constant 0 : index
    %4 = vector.load %arg3[%c0_3, %c0_4] : memref<1x32xf32, #tpu.memory_space<vmem>>, vector<1x32xf32>
    %5 = vector.broadcast %4 : vector<1x32xf32> to vector<32x32xf32>
    %6 = arith.addf %3, %5 : vector<32x32xf32>
    %cst_5 = arith.constant dense<0.000000e+00> : vector<32xf32>
    %7 = vector.multi_reduction <add>, %6, %cst_5 [0] : vector<32x32xf32> to vector<32xf32>
    %8 = vector.shape_cast %7 : vector<32xf32> to vector<1x32xf32>
    %cst_6 = arith.constant 3.200000e+01 : f32
    %9 = vector.broadcast %cst_6 : f32 to vector<1x32xf32>
    %10 = arith.divf %8, %9 : vector<1x32xf32>
    %11 = vector.broadcast %10 : vector<1x32xf32> to vector<32x32xf32>
    %12 = arith.subf %6, %11 : vector<32x32xf32>
    %13 = arith.mulf %12, %12 : vector<32x32xf32>
    %cst_7 = arith.constant dense<0.000000e+00> : vector<32xf32>
    %14 = vector.multi_reduction <add>, %13, %cst_7 [0] : vector<32x32xf32> to vector<32xf32>
    %15 = vector.shape_cast %14 : vector<32xf32> to vector<1x32xf32>
    %cst_8 = arith.constant 3.200000e+01 : f32
    %16 = vector.broadcast %cst_8 : f32 to vector<1x32xf32>
    %17 = arith.divf %15, %16 : vector<1x32xf32>
    %18 = vector.broadcast %10 : vector<1x32xf32> to vector<32x32xf32>
    %19 = arith.subf %6, %18 : vector<32x32xf32>
    %cst_9 = arith.constant 9.99999974E-6 : f32
    %20 = vector.broadcast %cst_9 : f32 to vector<1x32xf32>
    %21 = arith.addf %17, %20 : vector<1x32xf32>
    %22 = math.rsqrt %21 : vector<1x32xf32>
    %23 = vector.broadcast %22 : vector<1x32xf32> to vector<32x32xf32>
    %24 = arith.mulf %19, %23 : vector<32x32xf32>
    %c0_10 = arith.constant 0 : index
    %c0_11 = arith.constant 0 : index
    %25 = vector.load %arg4[%c0_10, %c0_11] : memref<1x32xf32, #tpu.memory_space<vmem>>, vector<1x32xf32>
    %26 = vector.broadcast %25 : vector<1x32xf32> to vector<32x32xf32>
    %27 = arith.mulf %24, %26 : vector<32x32xf32>
    %c0_12 = arith.constant 0 : index
    %c0_13 = arith.constant 0 : index
    %28 = vector.load %arg5[%c0_12, %c0_13] : memref<1x32xf32, #tpu.memory_space<vmem>>, vector<1x32xf32>
    %29 = vector.broadcast %28 : vector<1x32xf32> to vector<32x32xf32>
    %30 = arith.addf %27, %29 : vector<32x32xf32>
    %c0_14 = arith.constant 0 : index
    %c0_15 = arith.constant 0 : index
    %31 = vector.load %arg6[%c0_14, %c0_15] : memref<32x32xf32, #tpu.memory_space<vmem>>, vector<32x32xf32>
    tpu.vector_store %arg6[%c0_14, %c0_15], %30 {strides = array<i32>} : memref<32x32xf32, #tpu.memory_space<vmem>>, vector<32x32xf32>,
    return
  }
  func.func @transform_0(%arg0: i32) -> (i32, i32) {
    %c0_i32 = arith.constant 0 : i32
    %c0_i32_0 = arith.constant 0 : i32
    %c0_i32_1 = arith.constant 0 : i32
    return %c0_i32, %c0_i32_0 : i32, i32
  }
  func.func @transform_1(%arg0: i32) -> (i32, i32) {
    %c0_i32 = arith.constant 0 : i32
    %c0_i32_0 = arith.constant 0 : i32
    return %c0_i32, %arg0 : i32, i32
  }
  func.func @transform_2(%arg0: i32) -> (i32, i32) {
    %c0_i32 = arith.constant 0 : i32
    %c0_i32_0 = arith.constant 0 : i32
    return %c0_i32, %arg0 : i32, i32
  }
  func.func @transform_3(%arg0: i32) -> (i32, i32) {
    %c0_i32 = arith.constant 0 : i32
    %c0_i32_0 = arith.constant 0 : i32
    return %c0_i32, %arg0 : i32, i32
  }
  func.func @transform_4(%arg0: i32) -> (i32, i32) {
    %c0_i32 = arith.constant 0 : i32
    %c0_i32_0 = arith.constant 0 : i32
    return %c0_i32, %arg0 : i32, i32
  }
  func.func @transform_5(%arg0: i32) -> (i32, i32) {
    %c0_i32 = arith.constant 0 : i32
    %c0_i32_0 = arith.constant 0 : i32
    return %c0_i32, %arg0 : i32, i32
  }
}

</mosaic_0001>

<llo_original>
// kernel: block_forward.16
$region0: #{block_forward.16}
  #allocation0 [shape = 'u32[]', space=smem, size = 0x4, offset = 0x4, fixed_abs, tag = 'smem constant byte address 0x4 - core index']
  #allocation1 [shape = 'u32[72,128]{1,0:T(1,128)}', space=vmem, size = 0x9000, scoped, tag = 'internal scratch']
  %s0 = inlined_call_operand.hbm [shape: f32[32,32], index: 0, kind: input, shape index: {}]
  %s1 = inlined_call_operand.hbm [shape: f32[32,32], index: 1, kind: input, shape index: {}]
  %s2 = inlined_call_operand.hbm [shape: f32[1,32], index: 2, kind: input, shape index: {}]
  %s3 = inlined_call_operand.hbm [shape: f32[1,32], index: 3, kind: input, shape index: {}]
  %s4 = inlined_call_operand.hbm [shape: f32[1,32], index: 4, kind: input, shape index: {}]
  %s5 = inlined_call_operand.vmem [shape: f32[32,32], index: 5, kind: output, shape index: {}]
  %s6 = sld [smem:[#allocation0]]
  $region50: #{block_forward.16} parent=0
    _
  %s8 = ssub.s32 1, %s6
  %s9 = scalar_select 0, %s8, %s6
  $region1: #{block_forward.16} parent=0
    #allocation2 [shape = 'u8[16384]{0}', space=vmem, size = 0x4000, scoped, tag = 'input window, operand 0, single buffered']
    #allocation3 [shape = 's32[1]{0}', space=sflag, size = 0x4, scoped, tag = 'scoped memory for block_forward.16']
    #allocation4 [shape = 'u8[16384]{0}', space=vmem, size = 0x4000, scoped, tag = 'input window, operand 1, single buffered']
    #allocation5 [shape = 's32[1]{0}', space=sflag, size = 0x4, scoped, tag = 'scoped memory for block_forward.16']
    #allocation6 [shape = 'u8[512]{0}', space=vmem, size = 0x400, scoped, tag = 'input window, operand 2, single buffered']
    #allocation7 [shape = 'u8[512]{0}', space=vmem, size = 0x400, scoped, tag = 'input window, operand 3, single buffered']
    #allocation8 [shape = 's32[1]{0}', space=sflag, size = 0x4, scoped, tag = 'scoped memory for block_forward.16']
    #allocation9 [shape = 'u8[512]{0}', space=vmem, size = 0x400, scoped, tag = 'input window, operand 4, single buffered']
    %10 = vsyncpa [#allocation3], 0
    %11 = vsyncpa [#allocation5], 0
    %12 = vsyncpa [#allocation8], 0
    // Predicated region
    $region2: #{block_forward.16} parent=1 // pred_check
      _
    $region3: #{block_forward.16} parent=1 // pred_check_branch
      %14 = sbr.rel (0) target = $region5
    $region4: #{block_forward.16} parent=1 // pred_region
      %16 = vsyncadd [#allocation3], 0
      %s17 = sshll.u32 %s0, 4
      %s18 = int_to_ptr.hbm [resolvable:$true] %s17
      %s19 = sshll.u32 [#allocation2], 4
      %s20 = int_to_ptr.vmem [resolvable:$true] %s19
      %25 = dma.hbm_to_vmem [thread:$0]  %s18, 512, %s20, [#allocation3], 128, 128, 8
    $region5: #{block_forward.16} parent=1 // pred_fallthru
      _
    // Predicated region
    $region6: #{block_forward.16} parent=1 // pred_check
      _
    $region7: #{block_forward.16} parent=1 // pred_check_branch
      %27 = sbr.rel (0) target = $region9
    $region8: #{block_forward.16} parent=1 // pred_region
      %29 = vsyncadd [#allocation5], 0
      %s30 = sshll.u32 %s1, 4
      %s31 = int_to_ptr.hbm [resolvable:$true] %s30
      %s32 = sshll.u32 [#allocation4], 4
      %s33 = int_to_ptr.vmem [resolvable:$true] %s32
      %38 = dma.hbm_to_vmem [thread:$0]  %s31, 512, %s33, [#allocation5], 128, 128, 8
    $region9: #{block_forward.16} parent=1 // pred_fallthru
      _
    // Predicated region
    $region10: #{block_forward.16} parent=1 // pred_check
      _
    $region11: #{block_forward.16} parent=1 // pred_check_branch
      %40 = sbr.rel (0) target = $region13
    $region12: #{block_forward.16} parent=1 // pred_region
      %42 = vsyncadd [#allocation5], 0
      %s44 = sshll.u32 %s2, 4
      %s45 = int_to_ptr.hbm [resolvable:$true] %s44
      %s46 = sshll.u32 [#allocation6], 4
      %s47 = int_to_ptr.vmem [resolvable:$true] %s46
      %49 = dma.hbm_to_vmem [thread:$0]  %s45, 16, %s47, [#allocation5]
    $region13: #{block_forward.16} parent=1 // pred_fallthru
      _
    // Predicated region
    $region14: #{block_forward.16} parent=1 // pred_check
      _
    $region15: #{block_forward.16} parent=1 // pred_check_branch
      %51 = sbr.rel (0) target = $region17
    $region16: #{block_forward.16} parent=1 // pred_region
      %53 = vsyncadd [#allocation8], 0
      %s55 = sshll.u32 %s3, 4
      %s56 = int_to_ptr.hbm [resolvable:$true] %s55
      %s57 = sshll.u32 [#allocation7], 4
      %s58 = int_to_ptr.vmem [resolvable:$true] %s57
      %60 = dma.hbm_to_vmem [thread:$0]  %s56, 16, %s58, [#allocation8]
    $region17: #{block_forward.16} parent=1 // pred_fallthru
      _
    // Predicated region
    $region18: #{block_forward.16} parent=1 // pred_check
      _
    $region19: #{block_forward.16} parent=1 // pred_check_branch
      %62 = sbr.rel (0) target = $region21
    $region20: #{block_forward.16} parent=1 // pred_region
      %64 = vsyncadd [#allocation8], 0
      %s66 = sshll.u32 %s4, 4
      %s67 = int_to_ptr.hbm [resolvable:$true] %s66
      %s68 = sshll.u32 [#allocation9], 4
      %s69 = int_to_ptr.vmem [resolvable:$true] %s68
      %71 = dma.hbm_to_vmem [thread:$0]  %s67, 16, %s69, [#allocation8]
    $region21: #{block_forward.16} parent=1 // pred_fallthru
      _
    // Predicated region
    $region22: #{block_forward.16} parent=1 // pred_check
      _
    $region23: #{block_forward.16} parent=1 // pred_check_branch
      %73 = sbr.rel (0) target = $region25
    $region24: #{block_forward.16} parent=1 // pred_region
      %75 = dma.done [#allocation3], 512
    $region25: #{block_forward.16} parent=1 // pred_fallthru
      _
    // Predicated region
    $region26: #{block_forward.16} parent=1 // pred_check
      _
    $region27: #{block_forward.16} parent=1 // pred_check_branch
      %77 = sbr.rel (0) target = $region29
    $region28: #{block_forward.16} parent=1 // pred_region
      %79 = dma.done [#allocation5], 512
    $region29: #{block_forward.16} parent=1 // pred_fallthru
      _
    // Predicated region
    $region30: #{block_forward.16} parent=1 // pred_check
      _
    $region31: #{block_forward.16} parent=1 // pred_check_branch
      %81 = sbr.rel (0) target = $region33
    $region32: #{block_forward.16} parent=1 // pred_region
      %83 = dma.done [#allocation5], 16
    $region33: #{block_forward.16} parent=1 // pred_fallthru
      _
    // Predicated region
    $region34: #{block_forward.16} parent=1 // pred_check
      _
    $region35: #{block_forward.16} parent=1 // pred_check_branch
      %85 = sbr.rel (0) target = $region37
    $region36: #{block_forward.16} parent=1 // pred_region
      %87 = dma.done [#allocation8], 16
    $region37: #{block_forward.16} parent=1 // pred_fallthru
      _
    // Predicated region
    $region38: #{block_forward.16} parent=1 // pred_check
      _
    $region39: #{block_forward.16} parent=1 // pred_check_branch
      %89 = sbr.rel (0) target = $region41
    $region40: #{block_forward.16} parent=1 // pred_region
      %91 = dma.done [#allocation8], 16
    $region41: #{block_forward.16} parent=1 // pred_fallthru
      _
    %v92 = vld [vmem:[#allocation2] sm:$0xff]
    %v93 = vld [vmem:[#allocation2 + $0x8] sm:$0xff]
    %v94 = vld [vmem:[#allocation2 + $0x10] sm:$0xff]
    %v95 = vld [vmem:[#allocation2 + $0x18] sm:$0xff]
    %v96 = vld [vmem:[#allocation4] sm:$0xff]
    %v97 = vld [vmem:[#allocation4 + $0x8] sm:$0xff]
    %v98 = vld [vmem:[#allocation4 + $0x10] sm:$0xff]
    %v99 = vld [vmem:[#allocation4 + $0x18] sm:$0xff]
    %v100 = vld [vmem:[#allocation6] sm:$0x1]
    %v102 = vperm.slane %v100, 0
    %vm104 = vcmask 261120
    %v106 = vsel %vm104, %v92, 0
    %v109 = vsel %vm104, %v93, 0
    %v112 = vsel %vm104, %v94, 0
    %v115 = vsel %vm104, %v95, 0
    %117 = vmatpush.msra.mxu0 0.0
    %118 = vmatpush.msra.mxu0 0.0
    %119 = vmatpush.msra.mxu0 0.0
    %120 = vmatpush.msra.mxu0 0.0
    %121 = vmatpush.msra.mxu0 0.0
    %122 = vmatpush.msra.mxu0 0.0
    %123 = vmatpush.msra.mxu0 0.0
    %124 = vmatpush.msra.mxu0 0.0
    %125 = vmatpush.msra.mxu0 0.0
    %126 = vmatpush.msra.mxu0 0.0
    %127 = vmatpush.msra.mxu0 0.0
    %128 = vmatpush.msra.mxu0 0.0
    %129 = vmatpush.msra.mxu0 %v99
    %130 = vmatpush.msra.mxu0 %v98
    %131 = vmatpush.msra.mxu0 %v97
    %132 = vmatpush.msra.mxu0 %v96
    %133 = vmatmul.f32.gmra.mxu0 %v106
    %v134 = vpop.f32.mrf.mxu0
    %v135 = vadd.f32 %v102, %v134
    %136 = vmatmul.f32.gmra.mxu0 %v109
    %v137 = vpop.f32.mrf.mxu0
    %v138 = vadd.f32 %v102, %v137
    %139 = vmatmul.f32.gmra.mxu0 %v112
    %v140 = vpop.f32.mrf.mxu0
    %v141 = vadd.f32 %v102, %v140
    %142 = vmatmul.f32.gmra.mxu0 %v115
    %v143 = vpop.f32.mrf.mxu0
    %v144 = vadd.f32 %v102, %v143
    %145 = vdwg.mxu0
    %v146 = vsel %vm104, %v135, 0.0
    %v147 = vsel %vm104, %v138, 0.0
    %v148 = vadd.f32 %v146, %v147
    %v149 = vsel %vm104, %v141, 0.0
    %v150 = vadd.f32 %v148, %v149
    %v151 = vsel %vm104, %v144, 0.0
    %v152 = vadd.f32 %v150, %v151
    %v153 = vrot.slane %v152, 4
    %v154 = vadd.f32 %v152, %v153
    %v155 = vrot.slane %v154, 2
    %v156 = vadd.f32 %v154, %v155
    %v157 = vrot.slane %v156, 1
    %v158 = vadd.f32 %v156, %v157
    %v159 = vrcp.pop 32.0
    %v160 = vmul.f32 32.0, %v159
    %v161 = vsub.f32 1.0, %v160
    %v162 = vmul.f32 %v159, %v161
    %v163 = vadd.f32 %v159, %v162
    %vm164 = vweird.f32 %v159
    %v165 = vsel %vm164, %v159, %v163
    %v166 = vmul.f32 %v158, %v165
    %v167 = vsub.f32 %v135, %v166
    %v168 = vsub.f32 %v138, %v166
    %v169 = vsub.f32 %v141, %v166
    %v170 = vsub.f32 %v144, %v166
    %v171 = vmul.f32 %v167, %v167
    %v172 = vmul.f32 %v168, %v168
    %v173 = vmul.f32 %v169, %v169
    %v174 = vmul.f32 %v170, %v170
    %v175 = vsel %vm104, %v171, 0.0
    %v176 = vsel %vm104, %v172, 0.0
    %v177 = vadd.f32 %v175, %v176
    %v178 = vsel %vm104, %v173, 0.0
    %v179 = vadd.f32 %v177, %v178
    %v180 = vsel %vm104, %v174, 0.0
    %v181 = vadd.f32 %v179, %v180
    %v182 = vrot.slane %v181, 4
    %v183 = vadd.f32 %v181, %v182
    %v184 = vrot.slane %v183, 2
    %v185 = vadd.f32 %v183, %v184
    %v186 = vrot.slane %v185, 1
    %v187 = vadd.f32 %v185, %v186
    %v188 = vmul.f32 %v187, %v165
    %v189 = vadd.f32 %v188, 1e-05
    %v190 = vrsqrt.pop %v189
    %v191 = vmul.f32 %v190, %v189
    %v192 = vmul.f32 %v191, %v190
    %v193 = vmul.f32 0.5, %v192
    %v194 = vsub.f32 1.5, %v193
    %v195 = vmul.f32 %v190, %v194
    %vm196 = vweird.f32 %v189
    %vm197 = vweird.f32 %v190
    %vm198 = vmor %vm196, %vm197
    %v199 = vsel %vm198, %v190, %v195
    %v200 = vmul.f32 %v167, %v199
    %v201 = vmul.f32 %v168, %v199
    %v202 = vmul.f32 %v169, %v199
    %v203 = vmul.f32 %v170, %v199
    %v204 = vld [vmem:[#allocation7] sm:$0x1]
    %v206 = vperm.slane %v204, 0
    %v208 = vmul.f32 %v200, %v206
    %v209 = vmul.f32 %v201, %v206
    %v210 = vmul.f32 %v202, %v206
    %v211 = vmul.f32 %v203, %v206
    %v212 = vld [vmem:[#allocation9] sm:$0x1]
    %v214 = vperm.slane %v212, 0
    %v216 = vadd.f32 %v208, %v214
    %v217 = vadd.f32 %v209, %v214
    %v218 = vadd.f32 %v210, %v214
    %v219 = vadd.f32 %v211, %v214
    %220 = vst.msk [vmem:[%s5] sm:$0xff] %vm104, %v216
    %221 = vst.msk [vmem:[%s5 + $0x8] sm:$0xff] %vm104, %v217
    %222 = vst.msk [vmem:[%s5 + $0x10] sm:$0xff] %vm104, %v218
    %223 = vst.msk [vmem:[%s5 + $0x18] sm:$0xff] %vm104, %v219
    // Predicated region
    $region42: #{block_forward.16} parent=1 // pred_check
      _
    $region43: #{block_forward.16} parent=1 // pred_check_branch
      %225 = sbr.rel (0) target = $region45
    $region44: #{block_forward.16} parent=1 // pred_region
      _
    $region45: #{block_forward.16} parent=1 // pred_fallthru
      _
    // Predicated region
    $region46: #{block_forward.16} parent=1 // pred_check
      _
    $region47: #{block_forward.16} parent=1 // pred_check_branch
      %227 = sbr.rel (0) target = $region49
    $region48: #{block_forward.16} parent=1 // pred_region
      _
    $region49: #{block_forward.16} parent=1 // pred_fallthru
      _
    %228 = vsyncpa [#allocation3], 1
    %229 = vsyncpa [#allocation5], 1
    %230 = vsyncpa [#allocation8], 1

// kernel: block_forward.17
$region0: #{block_forward.17}
  #allocation0 [shape = 'u32[]', space=smem, size = 0x4, offset = 0x4, fixed_abs, tag = 'smem constant byte address 0x4 - core index']
  #allocation1 [shape = 'u32[72,128]{1,0:T(1,128)}', space=vmem, size = 0x9000, scoped, tag = 'internal scratch']
  %s0 = inlined_call_operand.vmem [shape: f32[2,16,32], index: 0, kind: input, shape index: {}]
  %s1 = inlined_call_operand.vmem [shape: bf16[2,16,32], index: 1, kind: output, shape index: {}]
  %s2 = sld [smem:[#allocation0]]
  $region14: #{block_forward.17} parent=0
    _
  %s4 = ssub.s32 1, %s2
  %s5 = scalar_select 0, %s4, %s2
  // Predicated region
  $region2: #{block_forward.17} parent=0 // pred_check
    _
  $region3: #{block_forward.17} parent=0 // pred_check_branch
    %7 = sbr.rel (0) target = $region5
  $region4: #{block_forward.17} parent=0 // pred_region
    _
  $region5: #{block_forward.17} parent=0 // pred_fallthru
    _
  %v8 = vld [vmem:[%s0] sm:$0xff]
  %v9 = vld [vmem:[%s0 + $0x8] sm:$0xff]
  %v10 = vmul.f32 %v8, 0.5
  %v11 = vmul.f32 %v9, 0.5
  %v12 = vadd.f32 %v10, 0.0
  %v13 = vadd.f32 %v11, 0.0
  %vm14 = vcmp.ge.f32.partialorder %v12, 1.0
  %vm15 = vcmp.ge.f32.partialorder %v13, 1.0
  %v16 = vsel %vm14, 1, 0
  %v17 = vsel %vm15, 1, 0
  %v18 = vcvt.s32.f32 %v16
  %v19 = vcvt.s32.f32 %v17
  %v20 = vpack.c.bf16 %v18, %v18
  %v21 = vpack.c.bf16 %v19, %v19
  %vm22 = vcmask 257024
  %23 = vst.msk [vmem:[%s1] sm:$0xf] %vm22, %v20
  %24 = vst.msk [vmem:[%s1 + $0x4] sm:$0xf] %vm22, %v21
  %v25 = vsel %vm14, 0.0, %v12
  %v26 = vsel %vm15, 0.0, %v13
  %s27 = scalar_lea.vmem %s0, 16
  %v28 = vld [vmem:[%s27] sm:$0xff]
  %v29 = vld [vmem:[%s27 + $0x8] sm:$0xff]
  %v30 = vsub.f32 %v28, %v25
  %v31 = vsub.f32 %v29, %v26
  %v32 = vmul.f32 %v30, 0.5
  %v33 = vmul.f32 %v31, 0.5
  %v34 = vadd.f32 %v25, %v32
  %v35 = vadd.f32 %v26, %v33
  %vm36 = vcmp.ge.f32.partialorder %v34, 1.0
  %vm37 = vcmp.ge.f32.partialorder %v35, 1.0
  %v38 = vsel %vm36, 1, 0
  %v39 = vsel %vm37, 1, 0
  %v40 = vcvt.s32.f32 %v38
  %v41 = vcvt.s32.f32 %v39
  %v42 = vpack.c.bf16 %v40, %v40
  %v43 = vpack.c.bf16 %v41, %v41
  %s44 = scalar_lea.vmem %s1, 8
  %45 = vst.msk [vmem:[%s44] sm:$0xf] %vm22, %v42
  %46 = vst.msk [vmem:[%s44 + $0x4] sm:$0xf] %vm22, %v43
  // Predicated region
  $region6: #{block_forward.17} parent=0 // pred_check
    _
  $region7: #{block_forward.17} parent=0 // pred_check_branch
    %48 = sbr.rel (0) target = $region9
  $region8: #{block_forward.17} parent=0 // pred_region
    _
  $region9: #{block_forward.17} parent=0 // pred_fallthru
    _
  // Predicated region
  $region10: #{block_forward.17} parent=0 // pred_check
    _
  $region11: #{block_forward.17} parent=0 // pred_check_branch
    %50 = sbr.rel (0) target = $region13
  $region12: #{block_forward.17} parent=0 // pred_region
    _
  $region13: #{block_forward.17} parent=0 // pred_fallthru
    _

// kernel: block_forward.20
$region0: #{block_forward.20}
  #allocation0 [shape = 'u32[]', space=smem, size = 0x4, offset = 0x4, fixed_abs, tag = 'smem constant byte address 0x4 - core index']
  #allocation1 [shape = 'u32[72,128]{1,0:T(1,128)}', space=vmem, size = 0x9000, scoped, tag = 'internal scratch']
  %s0 = inlined_call_operand.vmem [shape: bf16[2,2,8,32], index: 0, kind: input, shape index: {}]
  %s1 = inlined_call_operand.vmem [shape: bf16[2,2,8,32], index: 1, kind: input, shape index: {}]
  %s2 = inlined_call_operand.vmem [shape: bf16[2,2,8,32], index: 2, kind: input, shape index: {}]
  %s3 = inlined_call_operand.vmem [shape: f32[2,2,8,32], index: 3, kind: output, shape index: {}]
  %s4 = sld [smem:[#allocation0]]
  $region45: #{block_forward.20} parent=0
    _
  %s6 = ssub.s32 1, %s4
  %s7 = scalar_select 0, %s6, %s4
  loop: start=0, step=1, limit=6
  $region2: #{block_forward.20} parent=0 // loop_pre_header
    _
  $region3: #{block_forward.20} parent=0 // loop_header
    %s9 = sphi 0, %s13
    %p10 = scmp.ge.s32.totalorder %s9, 6
    %s16 = sphi 0, %s28
    %s17 = sphi 0, %s24
    %s18 = sphi 0, %s16
    %s19 = sphi 0, %s17
    %s20 = sphi 0, %s18
    %s21 = sphi 0, %s19
    %s33 = sphi 0, %s35
    %s36 = sphi 0, %s33
    %s37 = sphi 0, %s36
    %s53 = sphi 0, %s37
    %s61 = sphi 0, %s63
    %s64 = sphi 0, %s61
    %s65 = sphi 0, %s64
    %s81 = sphi 0, %s65
    %s89 = sphi 0, %s91
    %s92 = sphi 0, %s89
    %s93 = sphi 0, %s92
    %s109 = sphi 0, %s93
    %s117 = sphi 0, %s119
    %s120 = sphi 0, %s117
    %s121 = sphi 0, %s120
    %s137 = sphi 0, %s121
  $region4: #{block_forward.20} parent=0 // loop_header_branch
    %12 = sbr.rel (%p10) target = $region8
  $region5: #{block_forward.20} parent=0 // loop_body
    %s14 = ssub.s32 %s9, 1
    %s15 = ssub.s32 %s9, 2
    %s22 = sadd.s32 1, %s17
    %p23 = scmp.ge.s32.totalorder %s22, 2
    %s24 = scalar_select %p23, 0, %s22
    %s25 = sadd.s32 1, %s16
    %s26 = scalar_select %p23, %s25, %s16
    %p27 = scmp.ge.s32.totalorder %s26, 2
    %s28 = scalar_select %p27, 0, %s26
    %s29 = ssub.s32 %s16, %s28
    %s30 = ssub.s32 %s17, %s24
    %s31 = sor.u32 %s29, %s30
    %p32 = scmp.eq.s32.totalorder %s31, 0
    %s34 = sadd.s32 %s33, 1
    %s35 = scalar_select %p32, %s33, %s34
    %p38 = pneg %p32
    %p39 = scmp.eq.s32.totalorder %s9, 3
    %p40 = por %p38, %p39
    %p41 = scmp.ne.s32.totalorder %s33, %s36
    %p42 = scmp.eq.s32.totalorder %s9, 0
    %p43 = por %p41, %p42
    %p44 = scmp.ne.s32.totalorder %s33, %s36
    %p45 = scmp.eq.s32.totalorder %s14, 3
    %p46 = por %p44, %p45
    %p47 = scmp.ne.s32.totalorder %s36, %s37
    %p48 = scmp.eq.s32.totalorder %s14, 0
    %p49 = por %p47, %p48
    %p50 = scmp.ne.s32.totalorder %s36, %s37
    %p51 = scmp.eq.s32.totalorder %s15, 3
    %p52 = por %p50, %p51
    %p54 = scmp.ne.s32.totalorder %s37, %s53
    %p55 = scmp.eq.s32.totalorder %s15, 0
    %p56 = por %p54, %p55
    %s57 = ssub.s32 %s16, %s28
    %s58 = ssub.s32 %s17, %s24
    %s59 = sor.u32 %s57, %s58
    %p60 = scmp.eq.s32.totalorder %s59, 0
    %s62 = sadd.s32 %s61, 1
    %s63 = scalar_select %p60, %s61, %s62
    %p66 = pneg %p60
    %p67 = scmp.eq.s32.totalorder %s9, 3
    %p68 = por %p66, %p67
    %p69 = scmp.ne.s32.totalorder %s61, %s64
    %p70 = scmp.eq.s32.totalorder %s9, 0
    %p71 = por %p69, %p70
    %p72 = scmp.ne.s32.totalorder %s61, %s64
    %p73 = scmp.eq.s32.totalorder %s14, 3
    %p74 = por %p72, %p73
    %p75 = scmp.ne.s32.totalorder %s64, %s65
    %p76 = scmp.eq.s32.totalorder %s14, 0
    %p77 = por %p75, %p76
    %p78 = scmp.ne.s32.totalorder %s64, %s65
    %p79 = scmp.eq.s32.totalorder %s15, 3
    %p80 = por %p78, %p79
    %p82 = scmp.ne.s32.totalorder %s65, %s81
    %p83 = scmp.eq.s32.totalorder %s15, 0
    %p84 = por %p82, %p83
    %s85 = ssub.s32 %s16, %s28
    %s86 = ssub.s32 %s17, %s24
    %s87 = sor.u32 %s85, %s86
    %p88 = scmp.eq.s32.totalorder %s87, 0
    %s90 = sadd.s32 %s89, 1
    %s91 = scalar_select %p88, %s89, %s90
    %p94 = pneg %p88
    %p95 = scmp.eq.s32.totalorder %s9, 3
    %p96 = por %p94, %p95
    %p97 = scmp.ne.s32.totalorder %s89, %s92
    %p98 = scmp.eq.s32.totalorder %s9, 0
    %p99 = por %p97, %p98
    %p100 = scmp.ne.s32.totalorder %s89, %s92
    %p101 = scmp.eq.s32.totalorder %s14, 3
    %p102 = por %p100, %p101
    %p103 = scmp.ne.s32.totalorder %s92, %s93
    %p104 = scmp.eq.s32.totalorder %s14, 0
    %p105 = por %p103, %p104
    %p106 = scmp.ne.s32.totalorder %s92, %s93
    %p107 = scmp.eq.s32.totalorder %s15, 3
    %p108 = por %p106, %p107
    %p110 = scmp.ne.s32.totalorder %s93, %s109
    %p111 = scmp.eq.s32.totalorder %s15, 0
    %p112 = por %p110, %p111
    %s113 = ssub.s32 %s16, %s28
    %s114 = ssub.s32 %s17, %s24
    %s115 = sor.u32 %s113, %s114
    %p116 = scmp.eq.s32.totalorder %s115, 0
    %s118 = sadd.s32 %s117, 1
    %s119 = scalar_select %p116, %s117, %s118
    %p122 = pneg %p116
    %p123 = scmp.eq.s32.totalorder %s9, 3
    %p124 = por %p122, %p123
    %p125 = scmp.ne.s32.totalorder %s117, %s120
    %p126 = scmp.eq.s32.totalorder %s9, 0
    %p127 = por %p125, %p126
    %p128 = scmp.ne.s32.totalorder %s117, %s120
    %p129 = scmp.eq.s32.totalorder %s14, 3
    %p130 = por %p128, %p129
    %p131 = scmp.ne.s32.totalorder %s120, %s121
    %p132 = scmp.eq.s32.totalorder %s14, 0
    %p133 = por %p131, %p132
    %p134 = scmp.ne.s32.totalorder %s120, %s121
    %p135 = scmp.eq.s32.totalorder %s15, 3
    %p136 = por %p134, %p135
    %p138 = scmp.ne.s32.totalorder %s121, %s137
    %p139 = scmp.eq.s32.totalorder %s15, 0
    %p140 = por %p138, %p139
    %p141 = scmp.le.s32.totalorder 1, %s9
    %p142 = scmp.lt.s32.totalorder %s9, 5
    %p143 = pnand %p141, %p142
    %p144 = pneg %p143
    // Predicated region
    $region9: #{block_forward.20} parent=5 // pred_check
      _
    $region10: #{block_forward.20} parent=5 // pred_check_branch
      %146 = sbr.rel (%p143) target = $region12
    $region11: #{block_forward.20} parent=5 // pred_region
      %s147 = ssub.s32 %s9, 1
    $region12: #{block_forward.20} parent=5 // pred_fallthru
      _
    %p148 = scmp.lt.s32.totalorder %s9, 4
    // Predicated region
    $region13: #{block_forward.20} parent=5 // pred_check
      %p149 = pneg %p148
    $region14: #{block_forward.20} parent=5 // pred_check_branch
      %151 = sbr.rel (%p149) target = $region16
    $region15: #{block_forward.20} parent=5 // pred_region
      // Predicated region
      $region17: #{block_forward.20} parent=15 // pred_check
        %p152 = pneg %p43
      $region18: #{block_forward.20} parent=15 // pred_check_branch
        %154 = sbr.rel (%p152) target = $region20
      $region19: #{block_forward.20} parent=15 // pred_region
        %p155 = scmp.lt.s32.totalorder %s16, 1
        %s156 = scalar_select %p155, %s16, 1
        %p157 = scmp.lt.s32.totalorder %s17, 1
        %s158 = scalar_select %p157, %s17, 1
        %s159 = smul.addr %s156, 2
        %s160 = sadd.s32 %s158, %s159
        %s161 = smul.addr %s160, 4
        %s162 = scalar_lea.vmem %s0, %s161
      $region20: #{block_forward.20} parent=15 // pred_fallthru
        _
      // Predicated region
      $region21: #{block_forward.20} parent=15 // pred_check
        %p163 = pneg %p71
      $region22: #{block_forward.20} parent=15 // pred_check_branch
        %165 = sbr.rel (%p163) target = $region24
      $region23: #{block_forward.20} parent=15 // pred_region
        %p166 = scmp.lt.s32.totalorder %s16, 1
        %s167 = scalar_select %p166, %s16, 1
        %p168 = scmp.lt.s32.totalorder %s17, 1
        %s169 = scalar_select %p168, %s17, 1
        %s170 = smul.addr %s167, 2
        %s171 = sadd.s32 %s169, %s170
        %s172 = smul.addr %s171, 4
        %s173 = scalar_lea.vmem %s1, %s172
      $region24: #{block_forward.20} parent=15 // pred_fallthru
        _
      // Predicated region
      $region25: #{block_forward.20} parent=15 // pred_check
        %p174 = pneg %p99
      $region26: #{block_forward.20} parent=15 // pred_check_branch
        %176 = sbr.rel (%p174) target = $region28
      $region27: #{block_forward.20} parent=15 // pred_region
        %p177 = scmp.lt.s32.totalorder %s16, 1
        %s178 = scalar_select %p177, %s16, 1
        %p179 = scmp.lt.s32.totalorder %s17, 1
        %s180 = scalar_select %p179, %s17, 1
        %s181 = smul.addr %s178, 2
        %s182 = sadd.s32 %s180, %s181
        %s183 = smul.addr %s182, 4
        %s184 = scalar_lea.vmem %s2, %s183
      $region28: #{block_forward.20} parent=15 // pred_fallthru
        _
    $region16: #{block_forward.20} parent=5 // pred_fallthru
      _
    %p185 = scmp.le.s32.totalorder 1, %s9
    %p186 = scmp.lt.s32.totalorder %s9, 5
    %p187 = pnand %p185, %p186
    %p188 = pneg %p187
    // Predicated region
    $region29: #{block_forward.20} parent=5 // pred_check
      _
    $region30: #{block_forward.20} parent=5 // pred_check_branch
      %190 = sbr.rel (%p187) target = $region32
    $region31: #{block_forward.20} parent=5 // pred_region
      %s191 = ssub.s32 %s9, 1
      %p192 = scmp.lt.s32.totalorder %s18, 1
      %s193 = scalar_select %p192, %s18, 1
      %p194 = scmp.lt.s32.totalorder %s19, 1
      %s195 = scalar_select %p194, %s19, 1
      %s196 = smul.addr %s193, 2
      %s197 = sadd.s32 %s195, %s196
      %s198 = smul.addr %s197, 4
      %s199 = scalar_lea.vmem %s0, %s198
      %p200 = pneg %p49
      %p201 = pneg %p46
      %p202 = scmp.lt.s32.totalorder %s18, 1
      %s203 = scalar_select %p202, %s18, 1
      %p204 = scmp.lt.s32.totalorder %s19, 1
      %s205 = scalar_select %p204, %s19, 1
      %s206 = smul.addr %s203, 2
      %s207 = sadd.s32 %s205, %s206
      %s208 = smul.addr %s207, 4
      %s209 = scalar_lea.vmem %s1, %s208
      %p210 = pneg %p77
      %p211 = pneg %p74
      %p212 = scmp.lt.s32.totalorder %s18, 1
      %s213 = scalar_select %p212, %s18, 1
      %p214 = scmp.lt.s32.totalorder %s19, 1
      %s215 = scalar_select %p214, %s19, 1
      %s216 = smul.addr %s213, 2
      %s217 = sadd.s32 %s215, %s216
      %s218 = smul.addr %s217, 4
      %s219 = scalar_lea.vmem %s2, %s218
      %p220 = pneg %p105
      %p221 = pneg %p102
      %p222 = pneg %p133
      %p223 = pneg %p130
      %p224 = scmp.lt.s32.totalorder %s18, 1
      %s225 = scalar_select %p224, %s18, 1
      %p226 = scmp.lt.s32.totalorder %s19, 1
      %s227 = scalar_select %p226, %s19, 1
      %s228 = smul.addr %s225, 2
      %s229 = sadd.s32 %s227, %s228
      %s230 = smul.addr %s229, 8
      %s231 = scalar_lea.vmem %s3, %s230
      %p232 = scmp.lt.s32.totalorder %s18, 1
      %s233 = scalar_select %p232, %s18, 1
      %p234 = scmp.lt.s32.totalorder %s19, 1
      %s235 = scalar_select %p234, %s19, 1
      %s236 = smul.addr %s233, 2
      %s237 = sadd.s32 %s235, %s236
      %s238 = smul.addr %s237, 4
      %s239 = scalar_lea.vmem %s0, %s238
      %p240 = scmp.lt.s32.totalorder %s18, 1
      %s241 = scalar_select %p240, %s18, 1
      %p242 = scmp.lt.s32.totalorder %s19, 1
      %s243 = scalar_select %p242, %s19, 1
      %s244 = smul.addr %s241, 2
      %s245 = sadd.s32 %s243, %s244
      %s246 = smul.addr %s245, 4
      %s247 = scalar_lea.vmem %s1, %s246
      %p248 = scmp.lt.s32.totalorder %s18, 1
      %s249 = scalar_select %p248, %s18, 1
      %p250 = scmp.lt.s32.totalorder %s19, 1
      %s251 = scalar_select %p250, %s19, 1
      %s252 = smul.addr %s249, 2
      %s253 = sadd.s32 %s251, %s252
      %s254 = smul.addr %s253, 4
      %s255 = scalar_lea.vmem %s2, %s254
      %p256 = scmp.lt.s32.totalorder %s18, 1
      %s257 = scalar_select %p256, %s18, 1
      %p258 = scmp.lt.s32.totalorder %s19, 1
      %s259 = scalar_select %p258, %s19, 1
      %s260 = smul.addr %s257, 2
      %s261 = sadd.s32 %s259, %s260
      %s262 = smul.addr %s261, 8
      %s263 = scalar_lea.vmem %s3, %s262
      %v265 = vld [vmem:[%s239] sm:$0xf]
      %v266 = vld [vmem:[%s247] sm:$0xf]
      %v267 = vld [vmem:[%s255] sm:$0xf]
      %v268 = vunpack.c.l.bf16 %v267
      %vm269 = vcmask 64512
      %v271 = vsel %vm269, %v265, 0
      %v274 = vsel %vm269, %v266, 0
      %276 = vmatpush.bf16.xpose.msra.mxu0 0
      %277 = vmatpush.bf16.xpose.msra.mxu0 0
      %278 = vmatpush.bf16.xpose.msra.mxu0 0
      %279 = vmatpush.bf16.xpose.msra.mxu0 0
      %280 = vmatpush.bf16.xpose.msra.mxu0 0
      %281 = vmatpush.bf16.xpose.msra.mxu0 0
      %282 = vmatpush.bf16.xpose.msra.mxu0 0
      %283 = vmatpush.bf16.xpose.msra.mxu0 %v274
      %284 = vmatmul.bf16.gmra.mxu0 %v271
      %v285 = vpop.f32.mrf.mxu0
      %v286 = vadd.f32 0.0, %v285
      %v287 = vpop.f32.mrf.mxu0
      %288 = vdwg.mxu0
      %v289 = vmul.f32 %v286, 0.125
      %v291 = vsel %vm269, %v289, 0
      %293 = vmatpush.msra.mxu0 0.0
      %294 = vmatpush.msra.mxu0 0.0
      %295 = vmatpush.msra.mxu0 0.0
      %296 = vmatpush.msra.mxu0 0.0
      %297 = vmatpush.msra.mxu0 0.0
      %298 = vmatpush.msra.mxu0 0.0
      %299 = vmatpush.msra.mxu0 0.0
      %300 = vmatpush.msra.mxu0 0.0
      %301 = vmatpush.msra.mxu0 0.0
      %302 = vmatpush.msra.mxu0 0.0
      %303 = vmatpush.msra.mxu0 0.0
      %304 = vmatpush.msra.mxu0 0.0
      %305 = vmatpush.msra.mxu0 0.0
      %306 = vmatpush.msra.mxu0 0.0
      %307 = vmatpush.msra.mxu0 0.0
      %308 = vmatpush.msra.mxu0 %v268
      %309 = vmatmul.f32.gmra.mxu0 %v291
      %v310 = vpop.f32.mrf.mxu0
      %v311 = vadd.f32 0.0, %v310
      %312 = vdwg.mxu0
      %v314 = vunpack.c.l.b16 %v265
      %v315 = vpack.c.b16 %v314, %v314
      %316 = vrot.lane.b32.xlu0 %v315, 120
      %v317 = vpop.permute.xlu0 %316
      %v319 = vunpack.c.l.b16 %v266
      %v320 = vpack.c.b16 %v319, %v319
      %321 = vrot.lane.b32.xlu0 %v320, 120
      %v322 = vpop.permute.xlu0 %321
      %v324 = vsel %vm269, %v317, 0
      %v327 = vsel %vm269, %v322, 0
      %329 = vmatpush.bf16.xpose.msra.mxu0 0
      %330 = vmatpush.bf16.xpose.msra.mxu0 0
      %331 = vmatpush.bf16.xpose.msra.mxu0 0
      %332 = vmatpush.bf16.xpose.msra.mxu0 0
      %333 = vmatpush.bf16.xpose.msra.mxu0 0
      %334 = vmatpush.bf16.xpose.msra.mxu0 0
      %335 = vmatpush.bf16.xpose.msra.mxu0 0
      %336 = vmatpush.bf16.xpose.msra.mxu0 %v327
      %337 = vmatmul.bf16.gmra.mxu0 %v324
      %v338 = vpop.f32.mrf.mxu0
      %v339 = vadd.f32 0.0, %v338
      %v340 = vpop.f32.mrf.mxu0
      %341 = vdwg.mxu0
      %v342 = vmul.f32 %v339, 0.125
      %344 = vrot.lane.b32.xlu0 %v268, 120
      %v345 = vpop.permute.xlu0 %344
      %v348 = vsel %vm269, %v342, 0
      %350 = vmatpush.msra.mxu0 0.0
      %351 = vmatpush.msra.mxu0 0.0
      %352 = vmatpush.msra.mxu0 0.0
      %353 = vmatpush.msra.mxu0 0.0
      %354 = vmatpush.msra.mxu0 0.0
      %355 = vmatpush.msra.mxu0 0.0
      %356 = vmatpush.msra.mxu0 0.0
      %357 = vmatpush.msra.mxu0 0.0
      %358 = vmatpush.msra.mxu0 0.0
      %359 = vmatpush.msra.mxu0 0.0
      %360 = vmatpush.msra.mxu0 0.0
      %361 = vmatpush.msra.mxu0 0.0
      %362 = vmatpush.msra.mxu0 0.0
      %363 = vmatpush.msra.mxu0 0.0
      %364 = vmatpush.msra.mxu0 0.0
      %365 = vmatpush.msra.mxu0 %v345
      %366 = vmatmul.f32.gmra.mxu0 %v348
      %v367 = vpop.f32.mrf.mxu0
      %v368 = vadd.f32 0.0, %v367
      %369 = vdwg.mxu0
      %370 = vrot.lane.b32.xlu0 %v315, 112
      %v371 = vpop.permute.xlu0 %370
      %372 = vrot.lane.b32.xlu0 %v320, 112
      %v373 = vpop.permute.xlu0 %372
      %v375 = vsel %vm269, %v371, 0
      %v378 = vsel %vm269, %v373, 0
      %380 = vmatpush.bf16.xpose.msra.mxu0 0
      %381 = vmatpush.bf16.xpose.msra.mxu0 0
      %382 = vmatpush.bf16.xpose.msra.mxu0 0
      %383 = vmatpush.bf16.xpose.msra.mxu0 0
      %384 = vmatpush.bf16.xpose.msra.mxu0 0
      %385 = vmatpush.bf16.xpose.msra.mxu0 0
      %386 = vmatpush.bf16.xpose.msra.mxu0 0
      %387 = vmatpush.bf16.xpose.msra.mxu0 %v378
      %388 = vmatmul.bf16.gmra.mxu0 %v375
      %v389 = vpop.f32.mrf.mxu0
      %v390 = vadd.f32 0.0, %v389
      %v391 = vpop.f32.mrf.mxu0
      %392 = vdwg.mxu0
      %v393 = vmul.f32 %v390, 0.125
      %394 = vrot.lane.b32.xlu0 %v268, 112
      %v395 = vpop.permute.xlu0 %394
      %v398 = vsel %vm269, %v393, 0
      %400 = vmatpush.msra.mxu0 0.0
      %401 = vmatpush.msra.mxu0 0.0
      %402 = vmatpush.msra.mxu0 0.0
      %403 = vmatpush.msra.mxu0 0.0
      %404 = vmatpush.msra.mxu0 0.0
      %405 = vmatpush.msra.mxu0 0.0
      %406 = vmatpush.msra.mxu0 0.0
      %407 = vmatpush.msra.mxu0 0.0
      %408 = vmatpush.msra.mxu0 0.0
      %409 = vmatpush.msra.mxu0 0.0
      %410 = vmatpush.msra.mxu0 0.0
      %411 = vmatpush.msra.mxu0 0.0
      %412 = vmatpush.msra.mxu0 0.0
      %413 = vmatpush.msra.mxu0 0.0
      %414 = vmatpush.msra.mxu0 0.0
      %415 = vmatpush.msra.mxu0 %v395
      %416 = vmatmul.f32.gmra.mxu0 %v398
      %v417 = vpop.f32.mrf.mxu0
      %v418 = vadd.f32 0.0, %v417
      %419 = vdwg.mxu0
      %420 = vrot.lane.b32.xlu0 %v315, 104
      %v421 = vpop.permute.xlu0 %420
      %422 = vrot.lane.b32.xlu0 %v320, 104
      %v423 = vpop.permute.xlu0 %422
      %v425 = vsel %vm269, %v421, 0
      %v428 = vsel %vm269, %v423, 0
      %430 = vmatpush.bf16.xpose.msra.mxu0 0
      %431 = vmatpush.bf16.xpose.msra.mxu0 0
      %432 = vmatpush.bf16.xpose.msra.mxu0 0
      %433 = vmatpush.bf16.xpose.msra.mxu0 0
      %434 = vmatpush.bf16.xpose.msra.mxu0 0
      %435 = vmatpush.bf16.xpose.msra.mxu0 0
      %436 = vmatpush.bf16.xpose.msra.mxu0 0
      %437 = vmatpush.bf16.xpose.msra.mxu0 %v428
      %438 = vmatmul.bf16.gmra.mxu0 %v425
      %v439 = vpop.f32.mrf.mxu0
      %v440 = vadd.f32 0.0, %v439
      %v441 = vpop.f32.mrf.mxu0
      %442 = vdwg.mxu0
      %v443 = vmul.f32 %v440, 0.125
      %444 = vrot.lane.b32.xlu0 %v268, 104
      %v445 = vpop.permute.xlu0 %444
      %v448 = vsel %vm269, %v443, 0
      %450 = vmatpush.msra.mxu0 0.0
      %451 = vmatpush.msra.mxu0 0.0
      %452 = vmatpush.msra.mxu0 0.0
      %453 = vmatpush.msra.mxu0 0.0
      %454 = vmatpush.msra.mxu0 0.0
      %455 = vmatpush.msra.mxu0 0.0
      %456 = vmatpush.msra.mxu0 0.0
      %457 = vmatpush.msra.mxu0 0.0
      %458 = vmatpush.msra.mxu0 0.0
      %459 = vmatpush.msra.mxu0 0.0
      %460 = vmatpush.msra.mxu0 0.0
      %461 = vmatpush.msra.mxu0 0.0
      %462 = vmatpush.msra.mxu0 0.0
      %463 = vmatpush.msra.mxu0 0.0
      %464 = vmatpush.msra.mxu0 0.0
      %465 = vmatpush.msra.mxu0 %v445
      %466 = vmatmul.f32.gmra.mxu0 %v448
      %v467 = vpop.f32.mrf.mxu0
      %v468 = vadd.f32 0.0, %v467
      %469 = vdwg.mxu0
      %471 = vrot.lane.b32.xlu0 %v368, 8
      %v472 = vpop.permute.xlu0 %471
      %475 = vrot.lane.b32.xlu0 %v418, 16
      %v476 = vpop.permute.xlu0 %475
      %479 = vrot.lane.b32.xlu0 %v468, 24
      %v480 = vpop.permute.xlu0 %479
      %v482 = vsel %vm269, %v311, %v472
      %vm483 = vcmask 130048
      %v484 = vsel %vm483, %v482, %v476
      %vm485 = vcmask 195584
      %v486 = vsel %vm485, %v484, %v480
      %vm487 = vcmask 261120
      %488 = vst.msk [vmem:[%s263] sm:$0xff] %vm487, %v486
      %p489 = scmp.lt.s32.totalorder %s18, 1
      %s490 = scalar_select %p489, %s18, 1
      %p491 = scmp.lt.s32.totalorder %s19, 1
      %s492 = scalar_select %p491, %s19, 1
      %s493 = smul.addr %s490, 2
      %s494 = sadd.s32 %s492, %s493
      %s495 = smul.addr %s494, 8
      %s496 = scalar_lea.vmem %s3, %s495
      // Predicated region
      $region33: #{block_forward.20} parent=31 // pred_check
        %p497 = pneg %p130
      $region34: #{block_forward.20} parent=31 // pred_check_branch
        %499 = sbr.rel (%p497) target = $region36
      $region35: #{block_forward.20} parent=31 // pred_region
        _
      $region36: #{block_forward.20} parent=31 // pred_fallthru
        _
    $region32: #{block_forward.20} parent=5 // pred_fallthru
      _
    %p500 = scmp.le.s32.totalorder 2, %s9
    // Predicated region
    $region37: #{block_forward.20} parent=5 // pred_check
      %p501 = pneg %p500
    $region38: #{block_forward.20} parent=5 // pred_check_branch
      %503 = sbr.rel (%p501) target = $region40
    $region39: #{block_forward.20} parent=5 // pred_region
      %s504 = ssub.s32 %s9, 2
      // Predicated region
      $region41: #{block_forward.20} parent=39 // pred_check
        %p505 = pneg %p136
      $region42: #{block_forward.20} parent=39 // pred_check_branch
        %507 = sbr.rel (%p505) target = $region44
      $region43: #{block_forward.20} parent=39 // pred_region
        %p508 = scmp.lt.s32.totalorder %s20, 1
        %s509 = scalar_select %p508, %s20, 1
        %p510 = scmp.lt.s32.totalorder %s21, 1
        %s511 = scalar_select %p510, %s21, 1
        %s512 = smul.addr %s509, 2
        %s513 = sadd.s32 %s511, %s512
        %s514 = smul.addr %s513, 8
        %s515 = scalar_lea.vmem %s3, %s514
      $region44: #{block_forward.20} parent=39 // pred_fallthru
        _
    $region40: #{block_forward.20} parent=5 // pred_fallthru
      _
  $region6: #{block_forward.20} parent=0 // loop_footer
    %s13 = sadd.s32 1, %s9
  $region7: #{block_forward.20} parent=0 // loop_footer_branch
    %8 = sbr.rel target = $region3
  $region8: #{block_forward.20} parent=0 // loop_exit
    _

// kernel: block_forward.18
$region0: #{block_forward.18}
  #allocation0 [shape = 'u32[]', space=smem, size = 0x4, offset = 0x4, fixed_abs, tag = 'smem constant byte address 0x4 - core index']
  #allocation1 [shape = 'u32[72,128]{1,0:T(1,128)}', space=vmem, size = 0x9000, scoped, tag = 'internal scratch']
  %s0 = inlined_call_operand.hbm [shape: f32[32,32], index: 0, kind: input, shape index: {}]
  %s1 = inlined_call_operand.vmem [shape: f32[32,32], index: 1, kind: input, shape index: {}]
  %s2 = inlined_call_operand.hbm [shape: f32[1,32], index: 2, kind: input, shape index: {}]
  %s3 = inlined_call_operand.hbm [shape: f32[1,32], index: 3, kind: input, shape index: {}]
  %s4 = inlined_call_operand.hbm [shape: f32[1,32], index: 4, kind: input, shape index: {}]
  %s5 = inlined_call_operand.vmem [shape: f32[32,32], index: 5, kind: output, shape index: {}]
  %s6 = sld [smem:[#allocation0]]
  $region46: #{block_forward.18} parent=0
    _
  %s8 = ssub.s32 1, %s6
  %s9 = scalar_select 0, %s8, %s6
  $region1: #{block_forward.18} parent=0
    #allocation2 [shape = 'u8[16384]{0}', space=vmem, size = 0x4000, scoped, tag = 'input window, operand 0, single buffered']
    #allocation3 [shape = 's32[1]{0}', space=sflag, size = 0x4, scoped, tag = 'scoped memory for block_forward.18']
    #allocation4 [shape = 'u8[512]{0}', space=vmem, size = 0x400, scoped, tag = 'input window, operand 2, single buffered']
    #allocation5 [shape = 's32[1]{0}', space=sflag, size = 0x4, scoped, tag = 'scoped memory for block_forward.18']
    #allocation6 [shape = 'u8[512]{0}', space=vmem, size = 0x400, scoped, tag = 'input window, operand 3, single buffered']
    #allocation7 [shape = 'u8[512]{0}', space=vmem, size = 0x400, scoped, tag = 'input window, operand 4, single buffered']
    #allocation8 [shape = 's32[1]{0}', space=sflag, size = 0x4, scoped, tag = 'scoped memory for block_forward.18']
    %10 = vsyncpa [#allocation3], 0
    %11 = vsyncpa [#allocation5], 0
    %12 = vsyncpa [#allocation8], 0
    // Predicated region
    $region2: #{block_forward.18} parent=1 // pred_check
      _
    $region3: #{block_forward.18} parent=1 // pred_check_branch
      %14 = sbr.rel (0) target = $region5
    $region4: #{block_forward.18} parent=1 // pred_region
      %16 = vsyncadd [#allocation3], 0
      %s17 = sshll.u32 %s0, 4
      %s18 = int_to_ptr.hbm [resolvable:$true] %s17
      %s19 = sshll.u32 [#allocation2], 4
      %s20 = int_to_ptr.vmem [resolvable:$true] %s19
      %25 = dma.hbm_to_vmem [thread:$0]  %s18, 512, %s20, [#allocation3], 128, 128, 8
    $region5: #{block_forward.18} parent=1 // pred_fallthru
      _
    // Predicated region
    $region6: #{block_forward.18} parent=1 // pred_check
      _
    $region7: #{block_forward.18} parent=1 // pred_check_branch
      %27 = sbr.rel (0) target = $region9
    $region8: #{block_forward.18} parent=1 // pred_region
      _
    $region9: #{block_forward.18} parent=1 // pred_fallthru
      _
    // Predicated region
    $region10: #{block_forward.18} parent=1 // pred_check
      _
    $region11: #{block_forward.18} parent=1 // pred_check_branch
      %29 = sbr.rel (0) target = $region13
    $region12: #{block_forward.18} parent=1 // pred_region
      %31 = vsyncadd [#allocation5], 0
      %s33 = sshll.u32 %s2, 4
      %s34 = int_to_ptr.hbm [resolvable:$true] %s33
      %s35 = sshll.u32 [#allocation4], 4
      %s36 = int_to_ptr.vmem [resolvable:$true] %s35
      %38 = dma.hbm_to_vmem [thread:$0]  %s34, 16, %s36, [#allocation5]
    $region13: #{block_forward.18} parent=1 // pred_fallthru
      _
    // Predicated region
    $region14: #{block_forward.18} parent=1 // pred_check
      _
    $region15: #{block_forward.18} parent=1 // pred_check_branch
      %40 = sbr.rel (0) target = $region17
    $region16: #{block_forward.18} parent=1 // pred_region
      %42 = vsyncadd [#allocation5], 0
      %s44 = sshll.u32 %s3, 4
      %s45 = int_to_ptr.hbm [resolvable:$true] %s44
      %s46 = sshll.u32 [#allocation6], 4
      %s47 = int_to_ptr.vmem [resolvable:$true] %s46
      %49 = dma.hbm_to_vmem [thread:$0]  %s45, 16, %s47, [#allocation5]
    $region17: #{block_forward.18} parent=1 // pred_fallthru
      _
    // Predicated region
    $region18: #{block_forward.18} parent=1 // pred_check
      _
    $region19: #{block_forward.18} parent=1 // pred_check_branch
      %51 = sbr.rel (0) target = $region21
    $region20: #{block_forward.18} parent=1 // pred_region
      %53 = vsyncadd [#allocation8], 0
      %s55 = sshll.u32 %s4, 4
      %s56 = int_to_ptr.hbm [resolvable:$true] %s55
      %s57 = sshll.u32 [#allocation7], 4
      %s58 = int_to_ptr.vmem [resolvable:$true] %s57
      %60 = dma.hbm_to_vmem [thread:$0]  %s56, 16, %s58, [#allocation8]
    $region21: #{block_forward.18} parent=1 // pred_fallthru
      _
    // Predicated region
    $region22: #{block_forward.18} parent=1 // pred_check
      _
    $region23: #{block_forward.18} parent=1 // pred_check_branch
      %62 = sbr.rel (0) target = $region25
    $region24: #{block_forward.18} parent=1 // pred_region
      %64 = dma.done [#allocation3], 512
    $region25: #{block_forward.18} parent=1 // pred_fallthru
      _
    // Predicated region
    $region26: #{block_forward.18} parent=1 // pred_check
      _
    $region27: #{block_forward.18} parent=1 // pred_check_branch
      %66 = sbr.rel (0) target = $region29
    $region28: #{block_forward.18} parent=1 // pred_region
      %68 = dma.done [#allocation5], 16
    $region29: #{block_forward.18} parent=1 // pred_fallthru
      _
    // Predicated region
    $region30: #{block_forward.18} parent=1 // pred_check
      _
    $region31: #{block_forward.18} parent=1 // pred_check_branch
      %70 = sbr.rel (0) target = $region33
    $region32: #{block_forward.18} parent=1 // pred_region
      %72 = dma.done [#allocation5], 16
    $region33: #{block_forward.18} parent=1 // pred_fallthru
      _
    // Predicated region
    $region34: #{block_forward.18} parent=1 // pred_check
      _
    $region35: #{block_forward.18} parent=1 // pred_check_branch
      %74 = sbr.rel (0) target = $region37
    $region36: #{block_forward.18} parent=1 // pred_region
      %76 = dma.done [#allocation8], 16
    $region37: #{block_forward.18} parent=1 // pred_fallthru
      _
    %v77 = vld [vmem:[#allocation2] sm:$0xff]
    %v78 = vld [vmem:[#allocation2 + $0x8] sm:$0xff]
    %v79 = vld [vmem:[#allocation2 + $0x10] sm:$0xff]
    %v80 = vld [vmem:[#allocation2 + $0x18] sm:$0xff]
    %v81 = vld [vmem:[%s1] sm:$0xff]
    %v82 = vld [vmem:[%s1 + $0x8] sm:$0xff]
    %v83 = vld [vmem:[%s1 + $0x10] sm:$0xff]
    %v84 = vld [vmem:[%s1 + $0x18] sm:$0xff]
    %v85 = vld [vmem:[#allocation4] sm:$0x1]
    %v87 = vperm.slane %v85, 0
    %vm89 = vcmask 261120
    %v91 = vsel %vm89, %v77, 0
    %v94 = vsel %vm89, %v78, 0
    %v97 = vsel %vm89, %v79, 0
    %v100 = vsel %vm89, %v80, 0
    %102 = vmatpush.msra.mxu0 0.0
    %103 = vmatpush.msra.mxu0 0.0
    %104 = vmatpush.msra.mxu0 0.0
    %105 = vmatpush.msra.mxu0 0.0
    %106 = vmatpush.msra.mxu0 0.0
    %107 = vmatpush.msra.mxu0 0.0
    %108 = vmatpush.msra.mxu0 0.0
    %109 = vmatpush.msra.mxu0 0.0
    %110 = vmatpush.msra.mxu0 0.0
    %111 = vmatpush.msra.mxu0 0.0
    %112 = vmatpush.msra.mxu0 0.0
    %113 = vmatpush.msra.mxu0 0.0
    %114 = vmatpush.msra.mxu0 %v84
    %115 = vmatpush.msra.mxu0 %v83
    %116 = vmatpush.msra.mxu0 %v82
    %117 = vmatpush.msra.mxu0 %v81
    %118 = vmatmul.f32.gmra.mxu0 %v91
    %v119 = vpop.f32.mrf.mxu0
    %v120 = vadd.f32 %v87, %v119
    %121 = vmatmul.f32.gmra.mxu0 %v94
    %v122 = vpop.f32.mrf.mxu0
    %v123 = vadd.f32 %v87, %v122
    %124 = vmatmul.f32.gmra.mxu0 %v97
    %v125 = vpop.f32.mrf.mxu0
    %v126 = vadd.f32 %v87, %v125
    %127 = vmatmul.f32.gmra.mxu0 %v100
    %v128 = vpop.f32.mrf.mxu0
    %v129 = vadd.f32 %v87, %v128
    %130 = vdwg.mxu0
    %v131 = vsel %vm89, %v120, 0.0
    %v132 = vsel %vm89, %v123, 0.0
    %v133 = vadd.f32 %v131, %v132
    %v134 = vsel %vm89, %v126, 0.0
    %v135 = vadd.f32 %v133, %v134
    %v136 = vsel %vm89, %v129, 0.0
    %v137 = vadd.f32 %v135, %v136
    %v138 = vrot.slane %v137, 4
    %v139 = vadd.f32 %v137, %v138
    %v140 = vrot.slane %v139, 2
    %v141 = vadd.f32 %v139, %v140
    %v142 = vrot.slane %v141, 1
    %v143 = vadd.f32 %v141, %v142
    %v144 = vrcp.pop 32.0
    %v145 = vmul.f32 32.0, %v144
    %v146 = vsub.f32 1.0, %v145
    %v147 = vmul.f32 %v144, %v146
    %v148 = vadd.f32 %v144, %v147
    %vm149 = vweird.f32 %v144
    %v150 = vsel %vm149, %v144, %v148
    %v151 = vmul.f32 %v143, %v150
    %v152 = vsub.f32 %v120, %v151
    %v153 = vsub.f32 %v123, %v151
    %v154 = vsub.f32 %v126, %v151
    %v155 = vsub.f32 %v129, %v151
    %v156 = vmul.f32 %v152, %v152
    %v157 = vmul.f32 %v153, %v153
    %v158 = vmul.f32 %v154, %v154
    %v159 = vmul.f32 %v155, %v155
    %v160 = vsel %vm89, %v156, 0.0
    %v161 = vsel %vm89, %v157, 0.0
    %v162 = vadd.f32 %v160, %v161
    %v163 = vsel %vm89, %v158, 0.0
    %v164 = vadd.f32 %v162, %v163
    %v165 = vsel %vm89, %v159, 0.0
    %v166 = vadd.f32 %v164, %v165
    %v167 = vrot.slane %v166, 4
    %v168 = vadd.f32 %v166, %v167
    %v169 = vrot.slane %v168, 2
    %v170 = vadd.f32 %v168, %v169
    %v171 = vrot.slane %v170, 1
    %v172 = vadd.f32 %v170, %v171
    %v173 = vmul.f32 %v172, %v150
    %v174 = vadd.f32 %v173, 1e-05
    %v175 = vrsqrt.pop %v174
    %v176 = vmul.f32 %v175, %v174
    %v177 = vmul.f32 %v176, %v175
    %v178 = vmul.f32 0.5, %v177
    %v179 = vsub.f32 1.5, %v178
    %v180 = vmul.f32 %v175, %v179
    %vm181 = vweird.f32 %v174
    %vm182 = vweird.f32 %v175
    %vm183 = vmor %vm181, %vm182
    %v184 = vsel %vm183, %v175, %v180
    %v185 = vmul.f32 %v152, %v184
    %v186 = vmul.f32 %v153, %v184
    %v187 = vmul.f32 %v154, %v184
    %v188 = vmul.f32 %v155, %v184
    %v189 = vld [vmem:[#allocation6] sm:$0x1]
    %v191 = vperm.slane %v189, 0
    %v193 = vmul.f32 %v185, %v191
    %v194 = vmul.f32 %v186, %v191
    %v195 = vmul.f32 %v187, %v191
    %v196 = vmul.f32 %v188, %v191
    %v197 = vld [vmem:[#allocation7] sm:$0x1]
    %v199 = vperm.slane %v197, 0
    %v201 = vadd.f32 %v193, %v199
    %v202 = vadd.f32 %v194, %v199
    %v203 = vadd.f32 %v195, %v199
    %v204 = vadd.f32 %v196, %v199
    %205 = vst.msk [vmem:[%s5] sm:$0xff] %vm89, %v201
    %206 = vst.msk [vmem:[%s5 + $0x8] sm:$0xff] %vm89, %v202
    %207 = vst.msk [vmem:[%s5 + $0x10] sm:$0xff] %vm89, %v203
    %208 = vst.msk [vmem:[%s5 + $0x18] sm:$0xff] %vm89, %v204
    // Predicated region
    $region38: #{block_forward.18} parent=1 // pred_check
      _
    $region39: #{block_forward.18} parent=1 // pred_check_branch
      %210 = sbr.rel (0) target = $region41
    $region40: #{block_forward.18} parent=1 // pred_region
      _
    $region41: #{block_forward.18} parent=1 // pred_fallthru
      _
    // Predicated region
    $region42: #{block_forward.18} parent=1 // pred_check
      _
    $region43: #{block_forward.18} parent=1 // pred_check_branch
      %212 = sbr.rel (0) target = $region45
    $region44: #{block_forward.18} parent=1 // pred_region
      _
    $region45: #{block_forward.18} parent=1 // pred_fallthru
      _
    %213 = vsyncpa [#allocation3], 1
    %214 = vsyncpa [#allocation5], 1
    %215 = vsyncpa [#allocation8], 1

// kernel: block_forward.21
$region0: #{block_forward.21}
  #allocation0 [shape = 'u32[]', space=smem, size = 0x4, offset = 0x4, fixed_abs, tag = 'smem constant byte address 0x4 - core index']
  #allocation1 [shape = 'u32[72,128]{1,0:T(1,128)}', space=vmem, size = 0x9000, scoped, tag = 'internal scratch']
  %s0 = inlined_call_operand.vmem [shape: f32[2,16,32], index: 0, kind: input, shape index: {}]
  %s1 = inlined_call_operand.vmem [shape: bf16[2,16,32], index: 1, kind: output, shape index: {}]
  %s2 = sld [smem:[#allocation0]]
  $region14: #{block_forward.21} parent=0
    _
  %s4 = ssub.s32 1, %s2
  %s5 = scalar_select 0, %s4, %s2
  // Predicated region
  $region2: #{block_forward.21} parent=0 // pred_check
    _
  $region3: #{block_forward.21} parent=0 // pred_check_branch
    %7 = sbr.rel (0) target = $region5
  $region4: #{block_forward.21} parent=0 // pred_region
    _
  $region5: #{block_forward.21} parent=0 // pred_fallthru
    _
  %v8 = vld [vmem:[%s0] sm:$0xff]
  %v9 = vld [vmem:[%s0 + $0x8] sm:$0xff]
  %v10 = vmul.f32 %v8, 0.5
  %v11 = vmul.f32 %v9, 0.5
  %v12 = vadd.f32 %v10, 0.0
  %v13 = vadd.f32 %v11, 0.0
  %vm14 = vcmp.ge.f32.partialorder %v12, 0.5
  %vm15 = vcmp.ge.f32.partialorder %v13, 0.5
  %v16 = vsel %vm14, 1, 0
  %v17 = vsel %vm15, 1, 0
  %v18 = vcvt.s32.f32 %v16
  %v19 = vcvt.s32.f32 %v17
  %v20 = vpack.c.bf16 %v18, %v18
  %v21 = vpack.c.bf16 %v19, %v19
  %vm22 = vcmask 257024
  %23 = vst.msk [vmem:[%s1] sm:$0xf] %vm22, %v20
  %24 = vst.msk [vmem:[%s1 + $0x4] sm:$0xf] %vm22, %v21
  %v25 = vsel %vm14, 0.0, %v12
  %v26 = vsel %vm15, 0.0, %v13
  %s27 = scalar_lea.vmem %s0, 16
  %v28 = vld [vmem:[%s27] sm:$0xff]
  %v29 = vld [vmem:[%s27 + $0x8] sm:$0xff]
  %v30 = vsub.f32 %v28, %v25
  %v31 = vsub.f32 %v29, %v26
  %v32 = vmul.f32 %v30, 0.5
  %v33 = vmul.f32 %v31, 0.5
  %v34 = vadd.f32 %v25, %v32
  %v35 = vadd.f32 %v26, %v33
  %vm36 = vcmp.ge.f32.partialorder %v34, 0.5
  %vm37 = vcmp.ge.f32.partialorder %v35, 0.5
  %v38 = vsel %vm36, 1, 0
  %v39 = vsel %vm37, 1, 0
  %v40 = vcvt.s32.f32 %v38
  %v41 = vcvt.s32.f32 %v39
  %v42 = vpack.c.bf16 %v40, %v40
  %v43 = vpack.c.bf16 %v41, %v41
  %s44 = scalar_lea.vmem %s1, 8
  %45 = vst.msk [vmem:[%s44] sm:$0xf] %vm22, %v42
  %46 = vst.msk [vmem:[%s44 + $0x4] sm:$0xf] %vm22, %v43
  // Predicated region
  $region6: #{block_forward.21} parent=0 // pred_check
    _
  $region7: #{block_forward.21} parent=0 // pred_check_branch
    %48 = sbr.rel (0) target = $region9
  $region8: #{block_forward.21} parent=0 // pred_region
    _
  $region9: #{block_forward.21} parent=0 // pred_fallthru
    _
  // Predicated region
  $region10: #{block_forward.21} parent=0 // pred_check
    _
  $region11: #{block_forward.21} parent=0 // pred_check_branch
    %50 = sbr.rel (0) target = $region13
  $region12: #{block_forward.21} parent=0 // pred_region
    _
  $region13: #{block_forward.21} parent=0 // pred_fallthru
    _

// kernel: block_forward.23
$region0: #{block_forward.23}
  #allocation0 [shape = 'u32[]', space=smem, size = 0x4, offset = 0x4, fixed_abs, tag = 'smem constant byte address 0x4 - core index']
  #allocation1 [shape = 'u32[72,128]{1,0:T(1,128)}', space=vmem, size = 0x9000, scoped, tag = 'internal scratch']
  %s0 = inlined_call_operand.vmem [shape: f32[2,16,32], index: 0, kind: input, shape index: {}]
  %s1 = inlined_call_operand.hbm [shape: f32[2,16,32], index: 1, kind: input, shape index: {}]
  %s2 = inlined_call_operand.vmem [shape: f32[2,16,32], index: 2, kind: output, shape index: {}]
  %s3 = sld [smem:[#allocation0]]
  $region117: #{block_forward.23} parent=0
    _
  %s5 = ssub.s32 1, %s3
  %s6 = scalar_select 0, %s5, %s3
  $region1: #{block_forward.23} parent=0
    #allocation2 [shape = 'u8[16384]{0}', space=vmem, size = 0x4000, scoped, tag = 'input window, operand 0']
    #allocation3 [shape = 'u8[16384]{0}', space=vmem, size = 0x4000, scoped, tag = 'input window, operand 1']
    #allocation4 [shape = 's32[2]{0}', space=sflag, size = 0x8, scoped, tag = 'scoped memory for block_forward.23']
    #allocation5 [shape = 'u8[16384]{0}', space=vmem, size = 0x4000, scoped, tag = 'output window, operand 0']
    %7 = vsyncpa [#allocation4], 0
    %s8 = scalar_lea.sflag [#allocation4], 1
    %9 = vsyncpa %s8, 0
    loop: start=0, step=1, limit=4
    $region2: #{block_forward.23} parent=1 // loop_pre_header
      _
    $region3: #{block_forward.23} parent=1 // loop_header
      %s11 = sphi 0, %s15
      %p12 = scmp.ge.s32.totalorder %s11, 4
      %s21 = sphi 0, %s23
      %s24 = sphi 0, %s21
      %s25 = sphi 0, %s24
      %s41 = sphi 0, %s25
      %s47 = sphi 0, %s49
      %s50 = sphi 0, %s47
      %s51 = sphi 0, %s50
      %s67 = sphi 0, %s51
      %s73 = sphi 0, %s75
      %s76 = sphi 0, %s73
      %s77 = sphi 0, %s76
      %s93 = sphi 0, %s77
    $region4: #{block_forward.23} parent=1 // loop_header_branch
      %14 = sbr.rel (%p12) target = $region8
    $region5: #{block_forward.23} parent=1 // loop_body
      %s16 = ssub.s32 %s11, 1
      %s17 = ssub.s32 %s11, 2
      %s18 = sadd.s32 %s11, 1
      %s19 = ssub.s32 %s11, %s18
      %p20 = scmp.eq.s32.totalorder %s19, 0
      %s22 = sadd.s32 %s21, 1
      %s23 = scalar_select %p20, %s21, %s22
      %p26 = pneg %p20
      %p27 = scmp.eq.s32.totalorder %s11, 1
      %p28 = por %p26, %p27
      %p29 = scmp.ne.s32.totalorder %s21, %s24
      %p30 = scmp.eq.s32.totalorder %s11, 0
      %p31 = por %p29, %p30
      %p32 = scmp.ne.s32.totalorder %s21, %s24
      %p33 = scmp.eq.s32.totalorder %s16, 1
      %p34 = por %p32, %p33
      %p35 = scmp.ne.s32.totalorder %s24, %s25
      %p36 = scmp.eq.s32.totalorder %s16, 0
      %p37 = por %p35, %p36
      %p38 = scmp.ne.s32.totalorder %s24, %s25
      %p39 = scmp.eq.s32.totalorder %s17, 1
      %p40 = por %p38, %p39
      %p42 = scmp.ne.s32.totalorder %s25, %s41
      %p43 = scmp.eq.s32.totalorder %s17, 0
      %p44 = por %p42, %p43
      %s45 = ssub.s32 %s11, %s18
      %p46 = scmp.eq.s32.totalorder %s45, 0
      %s48 = sadd.s32 %s47, 1
      %s49 = scalar_select %p46, %s47, %s48
      %p52 = pneg %p46
      %p53 = scmp.eq.s32.totalorder %s11, 1
      %p54 = por %p52, %p53
      %p55 = scmp.ne.s32.totalorder %s47, %s50
      %p56 = scmp.eq.s32.totalorder %s11, 0
      %p57 = por %p55, %p56
      %p58 = scmp.ne.s32.totalorder %s47, %s50
      %p59 = scmp.eq.s32.totalorder %s16, 1
      %p60 = por %p58, %p59
      %p61 = scmp.ne.s32.totalorder %s50, %s51
      %p62 = scmp.eq.s32.totalorder %s16, 0
      %p63 = por %p61, %p62
      %p64 = scmp.ne.s32.totalorder %s50, %s51
      %p65 = scmp.eq.s32.totalorder %s17, 1
      %p66 = por %p64, %p65
      %p68 = scmp.ne.s32.totalorder %s51, %s67
      %p69 = scmp.eq.s32.totalorder %s17, 0
      %p70 = por %p68, %p69
      %s71 = ssub.s32 %s11, %s18
      %p72 = scmp.eq.s32.totalorder %s71, 0
      %s74 = sadd.s32 %s73, 1
      %s75 = scalar_select %p72, %s73, %s74
      %p78 = pneg %p72
      %p79 = scmp.eq.s32.totalorder %s11, 1
      %p80 = por %p78, %p79
      %p81 = scmp.ne.s32.totalorder %s73, %s76
      %p82 = scmp.eq.s32.totalorder %s11, 0
      %p83 = por %p81, %p82
      %p84 = scmp.ne.s32.totalorder %s73, %s76
      %p85 = scmp.eq.s32.totalorder %s16, 1
      %p86 = por %p84, %p85
      %p87 = scmp.ne.s32.totalorder %s76, %s77
      %p88 = scmp.eq.s32.totalorder %s16, 0
      %p89 = por %p87, %p88
      %p90 = scmp.ne.s32.totalorder %s76, %s77
      %p91 = scmp.eq.s32.totalorder %s17, 1
      %p92 = por %p90, %p91
      %p94 = scmp.ne.s32.totalorder %s77, %s93
      %p95 = scmp.eq.s32.totalorder %s17, 0
      %p96 = por %p94, %p95
      %p97 = scmp.le.s32.totalorder 1, %s11
      %p98 = scmp.lt.s32.totalorder %s11, 3
      %p99 = pnand %p97, %p98
      %p100 = pneg %p99
      // Predicated region
      $region9: #{block_forward.23} parent=5 // pred_check
        _
      $region10: #{block_forward.23} parent=5 // pred_check_branch
        %102 = sbr.rel (%p99) target = $region12
      $region11: #{block_forward.23} parent=5 // pred_region
        %s103 = ssub.s32 %s11, 1
      $region12: #{block_forward.23} parent=5 // pred_fallthru
        _
      %p104 = scmp.lt.s32.totalorder %s11, 2
      // Predicated region
      $region13: #{block_forward.23} parent=5 // pred_check
        %p105 = pneg %p104
      $region14: #{block_forward.23} parent=5 // pred_check_branch
        %107 = sbr.rel (%p105) target = $region16
      $region15: #{block_forward.23} parent=5 // pred_region
        // Predicated region
        $region17: #{block_forward.23} parent=15 // pred_check
          %p108 = pneg %p31
        $region18: #{block_forward.23} parent=15 // pred_check_branch
          %110 = sbr.rel (%p108) target = $region20
        $region19: #{block_forward.23} parent=15 // pred_region
          %s111 = sand.u32 %s21, 1
          %s112 = sand.u32 %s21, 1
          %s113 = smul.addr %s112, 16
          %s114 = scalar_lea.vmem [#allocation2], %s113
          %s115 = smul.addr %s11, 8
          %s116 = scalar_lea.vmem %s0, %s115
          // Predicated region
          $region21: #{block_forward.23} parent=19 // pred_check
            _
          $region22: #{block_forward.23} parent=19 // pred_check_branch
            %118 = sbr.rel (0) target = $region24
          $region23: #{block_forward.23} parent=19 // pred_region
            // Predicated region
            $region25: #{block_forward.23} parent=23 // pred_check
              _
            $region26: #{block_forward.23} parent=23 // pred_check_branch
              %120 = sbr.rel (0) target = $region28
            $region27: #{block_forward.23} parent=23 // pred_region
              // Predicated region
              $region40: #{block_forward.23} parent=27 // pred_check
                _
              $region41: #{block_forward.23} parent=27 // pred_check_branch
                %138 = sbr.rel (0) target = $region43
              $region42: #{block_forward.23} parent=27 // pred_region
                loop: start=0, step=1, limit=1
                $region44: #{block_forward.23} parent=42 // loop_pre_header
                  _
                $region45: #{block_forward.23} parent=42 // loop_header
                  %s140 = sphi 0, %s144
                  %p141 = scmp.ge.s32.totalorder %s140, 1
                  %s145 = sphi %s116, %s116
                  %s146 = sphi %s114, %s114
                $region46: #{block_forward.23} parent=42 // loop_header_branch
                  %143 = sbr.rel (%p141) target = $region50
                $region47: #{block_forward.23} parent=42 // loop_body
                  %v147 = vld [vmem:[%s145] sm:$0xff]
                  %148 = vst [vmem:[%s146] sm:$0xff] %v147
                  %v149 = vld [vmem:[%s145 + $0x10] sm:$0xff]
                  %150 = vst [vmem:[%s146 + $0x8] sm:$0xff] %v149
                $region48: #{block_forward.23} parent=42 // loop_footer
                  %s144 = sadd.s32 1, %s140
                $region49: #{block_forward.23} parent=42 // loop_footer_branch
                  %139 = sbr.rel target = $region45
                $region50: #{block_forward.23} parent=42 // loop_exit
                  _
              $region43: #{block_forward.23} parent=27 // pred_fallthru
                _
              // Predicated region
              $region51: #{block_forward.23} parent=27 // pred_check
                _
              $region52: #{block_forward.23} parent=27 // pred_check_branch
                %152 = sbr.rel target = $region54
              $region53: #{block_forward.23} parent=27 // pred_region
                _
              $region54: #{block_forward.23} parent=27 // pred_fallthru
                _
            $region28: #{block_forward.23} parent=23 // pred_fallthru
              _
            // Predicated region
            $region29: #{block_forward.23} parent=23 // pred_check
              _
            $region30: #{block_forward.23} parent=23 // pred_check_branch
              %122 = sbr.rel target = $region32
            $region31: #{block_forward.23} parent=23 // pred_region
              %s124 = ssub.s32 256, 1
              loop: start=0, step=1, limit=1
              $region33: #{block_forward.23} parent=31 // loop_pre_header
                _
              $region34: #{block_forward.23} parent=31 // loop_header
                %s126 = sphi 0, %s130
                %p127 = scmp.ge.s32.totalorder %s126, 1
                %s131 = sphi %s116, %s116
                %s132 = sphi %s114, %s114
              $region35: #{block_forward.23} parent=31 // loop_header_branch
                %129 = sbr.rel (%p127) target = $region39
              $region36: #{block_forward.23} parent=31 // loop_body
                %v133 = vld [vmem:[%s131] sm:%s124]
                %134 = vst [vmem:[%s132] sm:%s124] %v133
                %v135 = vld [vmem:[%s131 + $0x10] sm:%s124]
                %136 = vst [vmem:[%s132 + $0x8] sm:%s124] %v135
              $region37: #{block_forward.23} parent=31 // loop_footer
                %s130 = sadd.s32 1, %s126
              $region38: #{block_forward.23} parent=31 // loop_footer_branch
                %125 = sbr.rel target = $region34
              $region39: #{block_forward.23} parent=31 // loop_exit
                _
            $region32: #{block_forward.23} parent=23 // pred_fallthru
              _
          $region24: #{block_forward.23} parent=19 // pred_fallthru
            _
          %153 = vnop
        $region20: #{block_forward.23} parent=15 // pred_fallthru
          _
        // Predicated region
        $region55: #{block_forward.23} parent=15 // pred_check
          %p154 = pneg %p57
        $region56: #{block_forward.23} parent=15 // pred_check_branch
          %156 = sbr.rel (%p154) target = $region58
        $region57: #{block_forward.23} parent=15 // pred_region
          %s157 = sand.u32 %s47, 1
          %s158 = scalar_lea.sflag [#allocation4], %s157
          %s159 = sand.u32 %s47, 1
          %s160 = smul.addr %s159, 16
          %s161 = scalar_lea.vmem [#allocation3], %s160
          %163 = vsyncadd %s158, 0
          %s164 = smul.addr %s11, 8
          %s165 = scalar_lea.hbm %s1, %s164
          %s166 = sshll.u32 %s165, 4
          %s167 = int_to_ptr.hbm [resolvable:$true] %s166
          %s168 = sshll.u32 %s161, 4
          %s169 = int_to_ptr.vmem [resolvable:$true] %s168
          %174 = dma.hbm_to_vmem [thread:$0]  %s167, 256, %s169, %s158, 256, 128, 8
        $region58: #{block_forward.23} parent=15 // pred_fallthru
          _
      $region16: #{block_forward.23} parent=5 // pred_fallthru
        _
      %p175 = scmp.le.s32.totalorder 1, %s11
      %p176 = scmp.lt.s32.totalorder %s11, 3
      %p177 = pnand %p175, %p176
      %p178 = pneg %p177
      // Predicated region
      $region59: #{block_forward.23} parent=5 // pred_check
        _
      $region60: #{block_forward.23} parent=5 // pred_check_branch
        %180 = sbr.rel (%p177) target = $region62
      $region61: #{block_forward.23} parent=5 // pred_region
        %s181 = ssub.s32 %s11, 1
        %s182 = sand.u32 %s24, 1
        %s183 = sand.u32 %s24, 1
        %s184 = smul.addr %s183, 16
        %s185 = scalar_lea.vmem [#allocation2], %s184
        // Predicated region
        $region63: #{block_forward.23} parent=61 // pred_check
          %p186 = pneg %p37
        $region64: #{block_forward.23} parent=61 // pred_check_branch
          %188 = sbr.rel (%p186) target = $region66
        $region65: #{block_forward.23} parent=61 // pred_region
          _
        $region66: #{block_forward.23} parent=61 // pred_fallthru
          _
        %s189 = sand.u32 %s50, 1
        %s190 = scalar_lea.sflag [#allocation4], %s189
        %s191 = sand.u32 %s50, 1
        %s192 = smul.addr %s191, 16
        %s193 = scalar_lea.vmem [#allocation3], %s192
        // Predicated region
        $region67: #{block_forward.23} parent=61 // pred_check
          %p194 = pneg %p63
        $region68: #{block_forward.23} parent=61 // pred_check_branch
          %196 = sbr.rel (%p194) target = $region70
        $region69: #{block_forward.23} parent=61 // pred_region
          %198 = dma.done %s190, 256
        $region70: #{block_forward.23} parent=61 // pred_fallthru
          _
        %s199 = sand.u32 %s24, 1
        %s200 = sand.u32 %s24, 1
        %s201 = smul.addr %s200, 16
        %s202 = scalar_lea.vmem [#allocation2], %s201
        %p203 = pneg %p37
        %p204 = pneg %p34
        %s205 = sand.u32 %s50, 1
        %s206 = scalar_lea.sflag [#allocation4], %s205
        %s207 = sand.u32 %s50, 1
        %s208 = smul.addr %s207, 16
        %s209 = scalar_lea.vmem [#allocation3], %s208
        %p210 = pneg %p63
        %p211 = pneg %p60
        %p212 = pneg %p89
        %p213 = pneg %p86
        %s214 = sand.u32 %s76, 1
        %s215 = sand.u32 %s76, 1
        %s216 = smul.addr %s215, 16
        %s217 = scalar_lea.vmem [#allocation5], %s216
        %v218 = vld [vmem:[%s185] sm:$0xff]
        %v219 = vmul.f32 %v218, 0.5
        %v220 = vadd.f32 %v219, 0.0
        %vm221 = vcmp.ge.f32.partialorder %v220, 1.0
        %v222 = vld [vmem:[%s193] sm:$0xff]
        %v223 = vsel %vm221, 1, 0
        %v224 = vcvt.s32.f32 %v223
        %v225 = vadd.f32 %v222, %v224
        %vm226 = vcmask 261120
        %227 = vst.msk [vmem:[%s217] sm:$0xff] %vm226, %v225
        %v228 = vsel %vm221, 0.0, %v220
        %s229 = scalar_lea.vmem %s185, 8 [#allocation2]
        %v230 = vld [vmem:[%s229] sm:$0xff]
        %v231 = vsub.f32 %v230, %v228
        %v232 = vmul.f32 %v231, 0.5
        %v233 = vadd.f32 %v228, %v232
        %vm234 = vcmp.ge.f32.partialorder %v233, 1.0
        %s235 = scalar_lea.vmem %s193, 8 [#allocation3]
        %v236 = vld [vmem:[%s235] sm:$0xff]
        %v237 = vsel %vm234, 1, 0
        %v238 = vcvt.s32.f32 %v237
        %v239 = vadd.f32 %v236, %v238
        %s240 = scalar_lea.vmem %s217, 8 [#allocation5]
        %241 = vst.msk [vmem:[%s240] sm:$0xff] %vm226, %v239
        %s242 = sand.u32 %s76, 1
        %s243 = sand.u32 %s76, 1
        %s244 = smul.addr %s243, 16
        %s245 = scalar_lea.vmem [#allocation5], %s244
        // Predicated region
        $region71: #{block_forward.23} parent=61 // pred_check
          %p246 = pneg %p86
        $region72: #{block_forward.23} parent=61 // pred_check_branch
          %248 = sbr.rel (%p246) target = $region74
        $region73: #{block_forward.23} parent=61 // pred_region
          %s249 = smul.addr %s16, 8
          %s250 = scalar_lea.vmem %s2, %s249
          // Predicated region
          $region75: #{block_forward.23} parent=73 // pred_check
            _
          $region76: #{block_forward.23} parent=73 // pred_check_branch
            %252 = sbr.rel (0) target = $region78
          $region77: #{block_forward.23} parent=73 // pred_region
            // Predicated region
            $region79: #{block_forward.23} parent=77 // pred_check
              _
            $region80: #{block_forward.23} parent=77 // pred_check_branch
              %254 = sbr.rel (0) target = $region82
            $region81: #{block_forward.23} parent=77 // pred_region
              // Predicated region
              $region94: #{block_forward.23} parent=81 // pred_check
                _
              $region95: #{block_forward.23} parent=81 // pred_check_branch
                %272 = sbr.rel (0) target = $region97
              $region96: #{block_forward.23} parent=81 // pred_region
                loop: start=0, step=1, limit=1
                $region98: #{block_forward.23} parent=96 // loop_pre_header
                  _
                $region99: #{block_forward.23} parent=96 // loop_header
                  %s274 = sphi 0, %s278
                  %p275 = scmp.ge.s32.totalorder %s274, 1
                  %s279 = sphi %s245, %s245
                  %s280 = sphi %s250, %s250
                $region100: #{block_forward.23} parent=96 // loop_header_branch
                  %277 = sbr.rel (%p275) target = $region104
                $region101: #{block_forward.23} parent=96 // loop_body
                  %v281 = vld [vmem:[%s279] sm:$0xff]
                  %282 = vst [vmem:[%s280] sm:$0xff] %v281
                  %v283 = vld [vmem:[%s279 + $0x8] sm:$0xff]
                  %284 = vst [vmem:[%s280 + $0x10] sm:$0xff] %v283
                $region102: #{block_forward.23} parent=96 // loop_footer
                  %s278 = sadd.s32 1, %s274
                $region103: #{block_forward.23} parent=96 // loop_footer_branch
                  %273 = sbr.rel target = $region99
                $region104: #{block_forward.23} parent=96 // loop_exit
                  _
              $region97: #{block_forward.23} parent=81 // pred_fallthru
                _
              // Predicated region
              $region105: #{block_forward.23} parent=81 // pred_check
                _
              $region106: #{block_forward.23} parent=81 // pred_check_branch
                %286 = sbr.rel target = $region108
              $region107: #{block_forward.23} parent=81 // pred_region
                _
              $region108: #{block_forward.23} parent=81 // pred_fallthru
                _
            $region82: #{block_forward.23} parent=77 // pred_fallthru
              _
            // Predicated region
            $region83: #{block_forward.23} parent=77 // pred_check
              _
            $region84: #{block_forward.23} parent=77 // pred_check_branch
              %256 = sbr.rel target = $region86
            $region85: #{block_forward.23} parent=77 // pred_region
              %s258 = ssub.s32 256, 1
              loop: start=0, step=1, limit=1
              $region87: #{block_forward.23} parent=85 // loop_pre_header
                _
              $region88: #{block_forward.23} parent=85 // loop_header
                %s260 = sphi 0, %s264
                %p261 = scmp.ge.s32.totalorder %s260, 1
                %s265 = sphi %s245, %s245
                %s266 = sphi %s250, %s250
              $region89: #{block_forward.23} parent=85 // loop_header_branch
                %263 = sbr.rel (%p261) target = $region93
              $region90: #{block_forward.23} parent=85 // loop_body
                %v267 = vld [vmem:[%s265] sm:%s258]
                %268 = vst [vmem:[%s266] sm:%s258] %v267
                %v269 = vld [vmem:[%s265 + $0x8] sm:%s258]
                %270 = vst [vmem:[%s266 + $0x10] sm:%s258] %v269
              $region91: #{block_forward.23} parent=85 // loop_footer
                %s264 = sadd.s32 1, %s260
              $region92: #{block_forward.23} parent=85 // loop_footer_branch
                %259 = sbr.rel target = $region88
              $region93: #{block_forward.23} parent=85 // loop_exit
                _
            $region86: #{block_forward.23} parent=77 // pred_fallthru
              _
          $region78: #{block_forward.23} parent=73 // pred_fallthru
            _
          %287 = vnop
        $region74: #{block_forward.23} parent=61 // pred_fallthru
          _
      $region62: #{block_forward.23} parent=5 // pred_fallthru
        _
      %p288 = scmp.le.s32.totalorder 2, %s11
      // Predicated region
      $region109: #{block_forward.23} parent=5 // pred_check
        %p289 = pneg %p288
      $region110: #{block_forward.23} parent=5 // pred_check_branch
        %291 = sbr.rel (%p289) target = $region112
      $region111: #{block_forward.23} parent=5 // pred_region
        %s292 = ssub.s32 %s11, 2
        // Predicated region
        $region113: #{block_forward.23} parent=111 // pred_check
          %p293 = pneg %p92
        $region114: #{block_forward.23} parent=111 // pred_check_branch
          %295 = sbr.rel (%p293) target = $region116
        $region115: #{block_forward.23} parent=111 // pred_region
          %s296 = sand.u32 %s77, 1
          %s297 = sand.u32 %s77, 1
          %s298 = smul.addr %s297, 16
          %s299 = scalar_lea.vmem [#allocation5], %s298
        $region116: #{block_forward.23} parent=111 // pred_fallthru
          _
      $region112: #{block_forward.23} parent=5 // pred_fallthru
        _
    $region6: #{block_forward.23} parent=1 // loop_footer
      %s15 = sadd.s32 1, %s11
    $region7: #{block_forward.23} parent=1 // loop_footer_branch
      %10 = sbr.rel target = $region3
    $region8: #{block_forward.23} parent=1 // loop_exit
      _
    %300 = vsyncpa [#allocation4], 1
    %s301 = scalar_lea.sflag [#allocation4], 1
    %302 = vsyncpa %s301, 1

// kernel: block_forward.24
$region0: #{block_forward.24}
  #allocation0 [shape = 'u32[]', space=smem, size = 0x4, offset = 0x4, fixed_abs, tag = 'smem constant byte address 0x4 - core index']
  #allocation1 [shape = 'u32[72,128]{1,0:T(1,128)}', space=vmem, size = 0x9000, scoped, tag = 'internal scratch']
  %s0 = inlined_call_operand.vmem [shape: f32[32,32], index: 0, kind: input, shape index: {}]
  %s1 = inlined_call_operand.hbm [shape: f32[32,128], index: 1, kind: input, shape index: {}]
  %s2 = inlined_call_operand.hbm [shape: f32[1,128], index: 2, kind: input, shape index: {}]
  %s3 = inlined_call_operand.hbm [shape: f32[1,128], index: 3, kind: input, shape index: {}]
  %s4 = inlined_call_operand.hbm [shape: f32[1,128], index: 4, kind: input, shape index: {}]
  %s5 = inlined_call_operand.vmem [shape: f32[32,128], index: 5, kind: output, shape index: {}]
  %s6 = sld [smem:[#allocation0]]
  $region46: #{block_forward.24} parent=0
    _
  %s8 = ssub.s32 1, %s6
  %s9 = scalar_select 0, %s8, %s6
  $region1: #{block_forward.24} parent=0
    #allocation2 [shape = 'u8[16384]{0}', space=vmem, size = 0x4000, scoped, tag = 'input window, operand 1, single buffered']
    #allocation3 [shape = 's32[1]{0}', space=sflag, size = 0x4, scoped, tag = 'scoped memory for block_forward.24']
    #allocation4 [shape = 'u8[512]{0}', space=vmem, size = 0x400, scoped, tag = 'input window, operand 2, single buffered']
    #allocation5 [shape = 's32[1]{0}', space=sflag, size = 0x4, scoped, tag = 'scoped memory for block_forward.24']
    #allocation6 [shape = 'u8[512]{0}', space=vmem, size = 0x400, scoped, tag = 'input window, operand 3, single buffered']
    #allocation7 [shape = 'u8[512]{0}', space=vmem, size = 0x400, scoped, tag = 'input window, operand 4, single buffered']
    #allocation8 [shape = 's32[1]{0}', space=sflag, size = 0x4, scoped, tag = 'scoped memory for block_forward.24']
    %10 = vsyncpa [#allocation3], 0
    %11 = vsyncpa [#allocation5], 0
    %12 = vsyncpa [#allocation8], 0
    // Predicated region
    $region2: #{block_forward.24} parent=1 // pred_check
      _
    $region3: #{block_forward.24} parent=1 // pred_check_branch
      %14 = sbr.rel (0) target = $region5
    $region4: #{block_forward.24} parent=1 // pred_region
      _
    $region5: #{block_forward.24} parent=1 // pred_fallthru
      _
    // Predicated region
    $region6: #{block_forward.24} parent=1 // pred_check
      _
    $region7: #{block_forward.24} parent=1 // pred_check_branch
      %16 = sbr.rel (0) target = $region9
    $region8: #{block_forward.24} parent=1 // pred_region
      %18 = vsyncadd [#allocation3], 0
      %s19 = sshll.u32 %s1, 4
      %s20 = int_to_ptr.hbm [resolvable:$true] %s19
      %s21 = sshll.u32 [#allocation2], 4
      %s22 = int_to_ptr.vmem [resolvable:$true] %s21
      %27 = dma.hbm_to_vmem [thread:$0]  %s20, 512, %s22, [#allocation3], 128, 128, 8
    $region9: #{block_forward.24} parent=1 // pred_fallthru
      _
    // Predicated region
    $region10: #{block_forward.24} parent=1 // pred_check
      _
    $region11: #{block_forward.24} parent=1 // pred_check_branch
      %29 = sbr.rel (0) target = $region13
    $region12: #{block_forward.24} parent=1 // pred_region
      %31 = vsyncadd [#allocation5], 0
      %s33 = sshll.u32 %s2, 4
      %s34 = int_to_ptr.hbm [resolvable:$true] %s33
      %s35 = sshll.u32 [#allocation4], 4
      %s36 = int_to_ptr.vmem [resolvable:$true] %s35
      %38 = dma.hbm_to_vmem [thread:$0]  %s34, 16, %s36, [#allocation5]
    $region13: #{block_forward.24} parent=1 // pred_fallthru
      _
    // Predicated region
    $region14: #{block_forward.24} parent=1 // pred_check
      _
    $region15: #{block_forward.24} parent=1 // pred_check_branch
      %40 = sbr.rel (0) target = $region17
    $region16: #{block_forward.24} parent=1 // pred_region
      %42 = vsyncadd [#allocation5], 0
      %s44 = sshll.u32 %s3, 4
      %s45 = int_to_ptr.hbm [resolvable:$true] %s44
      %s46 = sshll.u32 [#allocation6], 4
      %s47 = int_to_ptr.vmem [resolvable:$true] %s46
      %49 = dma.hbm_to_vmem [thread:$0]  %s45, 16, %s47, [#allocation5]
    $region17: #{block_forward.24} parent=1 // pred_fallthru
      _
    // Predicated region
    $region18: #{block_forward.24} parent=1 // pred_check
      _
    $region19: #{block_forward.24} parent=1 // pred_check_branch
      %51 = sbr.rel (0) target = $region21
    $region20: #{block_forward.24} parent=1 // pred_region
      %53 = vsyncadd [#allocation8], 0
      %s55 = sshll.u32 %s4, 4
      %s56 = int_to_ptr.hbm [resolvable:$true] %s55
      %s57 = sshll.u32 [#allocation7], 4
      %s58 = int_to_ptr.vmem [resolvable:$true] %s57
      %60 = dma.hbm_to_vmem [thread:$0]  %s56, 16, %s58, [#allocation8]
    $region21: #{block_forward.24} parent=1 // pred_fallthru
      _
    // Predicated region
    $region22: #{block_forward.24} parent=1 // pred_check
      _
    $region23: #{block_forward.24} parent=1 // pred_check_branch
      %62 = sbr.rel (0) target = $region25
    $region24: #{block_forward.24} parent=1 // pred_region
      %64 = dma.done [#allocation3], 512
    $region25: #{block_forward.24} parent=1 // pred_fallthru
      _
    // Predicated region
    $region26: #{block_forward.24} parent=1 // pred_check
      _
    $region27: #{block_forward.24} parent=1 // pred_check_branch
      %66 = sbr.rel (0) target = $region29
    $region28: #{block_forward.24} parent=1 // pred_region
      %68 = dma.done [#allocation5], 16
    $region29: #{block_forward.24} parent=1 // pred_fallthru
      _
    // Predicated region
    $region30: #{block_forward.24} parent=1 // pred_check
      _
    $region31: #{block_forward.24} parent=1 // pred_check_branch
      %70 = sbr.rel (0) target = $region33
    $region32: #{block_forward.24} parent=1 // pred_region
      %72 = dma.done [#allocation5], 16
    $region33: #{block_forward.24} parent=1 // pred_fallthru
      _
    // Predicated region
    $region34: #{block_forward.24} parent=1 // pred_check
      _
    $region35: #{block_forward.24} parent=1 // pred_check_branch
      %74 = sbr.rel (0) target = $region37
    $region36: #{block_forward.24} parent=1 // pred_region
      %76 = dma.done [#allocation8], 16
    $region37: #{block_forward.24} parent=1 // pred_fallthru
      _
    %v77 = vld [vmem:[%s0] sm:$0xff]
    %v78 = vld [vmem:[%s0 + $0x8] sm:$0xff]
    %v79 = vld [vmem:[%s0 + $0x10] sm:$0xff]
    %v80 = vld [vmem:[%s0 + $0x18] sm:$0xff]
    %v81 = vld [vmem:[#allocation2] sm:$0xff]
    %v82 = vld [vmem:[#allocation2 + $0x8] sm:$0xff]
    %v83 = vld [vmem:[#allocation2 + $0x10] sm:$0xff]
    %v84 = vld [vmem:[#allocation2 + $0x18] sm:$0xff]
    %v85 = vld [vmem:[#allocation4] sm:$0x1]
    %v87 = vperm.slane %v85, 0
    %vm89 = vcmask 261120
    %v91 = vsel %vm89, %v77, 0
    %v94 = vsel %vm89, %v78, 0
    %v97 = vsel %vm89, %v79, 0
    %v100 = vsel %vm89, %v80, 0
    %102 = vmatpush.msra.mxu0 0.0
    %103 = vmatpush.msra.mxu0 0.0
    %104 = vmatpush.msra.mxu0 0.0
    %105 = vmatpush.msra.mxu0 0.0
    %106 = vmatpush.msra.mxu0 0.0
    %107 = vmatpush.msra.mxu0 0.0
    %108 = vmatpush.msra.mxu0 0.0
    %109 = vmatpush.msra.mxu0 0.0
    %110 = vmatpush.msra.mxu0 0.0
    %111 = vmatpush.msra.mxu0 0.0
    %112 = vmatpush.msra.mxu0 0.0
    %113 = vmatpush.msra.mxu0 0.0
    %114 = vmatpush.msra.mxu0 %v84
    %115 = vmatpush.msra.mxu0 %v83
    %116 = vmatpush.msra.mxu0 %v82
    %117 = vmatpush.msra.mxu0 %v81
    %118 = vmatmul.f32.gmra.mxu0 %v91
    %v119 = vpop.f32.mrf.mxu0
    %v120 = vadd.f32 %v87, %v119
    %121 = vmatmul.f32.gmra.mxu0 %v94
    %v122 = vpop.f32.mrf.mxu0
    %v123 = vadd.f32 %v87, %v122
    %124 = vmatmul.f32.gmra.mxu0 %v97
    %v125 = vpop.f32.mrf.mxu0
    %v126 = vadd.f32 %v87, %v125
    %127 = vmatmul.f32.gmra.mxu0 %v100
    %v128 = vpop.f32.mrf.mxu0
    %v129 = vadd.f32 %v87, %v128
    %130 = vdwg.mxu0
    %v131 = vadd.f32 %v120, %v123
    %v132 = vadd.f32 %v131, %v126
    %v133 = vadd.f32 %v132, %v129
    %v134 = vrot.slane %v133, 4
    %v135 = vadd.f32 %v133, %v134
    %v136 = vrot.slane %v135, 2
    %v137 = vadd.f32 %v135, %v136
    %v138 = vrot.slane %v137, 1
    %v139 = vadd.f32 %v137, %v138
    %v140 = vrcp.pop 32.0
    %v141 = vmul.f32 32.0, %v140
    %v142 = vsub.f32 1.0, %v141
    %v143 = vmul.f32 %v140, %v142
    %v144 = vadd.f32 %v140, %v143
    %vm145 = vweird.f32 %v140
    %v146 = vsel %vm145, %v140, %v144
    %v147 = vmul.f32 %v139, %v146
    %v148 = vsub.f32 %v120, %v147
    %v149 = vsub.f32 %v123, %v147
    %v150 = vsub.f32 %v126, %v147
    %v151 = vsub.f32 %v129, %v147
    %v152 = vmul.f32 %v148, %v148
    %v153 = vmul.f32 %v149, %v149
    %v154 = vmul.f32 %v150, %v150
    %v155 = vmul.f32 %v151, %v151
    %v156 = vadd.f32 %v152, %v153
    %v157 = vadd.f32 %v156, %v154
    %v158 = vadd.f32 %v157, %v155
    %v159 = vrot.slane %v158, 4
    %v160 = vadd.f32 %v158, %v159
    %v161 = vrot.slane %v160, 2
    %v162 = vadd.f32 %v160, %v161
    %v163 = vrot.slane %v162, 1
    %v164 = vadd.f32 %v162, %v163
    %v165 = vmul.f32 %v164, %v146
    %v166 = vadd.f32 %v165, 1e-05
    %v167 = vrsqrt.pop %v166
    %v168 = vmul.f32 %v167, %v166
    %v169 = vmul.f32 %v168, %v167
    %v170 = vmul.f32 0.5, %v169
    %v171 = vsub.f32 1.5, %v170
    %v172 = vmul.f32 %v167, %v171
    %vm173 = vweird.f32 %v166
    %vm174 = vweird.f32 %v167
    %vm175 = vmor %vm173, %vm174
    %v176 = vsel %vm175, %v167, %v172
    %v177 = vmul.f32 %v148, %v176
    %v178 = vmul.f32 %v149, %v176
    %v179 = vmul.f32 %v150, %v176
    %v180 = vmul.f32 %v151, %v176
    %v181 = vld [vmem:[#allocation6] sm:$0x1]
    %v183 = vperm.slane %v181, 0
    %v185 = vmul.f32 %v177, %v183
    %v186 = vmul.f32 %v178, %v183
    %v187 = vmul.f32 %v179, %v183
    %v188 = vmul.f32 %v180, %v183
    %v189 = vld [vmem:[#allocation7] sm:$0x1]
    %v191 = vperm.slane %v189, 0
    %v193 = vadd.f32 %v185, %v191
    %v194 = vadd.f32 %v186, %v191
    %v195 = vadd.f32 %v187, %v191
    %v196 = vadd.f32 %v188, %v191
    %197 = vst [vmem:[%s5] sm:$0xff] %v193
    %198 = vst [vmem:[%s5 + $0x8] sm:$0xff] %v194
    %199 = vst [vmem:[%s5 + $0x10] sm:$0xff] %v195
    %200 = vst [vmem:[%s5 + $0x18] sm:$0xff] %v196
    // Predicated region
    $region38: #{block_forward.24} parent=1 // pred_check
      _
    $region39: #{block_forward.24} parent=1 // pred_check_branch
      %202 = sbr.rel (0) target = $region41
    $region40: #{block_forward.24} parent=1 // pred_region
      _
    $region41: #{block_forward.24} parent=1 // pred_fallthru
      _
    // Predicated region
    $region42: #{block_forward.24} parent=1 // pred_check
      _
    $region43: #{block_forward.24} parent=1 // pred_check_branch
      %204 = sbr.rel (0) target = $region45
    $region44: #{block_forward.24} parent=1 // pred_region
      _
    $region45: #{block_forward.24} parent=1 // pred_fallthru
      _
    %205 = vsyncpa [#allocation3], 1
    %206 = vsyncpa [#allocation5], 1
    %207 = vsyncpa [#allocation8], 1

// kernel: block_forward.22
$region0: #{block_forward.22}
  #allocation0 [shape = 'u32[]', space=smem, size = 0x4, offset = 0x4, fixed_abs, tag = 'smem constant byte address 0x4 - core index']
  #allocation1 [shape = 'u32[72,128]{1,0:T(1,128)}', space=vmem, size = 0x9000, scoped, tag = 'internal scratch']
  %s0 = inlined_call_operand.vmem [shape: bf16[32,32], index: 0, kind: input, shape index: {}]
  %s1 = inlined_call_operand.hbm [shape: f32[32,32], index: 1, kind: input, shape index: {}]
  %s2 = inlined_call_operand.hbm [shape: f32[1,32], index: 2, kind: input, shape index: {}]
  %s3 = inlined_call_operand.hbm [shape: f32[1,32], index: 3, kind: input, shape index: {}]
  %s4 = inlined_call_operand.hbm [shape: f32[1,32], index: 4, kind: input, shape index: {}]
  %s5 = inlined_call_operand.vmem [shape: f32[32,32], index: 5, kind: output, shape index: {}]
  %s6 = sld [smem:[#allocation0]]
  $region46: #{block_forward.22} parent=0
    _
  %s8 = ssub.s32 1, %s6
  %s9 = scalar_select 0, %s8, %s6
  $region1: #{block_forward.22} parent=0
    #allocation2 [shape = 'u8[16384]{0}', space=vmem, size = 0x4000, scoped, tag = 'input window, operand 1, single buffered']
    #allocation3 [shape = 's32[1]{0}', space=sflag, size = 0x4, scoped, tag = 'scoped memory for block_forward.22']
    #allocation4 [shape = 'u8[512]{0}', space=vmem, size = 0x400, scoped, tag = 'input window, operand 2, single buffered']
    #allocation5 [shape = 's32[1]{0}', space=sflag, size = 0x4, scoped, tag = 'scoped memory for block_forward.22']
    #allocation6 [shape = 'u8[512]{0}', space=vmem, size = 0x400, scoped, tag = 'input window, operand 3, single buffered']
    #allocation7 [shape = 'u8[512]{0}', space=vmem, size = 0x400, scoped, tag = 'input window, operand 4, single buffered']
    #allocation8 [shape = 's32[1]{0}', space=sflag, size = 0x4, scoped, tag = 'scoped memory for block_forward.22']
    %10 = vsyncpa [#allocation3], 0
    %11 = vsyncpa [#allocation5], 0
    %12 = vsyncpa [#allocation8], 0
    // Predicated region
    $region2: #{block_forward.22} parent=1 // pred_check
      _
    $region3: #{block_forward.22} parent=1 // pred_check_branch
      %14 = sbr.rel (0) target = $region5
    $region4: #{block_forward.22} parent=1 // pred_region
      _
    $region5: #{block_forward.22} parent=1 // pred_fallthru
      _
    // Predicated region
    $region6: #{block_forward.22} parent=1 // pred_check
      _
    $region7: #{block_forward.22} parent=1 // pred_check_branch
      %16 = sbr.rel (0) target = $region9
    $region8: #{block_forward.22} parent=1 // pred_region
      %18 = vsyncadd [#allocation3], 0
      %s19 = sshll.u32 %s1, 4
      %s20 = int_to_ptr.hbm [resolvable:$true] %s19
      %s21 = sshll.u32 [#allocation2], 4
      %s22 = int_to_ptr.vmem [resolvable:$true] %s21
      %27 = dma.hbm_to_vmem [thread:$0]  %s20, 512, %s22, [#allocation3], 128, 128, 8
    $region9: #{block_forward.22} parent=1 // pred_fallthru
      _
    // Predicated region
    $region10: #{block_forward.22} parent=1 // pred_check
      _
    $region11: #{block_forward.22} parent=1 // pred_check_branch
      %29 = sbr.rel (0) target = $region13
    $region12: #{block_forward.22} parent=1 // pred_region
      %31 = vsyncadd [#allocation5], 0
      %s33 = sshll.u32 %s2, 4
      %s34 = int_to_ptr.hbm [resolvable:$true] %s33
      %s35 = sshll.u32 [#allocation4], 4
      %s36 = int_to_ptr.vmem [resolvable:$true] %s35
      %38 = dma.hbm_to_vmem [thread:$0]  %s34, 16, %s36, [#allocation5]
    $region13: #{block_forward.22} parent=1 // pred_fallthru
      _
    // Predicated region
    $region14: #{block_forward.22} parent=1 // pred_check
      _
    $region15: #{block_forward.22} parent=1 // pred_check_branch
      %40 = sbr.rel (0) target = $region17
    $region16: #{block_forward.22} parent=1 // pred_region
      %42 = vsyncadd [#allocation5], 0
      %s44 = sshll.u32 %s3, 4
      %s45 = int_to_ptr.hbm [resolvable:$true] %s44
      %s46 = sshll.u32 [#allocation6], 4
      %s47 = int_to_ptr.vmem [resolvable:$true] %s46
      %49 = dma.hbm_to_vmem [thread:$0]  %s45, 16, %s47, [#allocation5]
    $region17: #{block_forward.22} parent=1 // pred_fallthru
      _
    // Predicated region
    $region18: #{block_forward.22} parent=1 // pred_check
      _
    $region19: #{block_forward.22} parent=1 // pred_check_branch
      %51 = sbr.rel (0) target = $region21
    $region20: #{block_forward.22} parent=1 // pred_region
      %53 = vsyncadd [#allocation8], 0
      %s55 = sshll.u32 %s4, 4
      %s56 = int_to_ptr.hbm [resolvable:$true] %s55
      %s57 = sshll.u32 [#allocation7], 4
      %s58 = int_to_ptr.vmem [resolvable:$true] %s57
      %60 = dma.hbm_to_vmem [thread:$0]  %s56, 16, %s58, [#allocation8]
    $region21: #{block_forward.22} parent=1 // pred_fallthru
      _
    // Predicated region
    $region22: #{block_forward.22} parent=1 // pred_check
      _
    $region23: #{block_forward.22} parent=1 // pred_check_branch
      %62 = sbr.rel (0) target = $region25
    $region24: #{block_forward.22} parent=1 // pred_region
      %64 = dma.done [#allocation3], 512
    $region25: #{block_forward.22} parent=1 // pred_fallthru
      _
    // Predicated region
    $region26: #{block_forward.22} parent=1 // pred_check
      _
    $region27: #{block_forward.22} parent=1 // pred_check_branch
      %66 = sbr.rel (0) target = $region29
    $region28: #{block_forward.22} parent=1 // pred_region
      %68 = dma.done [#allocation5], 16
    $region29: #{block_forward.22} parent=1 // pred_fallthru
      _
    // Predicated region
    $region30: #{block_forward.22} parent=1 // pred_check
      _
    $region31: #{block_forward.22} parent=1 // pred_check_branch
      %70 = sbr.rel (0) target = $region33
    $region32: #{block_forward.22} parent=1 // pred_region
      %72 = dma.done [#allocation5], 16
    $region33: #{block_forward.22} parent=1 // pred_fallthru
      _
    // Predicated region
    $region34: #{block_forward.22} parent=1 // pred_check
      _
    $region35: #{block_forward.22} parent=1 // pred_check_branch
      %74 = sbr.rel (0) target = $region37
    $region36: #{block_forward.22} parent=1 // pred_region
      %76 = dma.done [#allocation8], 16
    $region37: #{block_forward.22} parent=1 // pred_fallthru
      _
    %v77 = vld [vmem:[%s0] sm:$0xf]
    %v78 = vld [vmem:[%s0 + $0x4] sm:$0xf]
    %v79 = vld [vmem:[%s0 + $0x8] sm:$0xf]
    %v80 = vld [vmem:[%s0 + $0xc] sm:$0xf]
    %v81 = vunpack.c.l.bf16 %v77
    %v82 = vunpack.c.l.bf16 %v78
    %v83 = vunpack.c.l.bf16 %v79
    %v84 = vunpack.c.l.bf16 %v80
    %v85 = vld [vmem:[#allocation2] sm:$0xff]
    %v86 = vld [vmem:[#allocation2 + $0x8] sm:$0xff]
    %v87 = vld [vmem:[#allocation2 + $0x10] sm:$0xff]
    %v88 = vld [vmem:[#allocation2 + $0x18] sm:$0xff]
    %v89 = vld [vmem:[#allocation4] sm:$0x1]
    %v91 = vperm.slane %v89, 0
    %vm93 = vcmask 261120
    %v95 = vsel %vm93, %v81, 0
    %v98 = vsel %vm93, %v82, 0
    %v101 = vsel %vm93, %v83, 0
    %v104 = vsel %vm93, %v84, 0
    %106 = vmatpush.msra.mxu0 0.0
    %107 = vmatpush.msra.mxu0 0.0
    %108 = vmatpush.msra.mxu0 0.0
    %109 = vmatpush.msra.mxu0 0.0
    %110 = vmatpush.msra.mxu0 0.0
    %111 = vmatpush.msra.mxu0 0.0
    %112 = vmatpush.msra.mxu0 0.0
    %113 = vmatpush.msra.mxu0 0.0
    %114 = vmatpush.msra.mxu0 0.0
    %115 = vmatpush.msra.mxu0 0.0
    %116 = vmatpush.msra.mxu0 0.0
    %117 = vmatpush.msra.mxu0 0.0
    %118 = vmatpush.msra.mxu0 %v88
    %119 = vmatpush.msra.mxu0 %v87
    %120 = vmatpush.msra.mxu0 %v86
    %121 = vmatpush.msra.mxu0 %v85
    %122 = vmatmul.f32.gmra.mxu0 %v95
    %v123 = vpop.f32.mrf.mxu0
    %v124 = vadd.f32 %v91, %v123
    %125 = vmatmul.f32.gmra.mxu0 %v98
    %v126 = vpop.f32.mrf.mxu0
    %v127 = vadd.f32 %v91, %v126
    %128 = vmatmul.f32.gmra.mxu0 %v101
    %v129 = vpop.f32.mrf.mxu0
    %v130 = vadd.f32 %v91, %v129
    %131 = vmatmul.f32.gmra.mxu0 %v104
    %v132 = vpop.f32.mrf.mxu0
    %v133 = vadd.f32 %v91, %v132
    %134 = vdwg.mxu0
    %v135 = vsel %vm93, %v124, 0.0
    %v136 = vsel %vm93, %v127, 0.0
    %v137 = vadd.f32 %v135, %v136
    %v138 = vsel %vm93, %v130, 0.0
    %v139 = vadd.f32 %v137, %v138
    %v140 = vsel %vm93, %v133, 0.0
    %v141 = vadd.f32 %v139, %v140
    %v142 = vrot.slane %v141, 4
    %v143 = vadd.f32 %v141, %v142
    %v144 = vrot.slane %v143, 2
    %v145 = vadd.f32 %v143, %v144
    %v146 = vrot.slane %v145, 1
    %v147 = vadd.f32 %v145, %v146
    %v148 = vrcp.pop 32.0
    %v149 = vmul.f32 32.0, %v148
    %v150 = vsub.f32 1.0, %v149
    %v151 = vmul.f32 %v148, %v150
    %v152 = vadd.f32 %v148, %v151
    %vm153 = vweird.f32 %v148
    %v154 = vsel %vm153, %v148, %v152
    %v155 = vmul.f32 %v147, %v154
    %v156 = vsub.f32 %v124, %v155
    %v157 = vsub.f32 %v127, %v155
    %v158 = vsub.f32 %v130, %v155
    %v159 = vsub.f32 %v133, %v155
    %v160 = vmul.f32 %v156, %v156
    %v161 = vmul.f32 %v157, %v157
    %v162 = vmul.f32 %v158, %v158
    %v163 = vmul.f32 %v159, %v159
    %v164 = vsel %vm93, %v160, 0.0
    %v165 = vsel %vm93, %v161, 0.0
    %v166 = vadd.f32 %v164, %v165
    %v167 = vsel %vm93, %v162, 0.0
    %v168 = vadd.f32 %v166, %v167
    %v169 = vsel %vm93, %v163, 0.0
    %v170 = vadd.f32 %v168, %v169
    %v171 = vrot.slane %v170, 4
    %v172 = vadd.f32 %v170, %v171
    %v173 = vrot.slane %v172, 2
    %v174 = vadd.f32 %v172, %v173
    %v175 = vrot.slane %v174, 1
    %v176 = vadd.f32 %v174, %v175
    %v177 = vmul.f32 %v176, %v154
    %v178 = vadd.f32 %v177, 1e-05
    %v179 = vrsqrt.pop %v178
    %v180 = vmul.f32 %v179, %v178
    %v181 = vmul.f32 %v180, %v179
    %v182 = vmul.f32 0.5, %v181
    %v183 = vsub.f32 1.5, %v182
    %v184 = vmul.f32 %v179, %v183
    %vm185 = vweird.f32 %v178
    %vm186 = vweird.f32 %v179
    %vm187 = vmor %vm185, %vm186
    %v188 = vsel %vm187, %v179, %v184
    %v189 = vmul.f32 %v156, %v188
    %v190 = vmul.f32 %v157, %v188
    %v191 = vmul.f32 %v158, %v188
    %v192 = vmul.f32 %v159, %v188
    %v193 = vld [vmem:[#allocation6] sm:$0x1]
    %v195 = vperm.slane %v193, 0
    %v197 = vmul.f32 %v189, %v195
    %v198 = vmul.f32 %v190, %v195
    %v199 = vmul.f32 %v191, %v195
    %v200 = vmul.f32 %v192, %v195
    %v201 = vld [vmem:[#allocation7] sm:$0x1]
    %v203 = vperm.slane %v201, 0
    %v205 = vadd.f32 %v197, %v203
    %v206 = vadd.f32 %v198, %v203
    %v207 = vadd.f32 %v199, %v203
    %v208 = vadd.f32 %v200, %v203
    %209 = vst.msk [vmem:[%s5] sm:$0xff] %vm93, %v205
    %210 = vst.msk [vmem:[%s5 + $0x8] sm:$0xff] %vm93, %v206
    %211 = vst.msk [vmem:[%s5 + $0x10] sm:$0xff] %vm93, %v207
    %212 = vst.msk [vmem:[%s5 + $0x18] sm:$0xff] %vm93, %v208
    // Predicated region
    $region38: #{block_forward.22} parent=1 // pred_check
      _
    $region39: #{block_forward.22} parent=1 // pred_check_branch
      %214 = sbr.rel (0) target = $region41
    $region40: #{block_forward.22} parent=1 // pred_region
      _
    $region41: #{block_forward.22} parent=1 // pred_fallthru
      _
    // Predicated region
    $region42: #{block_forward.22} parent=1 // pred_check
      _
    $region43: #{block_forward.22} parent=1 // pred_check_branch
      %216 = sbr.rel (0) target = $region45
    $region44: #{block_forward.22} parent=1 // pred_region
      _
    $region45: #{block_forward.22} parent=1 // pred_fallthru
      _
    %217 = vsyncpa [#allocation3], 1
    %218 = vsyncpa [#allocation5], 1
    %219 = vsyncpa [#allocation8], 1

// kernel: block_forward.25
$region0: #{block_forward.25}
  #allocation0 [shape = 'u32[]', space=smem, size = 0x4, offset = 0x4, fixed_abs, tag = 'smem constant byte address 0x4 - core index']
  #allocation1 [shape = 'u32[72,128]{1,0:T(1,128)}', space=vmem, size = 0x9000, scoped, tag = 'internal scratch']
  %s0 = inlined_call_operand.vmem [shape: f32[2,16,128], index: 0, kind: input, shape index: {}]
  %s1 = inlined_call_operand.vmem [shape: bf16[2,16,128], index: 1, kind: output, shape index: {}]
  %s2 = sld [smem:[#allocation0]]
  $region14: #{block_forward.25} parent=0
    _
  %s4 = ssub.s32 1, %s2
  %s5 = scalar_select 0, %s4, %s2
  // Predicated region
  $region2: #{block_forward.25} parent=0 // pred_check
    _
  $region3: #{block_forward.25} parent=0 // pred_check_branch
    %7 = sbr.rel (0) target = $region5
  $region4: #{block_forward.25} parent=0 // pred_region
    _
  $region5: #{block_forward.25} parent=0 // pred_fallthru
    _
  %v8 = vld [vmem:[%s0] sm:$0xff]
  %v9 = vld [vmem:[%s0 + $0x8] sm:$0xff]
  %v10 = vmul.f32 %v8, 0.5
  %v11 = vmul.f32 %v9, 0.5
  %v12 = vadd.f32 %v10, 0.0
  %v13 = vadd.f32 %v11, 0.0
  %vm14 = vcmp.ge.f32.partialorder %v12, 1.0
  %vm15 = vcmp.ge.f32.partialorder %v13, 1.0
  %v16 = vsel %vm14, 1, 0
  %v17 = vsel %vm15, 1, 0
  %v18 = vcvt.s32.f32 %v16
  %v19 = vcvt.s32.f32 %v17
  %v20 = vpack.c.bf16 %v18, %v18
  %v21 = vpack.c.bf16 %v19, %v19
  %22 = vst [vmem:[%s1] sm:$0xf] %v20
  %23 = vst [vmem:[%s1 + $0x4] sm:$0xf] %v21
  %v24 = vsel %vm14, 0.0, %v12
  %v25 = vsel %vm15, 0.0, %v13
  %s26 = scalar_lea.vmem %s0, 16
  %v27 = vld [vmem:[%s26] sm:$0xff]
  %v28 = vld [vmem:[%s26 + $0x8] sm:$0xff]
  %v29 = vsub.f32 %v27, %v24
  %v30 = vsub.f32 %v28, %v25
  %v31 = vmul.f32 %v29, 0.5
  %v32 = vmul.f32 %v30, 0.5
  %v33 = vadd.f32 %v24, %v31
  %v34 = vadd.f32 %v25, %v32
  %vm35 = vcmp.ge.f32.partialorder %v33, 1.0
  %vm36 = vcmp.ge.f32.partialorder %v34, 1.0
  %v37 = vsel %vm35, 1, 0
  %v38 = vsel %vm36, 1, 0
  %v39 = vcvt.s32.f32 %v37
  %v40 = vcvt.s32.f32 %v38
  %v41 = vpack.c.bf16 %v39, %v39
  %v42 = vpack.c.bf16 %v40, %v40
  %s43 = scalar_lea.vmem %s1, 8
  %44 = vst [vmem:[%s43] sm:$0xf] %v41
  %45 = vst [vmem:[%s43 + $0x4] sm:$0xf] %v42
  // Predicated region
  $region6: #{block_forward.25} parent=0 // pred_check
    _
  $region7: #{block_forward.25} parent=0 // pred_check_branch
    %47 = sbr.rel (0) target = $region9
  $region8: #{block_forward.25} parent=0 // pred_region
    _
  $region9: #{block_forward.25} parent=0 // pred_fallthru
    _
  // Predicated region
  $region10: #{block_forward.25} parent=0 // pred_check
    _
  $region11: #{block_forward.25} parent=0 // pred_check_branch
    %49 = sbr.rel (0) target = $region13
  $region12: #{block_forward.25} parent=0 // pred_region
    _
  $region13: #{block_forward.25} parent=0 // pred_fallthru
    _

// kernel: block_forward.27
$region0: #{block_forward.27}
  #allocation0 [shape = 'u32[]', space=smem, size = 0x4, offset = 0x4, fixed_abs, tag = 'smem constant byte address 0x4 - core index']
  #allocation1 [shape = 'u32[72,128]{1,0:T(1,128)}', space=vmem, size = 0x9000, scoped, tag = 'internal scratch']
  %s0 = inlined_call_operand.vmem [shape: f32[2,16,32], index: 0, kind: input, shape index: {}]
  %s1 = inlined_call_operand.vmem [shape: f32[2,16,32], index: 1, kind: input, shape index: {}]
  %s2 = inlined_call_operand.hbm [shape: f32[2,16,32], index: 2, kind: output, shape index: {}]
  %s3 = sld [smem:[#allocation0]]
  $region117: #{block_forward.27} parent=0
    _
  %s5 = ssub.s32 1, %s3
  %s6 = scalar_select 0, %s5, %s3
  $region1: #{block_forward.27} parent=0
    #allocation2 [shape = 'u8[16384]{0}', space=vmem, size = 0x4000, scoped, tag = 'input window, operand 0']
    #allocation3 [shape = 'u8[16384]{0}', space=vmem, size = 0x4000, scoped, tag = 'input window, operand 1']
    #allocation4 [shape = 'u8[16384]{0}', space=vmem, size = 0x4000, scoped, tag = 'output window, operand 0']
    #allocation5 [shape = 's32[2]{0}', space=sflag, size = 0x8, scoped, tag = 'scoped memory for block_forward.27']
    %7 = vsyncpa [#allocation5], 0
    %s8 = scalar_lea.sflag [#allocation5], 1
    %9 = vsyncpa %s8, 0
    loop: start=0, step=1, limit=4
    $region2: #{block_forward.27} parent=1 // loop_pre_header
      _
    $region3: #{block_forward.27} parent=1 // loop_header
      %s11 = sphi 0, %s15
      %p12 = scmp.ge.s32.totalorder %s11, 4
      %s21 = sphi 0, %s23
      %s24 = sphi 0, %s21
      %s25 = sphi 0, %s24
      %s41 = sphi 0, %s25
      %s47 = sphi 0, %s49
      %s50 = sphi 0, %s47
      %s51 = sphi 0, %s50
      %s67 = sphi 0, %s51
      %s73 = sphi 0, %s75
      %s76 = sphi 0, %s73
      %s77 = sphi 0, %s76
      %s93 = sphi 0, %s77
    $region4: #{block_forward.27} parent=1 // loop_header_branch
      %14 = sbr.rel (%p12) target = $region8
    $region5: #{block_forward.27} parent=1 // loop_body
      %s16 = ssub.s32 %s11, 1
      %s17 = ssub.s32 %s11, 2
      %s18 = sadd.s32 %s11, 1
      %s19 = ssub.s32 %s11, %s18
      %p20 = scmp.eq.s32.totalorder %s19, 0
      %s22 = sadd.s32 %s21, 1
      %s23 = scalar_select %p20, %s21, %s22
      %p26 = pneg %p20
      %p27 = scmp.eq.s32.totalorder %s11, 1
      %p28 = por %p26, %p27
      %p29 = scmp.ne.s32.totalorder %s21, %s24
      %p30 = scmp.eq.s32.totalorder %s11, 0
      %p31 = por %p29, %p30
      %p32 = scmp.ne.s32.totalorder %s21, %s24
      %p33 = scmp.eq.s32.totalorder %s16, 1
      %p34 = por %p32, %p33
      %p35 = scmp.ne.s32.totalorder %s24, %s25
      %p36 = scmp.eq.s32.totalorder %s16, 0
      %p37 = por %p35, %p36
      %p38 = scmp.ne.s32.totalorder %s24, %s25
      %p39 = scmp.eq.s32.totalorder %s17, 1
      %p40 = por %p38, %p39
      %p42 = scmp.ne.s32.totalorder %s25, %s41
      %p43 = scmp.eq.s32.totalorder %s17, 0
      %p44 = por %p42, %p43
      %s45 = ssub.s32 %s11, %s18
      %p46 = scmp.eq.s32.totalorder %s45, 0
      %s48 = sadd.s32 %s47, 1
      %s49 = scalar_select %p46, %s47, %s48
      %p52 = pneg %p46
      %p53 = scmp.eq.s32.totalorder %s11, 1
      %p54 = por %p52, %p53
      %p55 = scmp.ne.s32.totalorder %s47, %s50
      %p56 = scmp.eq.s32.totalorder %s11, 0
      %p57 = por %p55, %p56
      %p58 = scmp.ne.s32.totalorder %s47, %s50
      %p59 = scmp.eq.s32.totalorder %s16, 1
      %p60 = por %p58, %p59
      %p61 = scmp.ne.s32.totalorder %s50, %s51
      %p62 = scmp.eq.s32.totalorder %s16, 0
      %p63 = por %p61, %p62
      %p64 = scmp.ne.s32.totalorder %s50, %s51
      %p65 = scmp.eq.s32.totalorder %s17, 1
      %p66 = por %p64, %p65
      %p68 = scmp.ne.s32.totalorder %s51, %s67
      %p69 = scmp.eq.s32.totalorder %s17, 0
      %p70 = por %p68, %p69
      %s71 = ssub.s32 %s11, %s18
      %p72 = scmp.eq.s32.totalorder %s71, 0
      %s74 = sadd.s32 %s73, 1
      %s75 = scalar_select %p72, %s73, %s74
      %p78 = pneg %p72
      %p79 = scmp.eq.s32.totalorder %s11, 1
      %p80 = por %p78, %p79
      %p81 = scmp.ne.s32.totalorder %s73, %s76
      %p82 = scmp.eq.s32.totalorder %s11, 0
      %p83 = por %p81, %p82
      %p84 = scmp.ne.s32.totalorder %s73, %s76
      %p85 = scmp.eq.s32.totalorder %s16, 1
      %p86 = por %p84, %p85
      %p87 = scmp.ne.s32.totalorder %s76, %s77
      %p88 = scmp.eq.s32.totalorder %s16, 0
      %p89 = por %p87, %p88
      %p90 = scmp.ne.s32.totalorder %s76, %s77
      %p91 = scmp.eq.s32.totalorder %s17, 1
      %p92 = por %p90, %p91
      %p94 = scmp.ne.s32.totalorder %s77, %s93
      %p95 = scmp.eq.s32.totalorder %s17, 0
      %p96 = por %p94, %p95
      %p97 = scmp.le.s32.totalorder 1, %s11
      %p98 = scmp.lt.s32.totalorder %s11, 3
      %p99 = pnand %p97, %p98
      %p100 = pneg %p99
      // Predicated region
      $region9: #{block_forward.27} parent=5 // pred_check
        _
      $region10: #{block_forward.27} parent=5 // pred_check_branch
        %102 = sbr.rel (%p99) target = $region12
      $region11: #{block_forward.27} parent=5 // pred_region
        %s103 = ssub.s32 %s11, 1
      $region12: #{block_forward.27} parent=5 // pred_fallthru
        _
      %p104 = scmp.lt.s32.totalorder %s11, 2
      // Predicated region
      $region13: #{block_forward.27} parent=5 // pred_check
        %p105 = pneg %p104
      $region14: #{block_forward.27} parent=5 // pred_check_branch
        %107 = sbr.rel (%p105) target = $region16
      $region15: #{block_forward.27} parent=5 // pred_region
        // Predicated region
        $region17: #{block_forward.27} parent=15 // pred_check
          %p108 = pneg %p31
        $region18: #{block_forward.27} parent=15 // pred_check_branch
          %110 = sbr.rel (%p108) target = $region20
        $region19: #{block_forward.27} parent=15 // pred_region
          %s111 = sand.u32 %s21, 1
          %s112 = sand.u32 %s21, 1
          %s113 = smul.addr %s112, 16
          %s114 = scalar_lea.vmem [#allocation2], %s113
          %s115 = smul.addr %s11, 8
          %s116 = scalar_lea.vmem %s0, %s115
          // Predicated region
          $region21: #{block_forward.27} parent=19 // pred_check
            _
          $region22: #{block_forward.27} parent=19 // pred_check_branch
            %118 = sbr.rel (0) target = $region24
          $region23: #{block_forward.27} parent=19 // pred_region
            // Predicated region
            $region25: #{block_forward.27} parent=23 // pred_check
              _
            $region26: #{block_forward.27} parent=23 // pred_check_branch
              %120 = sbr.rel (0) target = $region28
            $region27: #{block_forward.27} parent=23 // pred_region
              // Predicated region
              $region40: #{block_forward.27} parent=27 // pred_check
                _
              $region41: #{block_forward.27} parent=27 // pred_check_branch
                %138 = sbr.rel (0) target = $region43
              $region42: #{block_forward.27} parent=27 // pred_region
                loop: start=0, step=1, limit=1
                $region44: #{block_forward.27} parent=42 // loop_pre_header
                  _
                $region45: #{block_forward.27} parent=42 // loop_header
                  %s140 = sphi 0, %s144
                  %p141 = scmp.ge.s32.totalorder %s140, 1
                  %s145 = sphi %s116, %s116
                  %s146 = sphi %s114, %s114
                $region46: #{block_forward.27} parent=42 // loop_header_branch
                  %143 = sbr.rel (%p141) target = $region50
                $region47: #{block_forward.27} parent=42 // loop_body
                  %v147 = vld [vmem:[%s145] sm:$0xff]
                  %148 = vst [vmem:[%s146] sm:$0xff] %v147
                  %v149 = vld [vmem:[%s145 + $0x10] sm:$0xff]
                  %150 = vst [vmem:[%s146 + $0x8] sm:$0xff] %v149
                $region48: #{block_forward.27} parent=42 // loop_footer
                  %s144 = sadd.s32 1, %s140
                $region49: #{block_forward.27} parent=42 // loop_footer_branch
                  %139 = sbr.rel target = $region45
                $region50: #{block_forward.27} parent=42 // loop_exit
                  _
              $region43: #{block_forward.27} parent=27 // pred_fallthru
                _
              // Predicated region
              $region51: #{block_forward.27} parent=27 // pred_check
                _
              $region52: #{block_forward.27} parent=27 // pred_check_branch
                %152 = sbr.rel target = $region54
              $region53: #{block_forward.27} parent=27 // pred_region
                _
              $region54: #{block_forward.27} parent=27 // pred_fallthru
                _
            $region28: #{block_forward.27} parent=23 // pred_fallthru
              _
            // Predicated region
            $region29: #{block_forward.27} parent=23 // pred_check
              _
            $region30: #{block_forward.27} parent=23 // pred_check_branch
              %122 = sbr.rel target = $region32
            $region31: #{block_forward.27} parent=23 // pred_region
              %s124 = ssub.s32 256, 1
              loop: start=0, step=1, limit=1
              $region33: #{block_forward.27} parent=31 // loop_pre_header
                _
              $region34: #{block_forward.27} parent=31 // loop_header
                %s126 = sphi 0, %s130
                %p127 = scmp.ge.s32.totalorder %s126, 1
                %s131 = sphi %s116, %s116
                %s132 = sphi %s114, %s114
              $region35: #{block_forward.27} parent=31 // loop_header_branch
                %129 = sbr.rel (%p127) target = $region39
              $region36: #{block_forward.27} parent=31 // loop_body
                %v133 = vld [vmem:[%s131] sm:%s124]
                %134 = vst [vmem:[%s132] sm:%s124] %v133
                %v135 = vld [vmem:[%s131 + $0x10] sm:%s124]
                %136 = vst [vmem:[%s132 + $0x8] sm:%s124] %v135
              $region37: #{block_forward.27} parent=31 // loop_footer
                %s130 = sadd.s32 1, %s126
              $region38: #{block_forward.27} parent=31 // loop_footer_branch
                %125 = sbr.rel target = $region34
              $region39: #{block_forward.27} parent=31 // loop_exit
                _
            $region32: #{block_forward.27} parent=23 // pred_fallthru
              _
          $region24: #{block_forward.27} parent=19 // pred_fallthru
            _
          %153 = vnop
        $region20: #{block_forward.27} parent=15 // pred_fallthru
          _
        // Predicated region
        $region55: #{block_forward.27} parent=15 // pred_check
          %p154 = pneg %p57
        $region56: #{block_forward.27} parent=15 // pred_check_branch
          %156 = sbr.rel (%p154) target = $region58
        $region57: #{block_forward.27} parent=15 // pred_region
          %s157 = sand.u32 %s47, 1
          %s158 = sand.u32 %s47, 1
          %s159 = smul.addr %s158, 16
          %s160 = scalar_lea.vmem [#allocation3], %s159
          %s161 = smul.addr %s11, 8
          %s162 = scalar_lea.vmem %s1, %s161
          // Predicated region
          $region59: #{block_forward.27} parent=57 // pred_check
            _
          $region60: #{block_forward.27} parent=57 // pred_check_branch
            %164 = sbr.rel (0) target = $region62
          $region61: #{block_forward.27} parent=57 // pred_region
            // Predicated region
            $region63: #{block_forward.27} parent=61 // pred_check
              _
            $region64: #{block_forward.27} parent=61 // pred_check_branch
              %166 = sbr.rel (0) target = $region66
            $region65: #{block_forward.27} parent=61 // pred_region
              // Predicated region
              $region78: #{block_forward.27} parent=65 // pred_check
                _
              $region79: #{block_forward.27} parent=65 // pred_check_branch
                %184 = sbr.rel (0) target = $region81
              $region80: #{block_forward.27} parent=65 // pred_region
                loop: start=0, step=1, limit=1
                $region82: #{block_forward.27} parent=80 // loop_pre_header
                  _
                $region83: #{block_forward.27} parent=80 // loop_header
                  %s186 = sphi 0, %s190
                  %p187 = scmp.ge.s32.totalorder %s186, 1
                  %s191 = sphi %s162, %s162
                  %s192 = sphi %s160, %s160
                $region84: #{block_forward.27} parent=80 // loop_header_branch
                  %189 = sbr.rel (%p187) target = $region88
                $region85: #{block_forward.27} parent=80 // loop_body
                  %v193 = vld [vmem:[%s191] sm:$0xff]
                  %194 = vst [vmem:[%s192] sm:$0xff] %v193
                  %v195 = vld [vmem:[%s191 + $0x10] sm:$0xff]
                  %196 = vst [vmem:[%s192 + $0x8] sm:$0xff] %v195
                $region86: #{block_forward.27} parent=80 // loop_footer
                  %s190 = sadd.s32 1, %s186
                $region87: #{block_forward.27} parent=80 // loop_footer_branch
                  %185 = sbr.rel target = $region83
                $region88: #{block_forward.27} parent=80 // loop_exit
                  _
              $region81: #{block_forward.27} parent=65 // pred_fallthru
                _
              // Predicated region
              $region89: #{block_forward.27} parent=65 // pred_check
                _
              $region90: #{block_forward.27} parent=65 // pred_check_branch
                %198 = sbr.rel target = $region92
              $region91: #{block_forward.27} parent=65 // pred_region
                _
              $region92: #{block_forward.27} parent=65 // pred_fallthru
                _
            $region66: #{block_forward.27} parent=61 // pred_fallthru
              _
            // Predicated region
            $region67: #{block_forward.27} parent=61 // pred_check
              _
            $region68: #{block_forward.27} parent=61 // pred_check_branch
              %168 = sbr.rel target = $region70
            $region69: #{block_forward.27} parent=61 // pred_region
              %s170 = ssub.s32 256, 1
              loop: start=0, step=1, limit=1
              $region71: #{block_forward.27} parent=69 // loop_pre_header
                _
              $region72: #{block_forward.27} parent=69 // loop_header
                %s172 = sphi 0, %s176
                %p173 = scmp.ge.s32.totalorder %s172, 1
                %s177 = sphi %s162, %s162
                %s178 = sphi %s160, %s160
              $region73: #{block_forward.27} parent=69 // loop_header_branch
                %175 = sbr.rel (%p173) target = $region77
              $region74: #{block_forward.27} parent=69 // loop_body
                %v179 = vld [vmem:[%s177] sm:%s170]
                %180 = vst [vmem:[%s178] sm:%s170] %v179
                %v181 = vld [vmem:[%s177 + $0x10] sm:%s170]
                %182 = vst [vmem:[%s178 + $0x8] sm:%s170] %v181
              $region75: #{block_forward.27} parent=69 // loop_footer
                %s176 = sadd.s32 1, %s172
              $region76: #{block_forward.27} parent=69 // loop_footer_branch
                %171 = sbr.rel target = $region72
              $region77: #{block_forward.27} parent=69 // loop_exit
                _
            $region70: #{block_forward.27} parent=61 // pred_fallthru
              _
          $region62: #{block_forward.27} parent=57 // pred_fallthru
            _
          %199 = vnop
        $region58: #{block_forward.27} parent=15 // pred_fallthru
          _
      $region16: #{block_forward.27} parent=5 // pred_fallthru
        _
      %p200 = scmp.le.s32.totalorder 1, %s11
      %p201 = scmp.lt.s32.totalorder %s11, 3
      %p202 = pnand %p200, %p201
      %p203 = pneg %p202
      // Predicated region
      $region93: #{block_forward.27} parent=5 // pred_check
        _
      $region94: #{block_forward.27} parent=5 // pred_check_branch
        %205 = sbr.rel (%p202) target = $region96
      $region95: #{block_forward.27} parent=5 // pred_region
        %s206 = ssub.s32 %s11, 1
        %s207 = sand.u32 %s24, 1
        %s208 = sand.u32 %s24, 1
        %s209 = smul.addr %s208, 16
        %s210 = scalar_lea.vmem [#allocation2], %s209
        // Predicated region
        $region97: #{block_forward.27} parent=95 // pred_check
          %p211 = pneg %p37
        $region98: #{block_forward.27} parent=95 // pred_check_branch
          %213 = sbr.rel (%p211) target = $region100
        $region99: #{block_forward.27} parent=95 // pred_region
          _
        $region100: #{block_forward.27} parent=95 // pred_fallthru
          _
        %s214 = sand.u32 %s50, 1
        %s215 = sand.u32 %s50, 1
        %s216 = smul.addr %s215, 16
        %s217 = scalar_lea.vmem [#allocation3], %s216
        // Predicated region
        $region101: #{block_forward.27} parent=95 // pred_check
          %p218 = pneg %p63
        $region102: #{block_forward.27} parent=95 // pred_check_branch
          %220 = sbr.rel (%p218) target = $region104
        $region103: #{block_forward.27} parent=95 // pred_region
          _
        $region104: #{block_forward.27} parent=95 // pred_fallthru
          _
        %s221 = sand.u32 %s24, 1
        %s222 = sand.u32 %s24, 1
        %s223 = smul.addr %s222, 16
        %s224 = scalar_lea.vmem [#allocation2], %s223
        %p225 = pneg %p37
        %p226 = pneg %p34
        %s227 = sand.u32 %s50, 1
        %s228 = sand.u32 %s50, 1
        %s229 = smul.addr %s228, 16
        %s230 = scalar_lea.vmem [#allocation3], %s229
        %p231 = pneg %p63
        %p232 = pneg %p60
        %p233 = pneg %p89
        %p234 = pneg %p86
        %s235 = sand.u32 %s76, 1
        %s236 = scalar_lea.sflag [#allocation5], %s235
        %s237 = sand.u32 %s76, 1
        %s238 = smul.addr %s237, 16
        %s239 = scalar_lea.vmem [#allocation4], %s238
        %v240 = vld [vmem:[%s210] sm:$0xff]
        %v241 = vmul.f32 %v240, 0.5
        %v242 = vadd.f32 %v241, 0.0
        %vm243 = vcmp.ge.f32.partialorder %v242, 1.0
        %v244 = vld [vmem:[%s217] sm:$0xff]
        %v245 = vsel %vm243, 1, 0
        %v246 = vcvt.s32.f32 %v245
        %v247 = vadd.f32 %v244, %v246
        %vm248 = vcmask 261120
        %249 = vst.msk [vmem:[%s239] sm:$0xff] %vm248, %v247
        %v250 = vsel %vm243, 0.0, %v242
        %s251 = scalar_lea.vmem %s210, 8 [#allocation2]
        %v252 = vld [vmem:[%s251] sm:$0xff]
        %v253 = vsub.f32 %v252, %v250
        %v254 = vmul.f32 %v253, 0.5
        %v255 = vadd.f32 %v250, %v254
        %vm256 = vcmp.ge.f32.partialorder %v255, 1.0
        %s257 = scalar_lea.vmem %s217, 8 [#allocation3]
        %v258 = vld [vmem:[%s257] sm:$0xff]
        %v259 = vsel %vm256, 1, 0
        %v260 = vcvt.s32.f32 %v259
        %v261 = vadd.f32 %v258, %v260
        %s262 = scalar_lea.vmem %s239, 8 [#allocation4]
        %263 = vst.msk [vmem:[%s262] sm:$0xff] %vm248, %v261
        %s264 = sand.u32 %s76, 1
        %s265 = scalar_lea.sflag [#allocation5], %s264
        %s266 = sand.u32 %s76, 1
        %s267 = smul.addr %s266, 16
        %s268 = scalar_lea.vmem [#allocation4], %s267
        // Predicated region
        $region105: #{block_forward.27} parent=95 // pred_check
          %p269 = pneg %p86
        $region106: #{block_forward.27} parent=95 // pred_check_branch
          %271 = sbr.rel (%p269) target = $region108
        $region107: #{block_forward.27} parent=95 // pred_region
          %273 = vsyncadd %s265, 0
          %s274 = smul.addr %s16, 8
          %s275 = scalar_lea.hbm %s2, %s274
          %s276 = sshll.u32 %s268, 4
          %s277 = int_to_ptr.vmem [resolvable:$true] %s276
          %s278 = sshll.u32 %s275, 4
          %s279 = int_to_ptr.hbm [resolvable:$true] %s278
          %284 = dma.vmem_to_hbm [thread:$0]  %s277, 256, %s279, %s265, 128, 256, 8
        $region108: #{block_forward.27} parent=95 // pred_fallthru
          _
      $region96: #{block_forward.27} parent=5 // pred_fallthru
        _
      %p285 = scmp.le.s32.totalorder 2, %s11
      // Predicated region
      $region109: #{block_forward.27} parent=5 // pred_check
        %p286 = pneg %p285
      $region110: #{block_forward.27} parent=5 // pred_check_branch
        %288 = sbr.rel (%p286) target = $region112
      $region111: #{block_forward.27} parent=5 // pred_region
        %s289 = ssub.s32 %s11, 2
        // Predicated region
        $region113: #{block_forward.27} parent=111 // pred_check
          %p290 = pneg %p92
        $region114: #{block_forward.27} parent=111 // pred_check_branch
          %292 = sbr.rel (%p290) target = $region116
        $region115: #{block_forward.27} parent=111 // pred_region
          %s293 = sand.u32 %s77, 1
          %s294 = scalar_lea.sflag [#allocation5], %s293
          %s295 = sand.u32 %s77, 1
          %s296 = smul.addr %s295, 16
          %s297 = scalar_lea.vmem [#allocation4], %s296
          %299 = dma.done %s294, 256
        $region116: #{block_forward.27} parent=111 // pred_fallthru
          _
      $region112: #{block_forward.27} parent=5 // pred_fallthru
        _
    $region6: #{block_forward.27} parent=1 // loop_footer
      %s15 = sadd.s32 1, %s11
    $region7: #{block_forward.27} parent=1 // loop_footer_branch
      %10 = sbr.rel target = $region3
    $region8: #{block_forward.27} parent=1 // loop_exit
      _
    %300 = vsyncpa [#allocation5], 1
    %s301 = scalar_lea.sflag [#allocation5], 1
    %302 = vsyncpa %s301, 1

// kernel: block_forward.26
$region0: #{block_forward.26}
  #allocation0 [shape = 'u32[]', space=smem, size = 0x4, offset = 0x4, fixed_abs, tag = 'smem constant byte address 0x4 - core index']
  #allocation1 [shape = 'u32[72,128]{1,0:T(1,128)}', space=vmem, size = 0x9000, scoped, tag = 'internal scratch']
  %s0 = inlined_call_operand.vmem [shape: bf16[32,128], index: 0, kind: input, shape index: {}]
  %s1 = inlined_call_operand.vmem [shape: f32[128,32], index: 1, kind: input, shape index: {}]
  %s2 = inlined_call_operand.vmem [shape: f32[1,32], index: 2, kind: input, shape index: {}]
  %s3 = inlined_call_operand.vmem [shape: f32[1,32], index: 3, kind: input, shape index: {}]
  %s4 = inlined_call_operand.vmem [shape: f32[1,32], index: 4, kind: input, shape index: {}]
  %s5 = inlined_call_operand.vmem [shape: f32[32,32], index: 5, kind: output, shape index: {}]
  %s6 = sld [smem:[#allocation0]]
  $region30: #{block_forward.26} parent=0
    _
  %s8 = ssub.s32 1, %s6
  %s9 = scalar_select 0, %s8, %s6
  // Predicated region
  $region2: #{block_forward.26} parent=0 // pred_check
    _
  $region3: #{block_forward.26} parent=0 // pred_check_branch
    %11 = sbr.rel (0) target = $region5
  $region4: #{block_forward.26} parent=0 // pred_region
    _
  $region5: #{block_forward.26} parent=0 // pred_fallthru
    _
  // Predicated region
  $region6: #{block_forward.26} parent=0 // pred_check
    _
  $region7: #{block_forward.26} parent=0 // pred_check_branch
    %13 = sbr.rel (0) target = $region9
  $region8: #{block_forward.26} parent=0 // pred_region
    _
  $region9: #{block_forward.26} parent=0 // pred_fallthru
    _
  // Predicated region
  $region10: #{block_forward.26} parent=0 // pred_check
    _
  $region11: #{block_forward.26} parent=0 // pred_check_branch
    %15 = sbr.rel (0) target = $region13
  $region12: #{block_forward.26} parent=0 // pred_region
    _
  $region13: #{block_forward.26} parent=0 // pred_fallthru
    _
  // Predicated region
  $region14: #{block_forward.26} parent=0 // pred_check
    _
  $region15: #{block_forward.26} parent=0 // pred_check_branch
    %17 = sbr.rel (0) target = $region17
  $region16: #{block_forward.26} parent=0 // pred_region
    _
  $region17: #{block_forward.26} parent=0 // pred_fallthru
    _
  // Predicated region
  $region18: #{block_forward.26} parent=0 // pred_check
    _
  $region19: #{block_forward.26} parent=0 // pred_check_branch
    %19 = sbr.rel (0) target = $region21
  $region20: #{block_forward.26} parent=0 // pred_region
    _
  $region21: #{block_forward.26} parent=0 // pred_fallthru
    _
  %v20 = vld [vmem:[%s0] sm:$0xf]
  %v21 = vld [vmem:[%s0 + $0x4] sm:$0xf]
  %v22 = vld [vmem:[%s0 + $0x8] sm:$0xf]
  %v23 = vld [vmem:[%s0 + $0xc] sm:$0xf]
  %v24 = vunpack.c.l.bf16 %v20
  %v25 = vunpack.c.l.bf16 %v21
  %v26 = vunpack.c.l.bf16 %v22
  %v27 = vunpack.c.l.bf16 %v23
  %v28 = vld [vmem:[%s1] sm:$0xff]
  %v29 = vld [vmem:[%s1 + $0x8] sm:$0xff]
  %v30 = vld [vmem:[%s1 + $0x10] sm:$0xff]
  %v31 = vld [vmem:[%s1 + $0x18] sm:$0xff]
  %v32 = vld [vmem:[%s1 + $0x20] sm:$0xff]
  %v33 = vld [vmem:[%s1 + $0x28] sm:$0xff]
  %v34 = vld [vmem:[%s1 + $0x30] sm:$0xff]
  %v35 = vld [vmem:[%s1 + $0x38] sm:$0xff]
  %v36 = vld [vmem:[%s1 + $0x40] sm:$0xff]
  %v37 = vld [vmem:[%s1 + $0x48] sm:$0xff]
  %v38 = vld [vmem:[%s1 + $0x50] sm:$0xff]
  %v39 = vld [vmem:[%s1 + $0x58] sm:$0xff]
  %v40 = vld [vmem:[%s1 + $0x60] sm:$0xff]
  %v41 = vld [vmem:[%s1 + $0x68] sm:$0xff]
  %v42 = vld [vmem:[%s1 + $0x70] sm:$0xff]
  %v43 = vld [vmem:[%s1 + $0x78] sm:$0xff]
  %v44 = vld [vmem:[%s2] sm:$0x1]
  %v46 = vperm.slane %v44, 0
  %48 = vmatpush.msra.mxu0 %v43
  %49 = vmatpush.msra.mxu0 %v42
  %50 = vmatpush.msra.mxu0 %v41
  %51 = vmatpush.msra.mxu0 %v40
  %52 = vmatpush.msra.mxu0 %v39
  %53 = vmatpush.msra.mxu0 %v38
  %54 = vmatpush.msra.mxu0 %v37
  %55 = vmatpush.msra.mxu0 %v36
  %56 = vmatpush.msra.mxu0 %v35
  %57 = vmatpush.msra.mxu0 %v34
  %58 = vmatpush.msra.mxu0 %v33
  %59 = vmatpush.msra.mxu0 %v32
  %60 = vmatpush.msra.mxu0 %v31
  %61 = vmatpush.msra.mxu0 %v30
  %62 = vmatpush.msra.mxu0 %v29
  %63 = vmatpush.msra.mxu0 %v28
  %64 = vmatmul.f32.gmra.mxu0 %v24
  %v65 = vpop.f32.mrf.mxu0
  %v66 = vadd.f32 %v46, %v65
  %67 = vmatmul.f32.gmra.mxu0 %v25
  %v68 = vpop.f32.mrf.mxu0
  %v69 = vadd.f32 %v46, %v68
  %70 = vmatmul.f32.gmra.mxu0 %v26
  %v71 = vpop.f32.mrf.mxu0
  %v72 = vadd.f32 %v46, %v71
  %73 = vmatmul.f32.gmra.mxu0 %v27
  %v74 = vpop.f32.mrf.mxu0
  %v75 = vadd.f32 %v46, %v74
  %76 = vdwg.mxu0
  %vm77 = vcmask 261120
  %v78 = vsel %vm77, %v66, 0.0
  %v79 = vsel %vm77, %v69, 0.0
  %v80 = vadd.f32 %v78, %v79
  %v81 = vsel %vm77, %v72, 0.0
  %v82 = vadd.f32 %v80, %v81
  %v83 = vsel %vm77, %v75, 0.0
  %v84 = vadd.f32 %v82, %v83
  %v85 = vrot.slane %v84, 4
  %v86 = vadd.f32 %v84, %v85
  %v87 = vrot.slane %v86, 2
  %v88 = vadd.f32 %v86, %v87
  %v89 = vrot.slane %v88, 1
  %v90 = vadd.f32 %v88, %v89
  %v91 = vrcp.pop 32.0
  %v92 = vmul.f32 32.0, %v91
  %v93 = vsub.f32 1.0, %v92
  %v94 = vmul.f32 %v91, %v93
  %v95 = vadd.f32 %v91, %v94
  %vm96 = vweird.f32 %v91
  %v97 = vsel %vm96, %v91, %v95
  %v98 = vmul.f32 %v90, %v97
  %v99 = vsub.f32 %v66, %v98
  %v100 = vsub.f32 %v69, %v98
  %v101 = vsub.f32 %v72, %v98
  %v102 = vsub.f32 %v75, %v98
  %v103 = vmul.f32 %v99, %v99
  %v104 = vmul.f32 %v100, %v100
  %v105 = vmul.f32 %v101, %v101
  %v106 = vmul.f32 %v102, %v102
  %v107 = vsel %vm77, %v103, 0.0
  %v108 = vsel %vm77, %v104, 0.0
  %v109 = vadd.f32 %v107, %v108
  %v110 = vsel %vm77, %v105, 0.0
  %v111 = vadd.f32 %v109, %v110
  %v112 = vsel %vm77, %v106, 0.0
  %v113 = vadd.f32 %v111, %v112
  %v114 = vrot.slane %v113, 4
  %v115 = vadd.f32 %v113, %v114
  %v116 = vrot.slane %v115, 2
  %v117 = vadd.f32 %v115, %v116
  %v118 = vrot.slane %v117, 1
  %v119 = vadd.f32 %v117, %v118
  %v120 = vmul.f32 %v119, %v97
  %v121 = vadd.f32 %v120, 1e-05
  %v122 = vrsqrt.pop %v121
  %v123 = vmul.f32 %v122, %v121
  %v124 = vmul.f32 %v123, %v122
  %v125 = vmul.f32 0.5, %v124
  %v126 = vsub.f32 1.5, %v125
  %v127 = vmul.f32 %v122, %v126
  %vm128 = vweird.f32 %v121
  %vm129 = vweird.f32 %v122
  %vm130 = vmor %vm128, %vm129
  %v131 = vsel %vm130, %v122, %v127
  %v132 = vmul.f32 %v99, %v131
  %v133 = vmul.f32 %v100, %v131
  %v134 = vmul.f32 %v101, %v131
  %v135 = vmul.f32 %v102, %v131
  %v136 = vld [vmem:[%s3] sm:$0x1]
  %v138 = vperm.slane %v136, 0
  %v140 = vmul.f32 %v132, %v138
  %v141 = vmul.f32 %v133, %v138
  %v142 = vmul.f32 %v134, %v138
  %v143 = vmul.f32 %v135, %v138
  %v144 = vld [vmem:[%s4] sm:$0x1]
  %v146 = vperm.slane %v144, 0
  %v148 = vadd.f32 %v140, %v146
  %v149 = vadd.f32 %v141, %v146
  %v150 = vadd.f32 %v142, %v146
  %v151 = vadd.f32 %v143, %v146
  %152 = vst.msk [vmem:[%s5] sm:$0xff] %vm77, %v148
  %153 = vst.msk [vmem:[%s5 + $0x8] sm:$0xff] %vm77, %v149
  %154 = vst.msk [vmem:[%s5 + $0x10] sm:$0xff] %vm77, %v150
  %155 = vst.msk [vmem:[%s5 + $0x18] sm:$0xff] %vm77, %v151
  // Predicated region
  $region22: #{block_forward.26} parent=0 // pred_check
    _
  $region23: #{block_forward.26} parent=0 // pred_check_branch
    %157 = sbr.rel (0) target = $region25
  $region24: #{block_forward.26} parent=0 // pred_region
    _
  $region25: #{block_forward.26} parent=0 // pred_fallthru
    _
  // Predicated region
  $region26: #{block_forward.26} parent=0 // pred_check
    _
  $region27: #{block_forward.26} parent=0 // pred_check_branch
    %159 = sbr.rel (0) target = $region29
  $region28: #{block_forward.26} parent=0 // pred_region
    _
  $region29: #{block_forward.26} parent=0 // pred_fallthru
    _

</llo_original>
